<compile_context>
chip_gen: v6e
topology: v6e:2x2x1
jax: 0.10.0
libtpu: 0.0.40
codegen_flags: <defaults>
</compile_context>

<pallas_src>
import functools

import numpy as np
import jax
import jax.numpy as jnp
from jax import lax
from jax.experimental import pallas as pl
from jax.experimental.pallas import tpu as pltpu


def _seq_tile(length, target=256):
    """Largest multiple-of-8 tile <= target that divides `length` (else length)."""
    if length <= target:
        return length
    for t in range(target, 7, -8):
        if length % t == 0:
            return t
    return length


# ---------------------------------------------------------------------------
# Kernel A: fused Q/K/V projection (one matmul, N = 2*H*d_k + H*d_v).
# Writes head-split (H, B, L, d) bf16 outputs directly via out_specs.
# ---------------------------------------------------------------------------
def _qkv_proj_kernel(x_ref, w_ref, b_ref, q_ref, k_ref, v_ref, *, n_head, d_k, d_v):
    x = x_ref[0].astype(jnp.bfloat16)                       # (TL, d_model)
    # weight is pre-transposed in the wrapper -> no in-kernel .T
    y = jnp.dot(x, w_ref[...], preferred_element_type=jnp.float32) + b_ref[...]
    dq = n_head * d_k
    dqk = 2 * n_head * d_k
    for h in range(n_head):
        q_ref[h, 0] = y[:, h * d_k:(h + 1) * d_k].astype(q_ref.dtype)
        k_ref[h, 0] = y[:, dq + h * d_k:dq + (h + 1) * d_k].astype(k_ref.dtype)
        v_ref[h, 0] = y[:, dqk + h * d_v:dqk + (h + 1) * d_v].astype(v_ref.dtype)


def qkv_projection(x, w_qkv_t, b_qkv, n_head, d_k, d_v):
    B, L, d_model = x.shape
    d_tot = w_qkv_t.shape[1]
    TL = _seq_tile(L)
    nL = L // TL
    kernel = functools.partial(_qkv_proj_kernel, n_head=n_head, d_k=d_k, d_v=d_v)
    return pl.pallas_call(
        kernel,
        out_shape=(
            jax.ShapeDtypeStruct((n_head, B, L, d_k), jnp.bfloat16),
            jax.ShapeDtypeStruct((n_head, B, L, d_k), jnp.bfloat16),
            jax.ShapeDtypeStruct((n_head, B, L, d_v), jnp.bfloat16),
        ),
        grid=(B, nL),
        in_specs=[
            pl.BlockSpec((1, TL, d_model), lambda b, l: (b, l, 0)),
            pl.BlockSpec((d_model, d_tot), lambda b, l: (0, 0)),
            pl.BlockSpec((1, d_tot), lambda b, l: (0, 0)),
        ],
        out_specs=(
            pl.BlockSpec((n_head, 1, TL, d_k), lambda b, l: (0, b, l, 0)),
            pl.BlockSpec((n_head, 1, TL, d_k), lambda b, l: (0, b, l, 0)),
            pl.BlockSpec((n_head, 1, TL, d_v), lambda b, l: (0, b, l, 0)),
        ),
        compiler_params=pltpu.CompilerParams(
            dimension_semantics=("parallel", "parallel")),
    )(x, w_qkv_t, b_qkv)


# ---------------------------------------------------------------------------
# Kernel B: scaled dot-product attention, grid (B, H).
# Mask stays (B, Lq, Lk); index_map replicates it over heads (no jnp.tile).
# q already carries the 1/temperature scale (folded into the weights).
# ---------------------------------------------------------------------------
def _attention_kernel(q_ref, k_ref, v_ref, m_ref, ctx_ref, attn_ref):
    q = q_ref[0, 0]                                         # (Lq, d_k) bf16
    k = k_ref[0, 0]                                         # (Lk, d_k) bf16
    v = v_ref[0, 0]                                         # (Lk, d_v) bf16
    m = m_ref[0]                                            # (Lq, Lk) f32, >0 == masked

    # contract the d_k axes directly (no in-kernel transpose of k)
    scores = lax.dot_general(q, k, (((1,), (1,)), ((), ())),
                             preferred_element_type=jnp.float32)
    scores = jnp.where(m > 0, -jnp.inf, scores)             # masked_fill(mask, -inf)

    s_max = jnp.max(scores, axis=-1, keepdims=True)
    e = jnp.exp(scores - s_max)
    denom = jnp.sum(e, axis=-1, keepdims=True)
    attn = e * pl.reciprocal(denom, approx=True)            # softmax(dim=2)

    ctx = jnp.dot(attn.astype(jnp.bfloat16), v, preferred_element_type=jnp.float32)
    ctx_ref[0, 0] = ctx.astype(ctx_ref.dtype)
    attn_ref[0, 0] = attn


def scaled_dot_product_attention(q, k, v, mask_f32):
    H, B, Lq, d_k = q.shape
    _, _, Lk, d_v = v.shape
    return pl.pallas_call(
        _attention_kernel,
        out_shape=(
            jax.ShapeDtypeStruct((H, B, Lq, d_v), jnp.bfloat16),
            jax.ShapeDtypeStruct((H, B, Lq, Lk), jnp.float32),
        ),
        grid=(B, H),
        in_specs=[
            pl.BlockSpec((1, 1, Lq, d_k), lambda b, h: (h, b, 0, 0)),
            pl.BlockSpec((1, 1, Lk, d_k), lambda b, h: (h, b, 0, 0)),
            pl.BlockSpec((1, 1, Lk, d_v), lambda b, h: (h, b, 0, 0)),
            pl.BlockSpec((1, Lq, Lk), lambda b, h: (b, 0, 0)),   # reused across h
        ],
        out_specs=(
            pl.BlockSpec((1, 1, Lq, d_v), lambda b, h: (h, b, 0, 0)),
            pl.BlockSpec((1, 1, Lq, Lk), lambda b, h: (h, b, 0, 0)),
        ),
        compiler_params=pltpu.CompilerParams(
            dimension_semantics=("parallel", "parallel")),
    )(q, k, v, mask_f32)


# ---------------------------------------------------------------------------
# Kernel C: head-merge + fc + residual + LayerNorm + masked_fill(mask, 0).
# Head merge is folded into the ctx BlockSpec; fc accumulates per head on MXU.
# ---------------------------------------------------------------------------
def _fc_merge_ln_kernel(ctx_ref, w_ref, b_ref, res_ref, g_ref, beta_ref, pm_ref,
                        o_ref, *, eps):
    H = ctx_ref.shape[0]
    TL = ctx_ref.shape[2]
    d_model = w_ref.shape[2]

    y = jnp.zeros((TL, d_model), jnp.float32) + b_ref[...]
    for h in range(H):                                       # fc over merged heads
        y = y + jnp.dot(ctx_ref[h, 0], w_ref[h], preferred_element_type=jnp.float32)
    # TODO(synk): nn.Dropout after fc omitted (inference identity).
    y = y + res_ref[0]                                       # residual add

    mean = jnp.mean(y, axis=-1, keepdims=True)
    var = jnp.mean((y - mean) ** 2, axis=-1, keepdims=True)
    y = (y - mean) * lax.rsqrt(var + eps)
    y = y * g_ref[...] + beta_ref[...]

    y = jnp.where(pm_ref[0] > 0, 0.0, y)                     # masked_fill(mask, 0)
    o_ref[0] = y.astype(o_ref.dtype)


def fc_residual_layernorm_mask(ctx, w_fc_r, b_fc, residual, gamma, beta, pad_mask,
                               eps=1e-5):
    H, B, L, d_v = ctx.shape
    d_model = w_fc_r.shape[2]
    TL = _seq_tile(L)
    nL = L // TL
    kernel = functools.partial(_fc_merge_ln_kernel, eps=eps)
    return pl.pallas_call(
        kernel,
        out_shape=jax.ShapeDtypeStruct((B, L, d_model), residual.dtype),
        grid=(B, nL),
        in_specs=[
            pl.BlockSpec((H, 1, TL, d_v), lambda b, l: (0, b, l, 0)),
            pl.BlockSpec((H, d_v, d_model), lambda b, l: (0, 0, 0)),
            pl.BlockSpec((1, d_model), lambda b, l: (0, 0)),
            pl.BlockSpec((1, TL, d_model), lambda b, l: (b, l, 0)),
            pl.BlockSpec((1, d_model), lambda b, l: (0, 0)),
            pl.BlockSpec((1, d_model), lambda b, l: (0, 0)),
            pl.BlockSpec((1, TL, 1), lambda b, l: (b, l, 0)),
        ],
        out_specs=pl.BlockSpec((1, TL, d_model), lambda b, l: (b, l, 0)),
        compiler_params=pltpu.CompilerParams(
            dimension_semantics=("parallel", "parallel")),
    )(ctx, w_fc_r, b_fc, residual, gamma, beta, pad_mask)


# ---------------------------------------------------------------------------
# Kernel D: PositionwiseFeedForward fused:
#   Conv1d(k0) -> ReLU -> Conv1d(k1) -> residual -> LayerNorm -> masked_fill.
# 'same' padding handled with VMEM scratch; each tap is a static shifted slice
# feeding one MXU matmul (contraction over d_model / d_hid).
# ---------------------------------------------------------------------------
def _ffn_kernel(x_ref, w1_ref, b1_ref, w2_ref, b2_ref, g_ref, beta_ref, pm_ref,
                o_ref, xpad_ref, hpad_ref, *, eps):
    k0 = w1_ref.shape[0]
    k1 = w2_ref.shape[0]
    L = x_ref.shape[1]
    d_model = x_ref.shape[2]
    d_hid = w1_ref.shape[2]
    pad0 = (k0 - 1) // 2
    off0 = ((pad0 + 7) // 8) * 8          # sublane-aligned left margin
    pad1 = (k1 - 1) // 2
    off1 = ((pad1 + 7) // 8) * 8

    x = x_ref[0]                                            # (L, d_model) f32

    # ---- Conv1d #1 (d_model -> d_hid) + ReLU ----
    xpad_ref[...] = jnp.zeros(xpad_ref.shape, xpad_ref.dtype)
    xpad_ref[pl.ds(off0, L), :] = x                         # aligned store
    h = jnp.zeros((L, d_hid), jnp.float32) + b1_ref[...]
    for j in range(k0):
        tap = xpad_ref[pl.ds(off0 - pad0 + j, L), :]        # shifted window
        h = h + jnp.dot(tap.astype(jnp.bfloat16), w1_ref[j],
                        preferred_element_type=jnp.float32)
    h = jnp.maximum(h, 0.0)

    # ---- Conv1d #2 (d_hid -> d_model) ----
    hpad_ref[...] = jnp.zeros(hpad_ref.shape, hpad_ref.dtype)
    hpad_ref[pl.ds(off1, L), :] = h
    y = jnp.zeros((L, d_model), jnp.float32) + b2_ref[...]
    for j in range(k1):
        tap = hpad_ref[pl.ds(off1 - pad1 + j, L), :]
        y = y + jnp.dot(tap.astype(jnp.bfloat16), w2_ref[j],
                        preferred_element_type=jnp.float32)

    # TODO(synk): nn.Dropout omitted (inference identity).
    y = y + x                                               # residual add
    mean = jnp.mean(y, axis=-1, keepdims=True)
    var = jnp.mean((y - mean) ** 2, axis=-1, keepdims=True)
    y = (y - mean) * lax.rsqrt(var + eps)
    y = y * g_ref[...] + beta_ref[...]

    y = jnp.where(pm_ref[0] > 0, 0.0, y)                    # final masked_fill
    o_ref[0] = y.astype(o_ref.dtype)


def positionwise_ffn(x, w1_r, b1, w2_r, b2, gamma, beta, pad_mask, eps=1e-5):
    B, L, d_model = x.shape
    k0, _, d_hid = w1_r.shape
    k1 = w2_r.shape[0]
    pad0 = (k0 - 1) // 2
    off0 = ((pad0 + 7) // 8) * 8
    pad1 = (k1 - 1) // 2
    off1 = ((pad1 + 7) // 8) * 8
    kernel = functools.partial(_ffn_kernel, eps=eps)
    return pl.pallas_call(
        kernel,
        out_shape=jax.ShapeDtypeStruct((B, L, d_model), x.dtype),
        grid=(B,),
        in_specs=[
            pl.BlockSpec((1, L, d_model), lambda b: (b, 0, 0)),
            pl.BlockSpec((k0, d_model, d_hid), lambda b: (0, 0, 0)),
            pl.BlockSpec((1, d_hid), lambda b: (0, 0)),
            pl.BlockSpec((k1, d_hid, d_model), lambda b: (0, 0, 0)),
            pl.BlockSpec((1, d_model), lambda b: (0, 0)),
            pl.BlockSpec((1, d_model), lambda b: (0, 0)),
            pl.BlockSpec((1, d_model), lambda b: (0, 0)),
            pl.BlockSpec((1, L, 1), lambda b: (b, 0, 0)),
        ],
        out_specs=pl.BlockSpec((1, L, d_model), lambda b: (b, 0, 0)),
        scratch_shapes=[
            pltpu.VMEM((off0 + L + k0 - 1 - pad0, d_model), jnp.float32),
            pltpu.VMEM((off1 + L + k1 - 1 - pad1, d_hid), jnp.float32),
        ],
        compiler_params=pltpu.CompilerParams(dimension_semantics=("parallel",)),
    )(x, w1_r, b1, w2_r, b2, gamma, beta, pad_mask)


# ---------------------------------------------------------------------------
# FFTBlock forward (weight packing in plain JAX; hot paths in Pallas)
# ---------------------------------------------------------------------------
def fft_block(weights, enc_input, mask, slf_attn_mask, *, n_head, d_k, d_v):
    B, L, d_model = enc_input.shape
    temperature = float(np.power(d_k, 0.5))
    inv_t = 1.0 / temperature

    # ---- pack weights (grid-invariant; would be pre-packed once in serving) ----
    # Fold 1/temperature into the Q projection; concat Q/K/V; pre-transpose; bf16.
    w_qkv_t = jnp.concatenate(
        [weights["w_qs_w"] * inv_t, weights["w_ks_w"], weights["w_vs_w"]], axis=0
    ).T.astype(jnp.bfloat16)                                 # (d_model, 2*H*d_k + H*d_v)
    b_qkv = jnp.concatenate(
        [weights["w_qs_b"] * inv_t, weights["w_ks_b"], weights["w_vs_b"]]
    ).reshape(1, -1).astype(jnp.float32)

    # fc weight as per-head (H, d_v, d_model) for the folded head-merge.
    w_fc_r = weights["fc_w"].reshape(d_model, n_head, d_v).transpose(1, 2, 0)
    w_fc_r = w_fc_r.astype(jnp.bfloat16)
    b_fc = weights["fc_b"].reshape(1, d_model).astype(jnp.float32)

    # Conv1d weights as (k, c_in, c_out) for tap-wise matmuls.
    w1_r = weights["conv1_w"].transpose(2, 1, 0).astype(jnp.bfloat16)
    b1 = weights["conv1_b"].reshape(1, -1).astype(jnp.float32)
    w2_r = weights["conv2_w"].transpose(2, 1, 0).astype(jnp.bfloat16)
    b2 = weights["conv2_b"].reshape(1, -1).astype(jnp.float32)

    attn_mask_f = slf_attn_mask.astype(jnp.float32)          # (B, Lq, Lk), >0 == masked
    pad_mask_f = mask.astype(jnp.float32).reshape(B, L, 1)   # (B, L, 1),   >0 == masked

    # ---- multi-head self-attention ----
    q_h, k_h, v_h = qkv_projection(enc_input, w_qkv_t, b_qkv, n_head, d_k, d_v)
    ctx, attn = scaled_dot_product_attention(q_h, k_h, v_h, attn_mask_f)
    enc_out = fc_residual_layernorm_mask(
        ctx, w_fc_r, b_fc, enc_input,
        weights["ln1_g"].reshape(1, d_model), weights["ln1_b"].reshape(1, d_model),
        pad_mask_f)

    # ---- position-wise feed-forward ----
    enc_out = positionwise_ffn(
        enc_out, w1_r, b1, w2_r, b2,
        weights["ln2_g"].reshape(1, d_model), weights["ln2_b"].reshape(1, d_model),
        pad_mask_f)

    # attn layout (H, B, Lq, Lk) -> torch convention (H*B, Lq, Lk), index = h*B + b
    attn = attn.reshape(n_head * B, L, L)
    return enc_out, attn


# ---------------------------------------------------------------------------
if __name__ == "__main__":
    n_head, d_model, d_k, d_v = 2, 32, 16, 16
    d_inner = 64
    kernel_size = (3, 3)
    B, L = 2, 8

    key = jax.random.PRNGKey(0)
    ks = jax.random.split(key, 16)

    weights = {
        "w_qs_w": 0.05 * jax.random.normal(ks[0], (n_head * d_k, d_model), jnp.float32),
        "w_qs_b": 0.01 * jax.random.normal(ks[1], (n_head * d_k,), jnp.float32),
        "w_ks_w": 0.05 * jax.random.normal(ks[2], (n_head * d_k, d_model), jnp.float32),
        "w_ks_b": 0.01 * jax.random.normal(ks[3], (n_head * d_k,), jnp.float32),
        "w_vs_w": 0.05 * jax.random.normal(ks[4], (n_head * d_v, d_model), jnp.float32),
        "w_vs_b": 0.01 * jax.random.normal(ks[5], (n_head * d_v,), jnp.float32),
        "fc_w": 0.05 * jax.random.normal(ks[6], (d_model, n_head * d_v), jnp.float32),
        "fc_b": 0.01 * jax.random.normal(ks[7], (d_model,), jnp.float32),
        "ln1_g": jnp.ones((d_model,), jnp.float32),
        "ln1_b": jnp.zeros((d_model,), jnp.float32),
        "conv1_w": 0.05 * jax.random.normal(ks[8], (d_inner, d_model, kernel_size[0]), jnp.float32),
        "conv1_b": 0.01 * jax.random.normal(ks[9], (d_inner,), jnp.float32),
        "conv2_w": 0.05 * jax.random.normal(ks[10], (d_model, d_inner, kernel_size[1]), jnp.float32),
        "conv2_b": 0.01 * jax.random.normal(ks[11], (d_model,), jnp.float32),
        "ln2_g": jnp.ones((d_model,), jnp.float32),
        "ln2_b": jnp.zeros((d_model,), jnp.float32),
    }

    enc_input = jax.random.normal(ks[12], (B, L, d_model), jnp.float32)

    # key-padding masks: True == masked-out position
    valid_len = jnp.array([L, L - 3])
    pos = jnp.arange(L)
    mask = pos[None, :] >= valid_len[:, None]                        # (B, L)
    slf_attn_mask = jnp.broadcast_to(mask[:, None, :], (B, L, L))    # (B, Lq, Lk)

    fwd = jax.jit(lambda w, x, m, am: fft_block(w, x, m, am,
                                                n_head=n_head, d_k=d_k, d_v=d_v))
    enc_out, attn = fwd(weights, enc_input, mask, slf_attn_mask)
    enc_out = jax.block_until_ready(enc_out)
    attn = jax.block_until_ready(attn)

    assert enc_out.shape == (B, L, d_model)
    assert attn.shape == (n_head * B, L, L)
    assert bool(jnp.all(jnp.isfinite(enc_out)))
    # padded keys must receive exactly zero attention (batch 1, last 3 keys)
    assert float(jnp.max(jnp.abs(attn[1, :, L - 3:]))) == 0.0
    # padded time steps of the block output are exactly zero (masked_fill)
    assert float(jnp.max(jnp.abs(enc_out[1, L - 3:, :]))) == 0.0

    print("KERNEL_OK")
</pallas_src>

<mosaic_0001>
module attributes {stable_mosaic.version = 11 : i64} {
  func.func @_fc_merge_ln_kernel(%arg0: i32, %arg1: i32, %arg2: memref<2x1x8x16xbf16, #tpu.memory_space<vmem>>, %arg3: memref<2x16x32xbf16, #tpu.memory_space<vmem>>, %arg4: memref<1x32xf32, #tpu.memory_space<vmem>>, %arg5: memref<1x8x32xf32, #tpu.memory_space<vmem>>, %arg6: memref<1x32xf32, #tpu.memory_space<vmem>>, %arg7: memref<1x32xf32, #tpu.memory_space<vmem>>, %arg8: memref<1x8x1xf32, #tpu.memory_space<vmem>>, %arg9: memref<1x8x32xf32, #tpu.memory_space<vmem>>) attributes {dimension_semantics = [#tpu.dimension_semantics<parallel>, #tpu.dimension_semantics<parallel>], iteration_bounds = array<i64: 2, 1>, scalar_prefetch = 0 : i64, scratch_operands = 0 : i64, tpu.core_type = #tpu.core_type<tc>, window_params = [{transform_indices = @transform_0, window_bounds = array<i64: 2, 1, 8, 16>}, {pipeline_mode = #tpu.pipeline_mode<synchronous>, transform_indices = @transform_1, window_bounds = array<i64: 2, 16, 32>}, {pipeline_mode = #tpu.pipeline_mode<synchronous>, transform_indices = @transform_2, window_bounds = array<i64: 1, 32>}, {transform_indices = @transform_3, window_bounds = array<i64: 1, 8, 32>}, {pipeline_mode = #tpu.pipeline_mode<synchronous>, transform_indices = @transform_4, window_bounds = array<i64: 1, 32>}, {pipeline_mode = #tpu.pipeline_mode<synchronous>, transform_indices = @transform_5, window_bounds = array<i64: 1, 32>}, {transform_indices = @transform_6, window_bounds = array<i64: 1, 8, 1>}, {transform_indices = @transform_7, window_bounds = array<i64: 1, 8, 32>}]} {
    %cst = arith.constant 0.000000e+00 : f32
    %0 = vector.broadcast %cst : f32 to vector<8x32xf32>
    %c0 = arith.constant 0 : index
    %c0_0 = arith.constant 0 : index
    %1 = vector.load %arg4[%c0, %c0_0] : memref<1x32xf32, #tpu.memory_space<vmem>>, vector<1x32xf32>
    %2 = vector.broadcast %1 : vector<1x32xf32> to vector<8x32xf32>
    %3 = arith.addf %0, %2 : vector<8x32xf32>
    %c0_1 = arith.constant 0 : index
    %c0_2 = arith.constant 0 : index
    %c0_3 = arith.constant 0 : index
    %c0_4 = arith.constant 0 : index
    %4 = vector.load %arg2[%c0_1, %c0_2, %c0_3, %c0_4] : memref<2x1x8x16xbf16, #tpu.memory_space<vmem>>, vector<1x1x8x16xbf16>
    %5 = vector.shape_cast %4 : vector<1x1x8x16xbf16> to vector<8x16xbf16>
    %c0_5 = arith.constant 0 : index
    %c0_6 = arith.constant 0 : index
    %c0_7 = arith.constant 0 : index
    %6 = vector.load %arg3[%c0_5, %c0_6, %c0_7] : memref<2x16x32xbf16, #tpu.memory_space<vmem>>, vector<1x16x32xbf16>
    %7 = vector.shape_cast %6 : vector<1x16x32xbf16> to vector<16x32xbf16>
    %cst_8 = arith.constant dense<0.000000e+00> : vector<8x32xf32>
    %8 = tpu.matmul %5, %7, %cst_8 {dimension_numbers = #tpu.dot_dimension_numbers<[1], [0], [0], [1], [0, 0, 1, 1], [], []>} : vector<8x16xbf16>, vector<16x32xbf16>, vector<8x32xf32> -> vector<8x32xf32>
    %9 = arith.addf %3, %8 : vector<8x32xf32>
    %c1 = arith.constant 1 : index
    %c0_9 = arith.constant 0 : index
    %c0_10 = arith.constant 0 : index
    %c0_11 = arith.constant 0 : index
    %10 = vector.load %arg2[%c1, %c0_9, %c0_10, %c0_11] : memref<2x1x8x16xbf16, #tpu.memory_space<vmem>>, vector<1x1x8x16xbf16>
    %11 = vector.shape_cast %10 : vector<1x1x8x16xbf16> to vector<8x16xbf16>
    %c1_12 = arith.constant 1 : index
    %c0_13 = arith.constant 0 : index
    %c0_14 = arith.constant 0 : index
    %12 = vector.load %arg3[%c1_12, %c0_13, %c0_14] : memref<2x16x32xbf16, #tpu.memory_space<vmem>>, vector<1x16x32xbf16>
    %13 = vector.shape_cast %12 : vector<1x16x32xbf16> to vector<16x32xbf16>
    %cst_15 = arith.constant dense<0.000000e+00> : vector<8x32xf32>
    %14 = tpu.matmul %11, %13, %cst_15 {dimension_numbers = #tpu.dot_dimension_numbers<[1], [0], [0], [1], [0, 0, 1, 1], [], []>} : vector<8x16xbf16>, vector<16x32xbf16>, vector<8x32xf32> -> vector<8x32xf32>
    %15 = arith.addf %9, %14 : vector<8x32xf32>
    %c0_16 = arith.constant 0 : index
    %c0_17 = arith.constant 0 : index
    %c0_18 = arith.constant 0 : index
    %16 = vector.load %arg5[%c0_16, %c0_17, %c0_18] : memref<1x8x32xf32, #tpu.memory_space<vmem>>, vector<1x8x32xf32>
    %17 = vector.shape_cast %16 : vector<1x8x32xf32> to vector<8x32xf32>
    %18 = arith.addf %15, %17 : vector<8x32xf32>
    %cst_19 = arith.constant dense<0.000000e+00> : vector<8xf32>
    %19 = vector.multi_reduction <add>, %18, %cst_19 [1] : vector<8x32xf32> to vector<8xf32>
    %20 = vector.shape_cast %19 : vector<8xf32> to vector<8x1xf32>
    %cst_20 = arith.constant 3.200000e+01 : f32
    %21 = vector.broadcast %cst_20 : f32 to vector<8x1xf32>
    %22 = arith.divf %20, %21 : vector<8x1xf32>
    %23 = vector.broadcast %22 : vector<8x1xf32> to vector<8x32xf32>
    %24 = arith.subf %18, %23 : vector<8x32xf32>
    %25 = arith.mulf %24, %24 : vector<8x32xf32>
    %cst_21 = arith.constant dense<0.000000e+00> : vector<8xf32>
    %26 = vector.multi_reduction <add>, %25, %cst_21 [1] : vector<8x32xf32> to vector<8xf32>
    %27 = vector.shape_cast %26 : vector<8xf32> to vector<8x1xf32>
    %cst_22 = arith.constant 3.200000e+01 : f32
    %28 = vector.broadcast %cst_22 : f32 to vector<8x1xf32>
    %29 = arith.divf %27, %28 : vector<8x1xf32>
    %30 = vector.broadcast %22 : vector<8x1xf32> to vector<8x32xf32>
    %31 = arith.subf %18, %30 : vector<8x32xf32>
    %cst_23 = arith.constant 9.99999974E-6 : f32
    %32 = vector.broadcast %cst_23 : f32 to vector<8x1xf32>
    %33 = arith.addf %29, %32 : vector<8x1xf32>
    %34 = math.rsqrt %33 : vector<8x1xf32>
    %35 = vector.broadcast %34 : vector<8x1xf32> to vector<8x32xf32>
    %36 = arith.mulf %31, %35 : vector<8x32xf32>
    %c0_24 = arith.constant 0 : index
    %c0_25 = arith.constant 0 : index
    %37 = vector.load %arg6[%c0_24, %c0_25] : memref<1x32xf32, #tpu.memory_space<vmem>>, vector<1x32xf32>
    %38 = vector.broadcast %37 : vector<1x32xf32> to vector<8x32xf32>
    %39 = arith.mulf %36, %38 : vector<8x32xf32>
    %c0_26 = arith.constant 0 : index
    %c0_27 = arith.constant 0 : index
    %40 = vector.load %arg7[%c0_26, %c0_27] : memref<1x32xf32, #tpu.memory_space<vmem>>, vector<1x32xf32>
    %41 = vector.broadcast %40 : vector<1x32xf32> to vector<8x32xf32>
    %42 = arith.addf %39, %41 : vector<8x32xf32>
    %c0_28 = arith.constant 0 : index
    %c0_29 = arith.constant 0 : index
    %c0_30 = arith.constant 0 : index
    %43 = vector.load %arg8[%c0_28, %c0_29, %c0_30] : memref<1x8x1xf32, #tpu.memory_space<vmem>>, vector<1x8x1xf32>
    %44 = vector.shape_cast %43 : vector<1x8x1xf32> to vector<8x1xf32>
    %cst_31 = arith.constant 0.000000e+00 : f32
    %45 = vector.broadcast %cst_31 : f32 to vector<8x1xf32>
    %46 = arith.cmpf ogt, %44, %45 : vector<8x1xf32>
    %cst_32 = arith.constant 0.000000e+00 : f32
    %47 = vector.shape_cast %46 : vector<8x1xi1> to vector<8x1xi1>
    %48 = vector.broadcast %47 : vector<8x1xi1> to vector<8x32xi1>
    %49 = vector.broadcast %cst_32 : f32 to vector<8x32xf32>
    %50 = arith.select %48, %49, %42 : vector<8x32xi1>, vector<8x32xf32>
    %c0_33 = arith.constant 0 : index
    %c0_34 = arith.constant 0 : index
    %c0_35 = arith.constant 0 : index
    %51 = vector.load %arg9[%c0_33, %c0_34, %c0_35] : memref<1x8x32xf32, #tpu.memory_space<vmem>>, vector<1x8x32xf32>
    %52 = vector.shape_cast %51 : vector<1x8x32xf32> to vector<8x32xf32>
    %53 = vector.shape_cast %50 : vector<8x32xf32> to vector<1x8x32xf32>
    tpu.vector_store %arg9[%c0_33, %c0_34, %c0_35], %53 {strides = array<i32>} : memref<1x8x32xf32, #tpu.memory_space<vmem>>, vector<1x8x32xf32>,
    return
  }
  func.func @transform_0(%arg0: i32, %arg1: i32) -> (i32, i32, i32, i32) {
    %c0_i32 = arith.constant 0 : i32
    %c0_i32_0 = arith.constant 0 : i32
    %c0_i32_1 = arith.constant 0 : i32
    return %c0_i32, %arg0, %arg1, %c0_i32_0 : i32, i32, i32, i32
  }
  func.func @transform_1(%arg0: i32, %arg1: i32) -> (i32, i32, i32) {
    %c0_i32 = arith.constant 0 : i32
    %c0_i32_0 = arith.constant 0 : i32
    %c0_i32_1 = arith.constant 0 : i32
    %c0_i32_2 = arith.constant 0 : i32
    return %c0_i32, %c0_i32_0, %c0_i32_1 : i32, i32, i32
  }
  func.func @transform_2(%arg0: i32, %arg1: i32) -> (i32, i32) {
    %c0_i32 = arith.constant 0 : i32
    %c0_i32_0 = arith.constant 0 : i32
    %c0_i32_1 = arith.constant 0 : i32
    return %c0_i32, %c0_i32_0 : i32, i32
  }
  func.func @transform_3(%arg0: i32, %arg1: i32) -> (i32, i32, i32) {
    %c0_i32 = arith.constant 0 : i32
    %c0_i32_0 = arith.constant 0 : i32
    return %arg0, %arg1, %c0_i32 : i32, i32, i32
  }
  func.func @transform_4(%arg0: i32, %arg1: i32) -> (i32, i32) {
    %c0_i32 = arith.constant 0 : i32
    %c0_i32_0 = arith.constant 0 : i32
    %c0_i32_1 = arith.constant 0 : i32
    return %c0_i32, %c0_i32_0 : i32, i32
  }
  func.func @transform_5(%arg0: i32, %arg1: i32) -> (i32, i32) {
    %c0_i32 = arith.constant 0 : i32
    %c0_i32_0 = arith.constant 0 : i32
    %c0_i32_1 = arith.constant 0 : i32
    return %c0_i32, %c0_i32_0 : i32, i32
  }
  func.func @transform_6(%arg0: i32, %arg1: i32) -> (i32, i32, i32) {
    %c0_i32 = arith.constant 0 : i32
    %c0_i32_0 = arith.constant 0 : i32
    return %arg0, %arg1, %c0_i32 : i32, i32, i32
  }
  func.func @transform_7(%arg0: i32, %arg1: i32) -> (i32, i32, i32) {
    %c0_i32 = arith.constant 0 : i32
    %c0_i32_0 = arith.constant 0 : i32
    return %arg0, %arg1, %c0_i32 : i32, i32, i32
  }
}

module attributes {stable_mosaic.version = 11 : i64} {
  func.func @_attention_kernel(%arg0: i32, %arg1: i32, %arg2: memref<1x1x8x16xbf16, #tpu.memory_space<vmem>>, %arg3: memref<1x1x8x16xbf16, #tpu.memory_space<vmem>>, %arg4: memref<1x1x8x16xbf16, #tpu.memory_space<vmem>>, %arg5: memref<1x8x8xf32, #tpu.memory_space<vmem>>, %arg6: memref<1x1x8x16xbf16, #tpu.memory_space<vmem>>, %arg7: memref<1x1x8x8xf32, #tpu.memory_space<vmem>>) attributes {dimension_semantics = [#tpu.dimension_semantics<parallel>, #tpu.dimension_semantics<parallel>], iteration_bounds = array<i64: 2, 2>, scalar_prefetch = 0 : i64, scratch_operands = 0 : i64, tpu.core_type = #tpu.core_type<tc>, window_params = [{transform_indices = @transform_0, window_bounds = array<i64: 1, 1, 8, 16>}, {transform_indices = @transform_1, window_bounds = array<i64: 1, 1, 8, 16>}, {transform_indices = @transform_2, window_bounds = array<i64: 1, 1, 8, 16>}, {transform_indices = @transform_3, window_bounds = array<i64: 1, 8, 8>}, {transform_indices = @transform_4, window_bounds = array<i64: 1, 1, 8, 16>}, {transform_indices = @transform_5, window_bounds = array<i64: 1, 1, 8, 8>}]} {
    %c0 = arith.constant 0 : index
    %c0_0 = arith.constant 0 : index
    %c0_1 = arith.constant 0 : index
    %c0_2 = arith.constant 0 : index
    %0 = vector.load %arg2[%c0, %c0_0, %c0_1, %c0_2] : memref<1x1x8x16xbf16, #tpu.memory_space<vmem>>, vector<1x1x8x16xbf16>
    %1 = vector.shape_cast %0 : vector<1x1x8x16xbf16> to vector<8x16xbf16>
    %c0_3 = arith.constant 0 : index
    %c0_4 = arith.constant 0 : index
    %c0_5 = arith.constant 0 : index
    %c0_6 = arith.constant 0 : index
    %2 = vector.load %arg3[%c0_3, %c0_4, %c0_5, %c0_6] : memref<1x1x8x16xbf16, #tpu.memory_space<vmem>>, vector<1x1x8x16xbf16>
    %3 = vector.shape_cast %2 : vector<1x1x8x16xbf16> to vector<8x16xbf16>
    %c0_7 = arith.constant 0 : index
    %c0_8 = arith.constant 0 : index
    %c0_9 = arith.constant 0 : index
    %c0_10 = arith.constant 0 : index
    %4 = vector.load %arg4[%c0_7, %c0_8, %c0_9, %c0_10] : memref<1x1x8x16xbf16, #tpu.memory_space<vmem>>, vector<1x1x8x16xbf16>
    %5 = vector.shape_cast %4 : vector<1x1x8x16xbf16> to vector<8x16xbf16>
    %c0_11 = arith.constant 0 : index
    %c0_12 = arith.constant 0 : index
    %c0_13 = arith.constant 0 : index
    %6 = vector.load %arg5[%c0_11, %c0_12, %c0_13] : memref<1x8x8xf32, #tpu.memory_space<vmem>>, vector<1x8x8xf32>
    %7 = vector.shape_cast %6 : vector<1x8x8xf32> to vector<8x8xf32>
    %cst = arith.constant dense<0.000000e+00> : vector<8x8xf32>
    %8 = tpu.matmul %1, %3, %cst {dimension_numbers = #tpu.dot_dimension_numbers<[1], [1], [0], [0], [0, 0, 1, 0], [], []>} : vector<8x16xbf16>, vector<8x16xbf16>, vector<8x8xf32> -> vector<8x8xf32>
    %cst_14 = arith.constant 0.000000e+00 : f32
    %9 = vector.broadcast %cst_14 : f32 to vector<8x8xf32>
    %10 = arith.cmpf ogt, %7, %9 : vector<8x8xf32>
    %cst_15 = arith.constant 0xFF800000 : f32
    %11 = vector.broadcast %cst_15 : f32 to vector<8x8xf32>
    %12 = arith.select %10, %11, %8 : vector<8x8xi1>, vector<8x8xf32>
    %cst_16 = arith.constant dense<0xFF800000> : vector<8xf32>
    %13 = vector.multi_reduction <maximumf>, %12, %cst_16 [1] : vector<8x8xf32> to vector<8xf32>
    %14 = vector.shape_cast %13 : vector<8xf32> to vector<8x1xf32>
    %15 = vector.broadcast %14 : vector<8x1xf32> to vector<8x8xf32>
    %16 = arith.subf %12, %15 : vector<8x8xf32>
    %17 = math.exp %16 : vector<8x8xf32>
    %cst_17 = arith.constant dense<0.000000e+00> : vector<8xf32>
    %18 = vector.multi_reduction <add>, %17, %cst_17 [1] : vector<8x8xf32> to vector<8xf32>
    %19 = vector.shape_cast %18 : vector<8xf32> to vector<8x1xf32>
    %20 = tpu.reciprocal %19 {approx = true} : vector<8x1xf32> -> vector<8x1xf32>
    %21 = vector.broadcast %20 : vector<8x1xf32> to vector<8x8xf32>
    %22 = arith.mulf %17, %21 : vector<8x8xf32>
    %23 = arith.truncf %22 : vector<8x8xf32> to vector<8x8xbf16>
    %cst_18 = arith.constant dense<0.000000e+00> : vector<8x16xf32>
    %24 = tpu.matmul %23, %5, %cst_18 {dimension_numbers = #tpu.dot_dimension_numbers<[1], [0], [0], [1], [0, 0, 1, 1], [], []>} : vector<8x8xbf16>, vector<8x16xbf16>, vector<8x16xf32> -> vector<8x16xf32>
    %25 = arith.truncf %24 : vector<8x16xf32> to vector<8x16xbf16>
    %c0_19 = arith.constant 0 : index
    %c0_20 = arith.constant 0 : index
    %c0_21 = arith.constant 0 : index
    %c0_22 = arith.constant 0 : index
    %26 = vector.load %arg6[%c0_19, %c0_20, %c0_21, %c0_22] : memref<1x1x8x16xbf16, #tpu.memory_space<vmem>>, vector<1x1x8x16xbf16>
    %27 = vector.shape_cast %26 : vector<1x1x8x16xbf16> to vector<8x16xbf16>
    %28 = vector.shape_cast %25 : vector<8x16xbf16> to vector<1x1x8x16xbf16>
    tpu.vector_store %arg6[%c0_19, %c0_20, %c0_21, %c0_22], %28 {strides = array<i32>} : memref<1x1x8x16xbf16, #tpu.memory_space<vmem>>, vector<1x1x8x16xbf16>,
    %c0_23 = arith.constant 0 : index
    %c0_24 = arith.constant 0 : index
    %c0_25 = arith.constant 0 : index
    %c0_26 = arith.constant 0 : index
    %29 = vector.load %arg7[%c0_23, %c0_24, %c0_25, %c0_26] : memref<1x1x8x8xf32, #tpu.memory_space<vmem>>, vector<1x1x8x8xf32>
    %30 = vector.shape_cast %29 : vector<1x1x8x8xf32> to vector<8x8xf32>
    %31 = vector.shape_cast %22 : vector<8x8xf32> to vector<1x1x8x8xf32>
    tpu.vector_store %arg7[%c0_23, %c0_24, %c0_25, %c0_26], %31 {strides = array<i32>} : memref<1x1x8x8xf32, #tpu.memory_space<vmem>>, vector<1x1x8x8xf32>,
    return
  }
  func.func @transform_0(%arg0: i32, %arg1: i32) -> (i32, i32, i32, i32) {
    %c0_i32 = arith.constant 0 : i32
    %c0_i32_0 = arith.constant 0 : i32
    %c0_i32_1 = arith.constant 0 : i32
    return %arg1, %arg0, %c0_i32, %c0_i32_0 : i32, i32, i32, i32
  }
  func.func @transform_1(%arg0: i32, %arg1: i32) -> (i32, i32, i32, i32) {
    %c0_i32 = arith.constant 0 : i32
    %c0_i32_0 = arith.constant 0 : i32
    %c0_i32_1 = arith.constant 0 : i32
    return %arg1, %arg0, %c0_i32, %c0_i32_0 : i32, i32, i32, i32
  }
  func.func @transform_2(%arg0: i32, %arg1: i32) -> (i32, i32, i32, i32) {
    %c0_i32 = arith.constant 0 : i32
    %c0_i32_0 = arith.constant 0 : i32
    %c0_i32_1 = arith.constant 0 : i32
    return %arg1, %arg0, %c0_i32, %c0_i32_0 : i32, i32, i32, i32
  }
  func.func @transform_3(%arg0: i32, %arg1: i32) -> (i32, i32, i32) {
    %c0_i32 = arith.constant 0 : i32
    %c0_i32_0 = arith.constant 0 : i32
    %c0_i32_1 = arith.constant 0 : i32
    return %arg0, %c0_i32, %c0_i32_0 : i32, i32, i32
  }
  func.func @transform_4(%arg0: i32, %arg1: i32) -> (i32, i32, i32, i32) {
    %c0_i32 = arith.constant 0 : i32
    %c0_i32_0 = arith.constant 0 : i32
    %c0_i32_1 = arith.constant 0 : i32
    return %arg1, %arg0, %c0_i32, %c0_i32_0 : i32, i32, i32, i32
  }
  func.func @transform_5(%arg0: i32, %arg1: i32) -> (i32, i32, i32, i32) {
    %c0_i32 = arith.constant 0 : i32
    %c0_i32_0 = arith.constant 0 : i32
    %c0_i32_1 = arith.constant 0 : i32
    return %arg1, %arg0, %c0_i32, %c0_i32_0 : i32, i32, i32, i32
  }
}

module attributes {stable_mosaic.version = 11 : i64} {
  func.func @_qkv_proj_kernel(%arg0: i32, %arg1: i32, %arg2: memref<1x8x32xf32, #tpu.memory_space<vmem>>, %arg3: memref<32x96xbf16, #tpu.memory_space<vmem>>, %arg4: memref<1x96xf32, #tpu.memory_space<vmem>>, %arg5: memref<2x1x8x16xbf16, #tpu.memory_space<vmem>>, %arg6: memref<2x1x8x16xbf16, #tpu.memory_space<vmem>>, %arg7: memref<2x1x8x16xbf16, #tpu.memory_space<vmem>>) attributes {dimension_semantics = [#tpu.dimension_semantics<parallel>, #tpu.dimension_semantics<parallel>], iteration_bounds = array<i64: 2, 1>, scalar_prefetch = 0 : i64, scratch_operands = 0 : i64, tpu.core_type = #tpu.core_type<tc>, window_params = [{transform_indices = @transform_0, window_bounds = array<i64: 1, 8, 32>}, {pipeline_mode = #tpu.pipeline_mode<synchronous>, transform_indices = @transform_1, window_bounds = array<i64: 32, 96>}, {pipeline_mode = #tpu.pipeline_mode<synchronous>, transform_indices = @transform_2, window_bounds = array<i64: 1, 96>}, {transform_indices = @transform_3, window_bounds = array<i64: 2, 1, 8, 16>}, {transform_indices = @transform_4, window_bounds = array<i64: 2, 1, 8, 16>}, {transform_indices = @transform_5, window_bounds = array<i64: 2, 1, 8, 16>}]} {
    %c0 = arith.constant 0 : index
    %c0_0 = arith.constant 0 : index
    %c0_1 = arith.constant 0 : index
    %0 = vector.load %arg2[%c0, %c0_0, %c0_1] : memref<1x8x32xf32, #tpu.memory_space<vmem>>, vector<1x8x32xf32>
    %1 = vector.shape_cast %0 : vector<1x8x32xf32> to vector<8x32xf32>
    %2 = arith.truncf %1 : vector<8x32xf32> to vector<8x32xbf16>
    %c0_2 = arith.constant 0 : index
    %c0_3 = arith.constant 0 : index
    %3 = vector.load %arg3[%c0_2, %c0_3] : memref<32x96xbf16, #tpu.memory_space<vmem>>, vector<32x96xbf16>
    %cst = arith.constant dense<0.000000e+00> : vector<8x96xf32>
    %4 = tpu.matmul %2, %3, %cst {dimension_numbers = #tpu.dot_dimension_numbers<[1], [0], [0], [1], [0, 0, 1, 1], [], []>} : vector<8x32xbf16>, vector<32x96xbf16>, vector<8x96xf32> -> vector<8x96xf32>
    %c0_4 = arith.constant 0 : index
    %c0_5 = arith.constant 0 : index
    %5 = vector.load %arg4[%c0_4, %c0_5] : memref<1x96xf32, #tpu.memory_space<vmem>>, vector<1x96xf32>
    %6 = vector.broadcast %5 : vector<1x96xf32> to vector<8x96xf32>
    %7 = arith.addf %4, %6 : vector<8x96xf32>
    %8 = vector.extract_strided_slice %7 {offsets = [0, 0], sizes = [8, 16], strides = [1, 1]} : vector<8x96xf32> to vector<8x16xf32>
    %9 = arith.truncf %8 : vector<8x16xf32> to vector<8x16xbf16>
    %c0_6 = arith.constant 0 : index
    %c0_7 = arith.constant 0 : index
    %c0_8 = arith.constant 0 : index
    %c0_9 = arith.constant 0 : index
    %10 = vector.load %arg5[%c0_6, %c0_7, %c0_8, %c0_9] : memref<2x1x8x16xbf16, #tpu.memory_space<vmem>>, vector<1x1x8x16xbf16>
    %11 = vector.shape_cast %10 : vector<1x1x8x16xbf16> to vector<8x16xbf16>
    %12 = vector.shape_cast %9 : vector<8x16xbf16> to vector<1x1x8x16xbf16>
    tpu.vector_store %arg5[%c0_6, %c0_7, %c0_8, %c0_9], %12 {strides = array<i32>} : memref<2x1x8x16xbf16, #tpu.memory_space<vmem>>, vector<1x1x8x16xbf16>,
    %13 = vector.extract_strided_slice %7 {offsets = [0, 32], sizes = [8, 16], strides = [1, 1]} : vector<8x96xf32> to vector<8x16xf32>
    %14 = arith.truncf %13 : vector<8x16xf32> to vector<8x16xbf16>
    %c0_10 = arith.constant 0 : index
    %c0_11 = arith.constant 0 : index
    %c0_12 = arith.constant 0 : index
    %c0_13 = arith.constant 0 : index
    %15 = vector.load %arg6[%c0_10, %c0_11, %c0_12, %c0_13] : memref<2x1x8x16xbf16, #tpu.memory_space<vmem>>, vector<1x1x8x16xbf16>
    %16 = vector.shape_cast %15 : vector<1x1x8x16xbf16> to vector<8x16xbf16>
    %17 = vector.shape_cast %14 : vector<8x16xbf16> to vector<1x1x8x16xbf16>
    tpu.vector_store %arg6[%c0_10, %c0_11, %c0_12, %c0_13], %17 {strides = array<i32>} : memref<2x1x8x16xbf16, #tpu.memory_space<vmem>>, vector<1x1x8x16xbf16>,
    %18 = vector.extract_strided_slice %7 {offsets = [0, 64], sizes = [8, 16], strides = [1, 1]} : vector<8x96xf32> to vector<8x16xf32>
    %19 = arith.truncf %18 : vector<8x16xf32> to vector<8x16xbf16>
    %c0_14 = arith.constant 0 : index
    %c0_15 = arith.constant 0 : index
    %c0_16 = arith.constant 0 : index
    %c0_17 = arith.constant 0 : index
    %20 = vector.load %arg7[%c0_14, %c0_15, %c0_16, %c0_17] : memref<2x1x8x16xbf16, #tpu.memory_space<vmem>>, vector<1x1x8x16xbf16>
    %21 = vector.shape_cast %20 : vector<1x1x8x16xbf16> to vector<8x16xbf16>
    %22 = vector.shape_cast %19 : vector<8x16xbf16> to vector<1x1x8x16xbf16>
    tpu.vector_store %arg7[%c0_14, %c0_15, %c0_16, %c0_17], %22 {strides = array<i32>} : memref<2x1x8x16xbf16, #tpu.memory_space<vmem>>, vector<1x1x8x16xbf16>,
    %23 = vector.extract_strided_slice %7 {offsets = [0, 16], sizes = [8, 16], strides = [1, 1]} : vector<8x96xf32> to vector<8x16xf32>
    %24 = arith.truncf %23 : vector<8x16xf32> to vector<8x16xbf16>
    %c1 = arith.constant 1 : index
    %c0_18 = arith.constant 0 : index
    %c0_19 = arith.constant 0 : index
    %c0_20 = arith.constant 0 : index
    %25 = vector.load %arg5[%c1, %c0_18, %c0_19, %c0_20] : memref<2x1x8x16xbf16, #tpu.memory_space<vmem>>, vector<1x1x8x16xbf16>
    %26 = vector.shape_cast %25 : vector<1x1x8x16xbf16> to vector<8x16xbf16>
    %27 = vector.shape_cast %24 : vector<8x16xbf16> to vector<1x1x8x16xbf16>
    tpu.vector_store %arg5[%c1, %c0_18, %c0_19, %c0_20], %27 {strides = array<i32>} : memref<2x1x8x16xbf16, #tpu.memory_space<vmem>>, vector<1x1x8x16xbf16>,
    %28 = vector.extract_strided_slice %7 {offsets = [0, 48], sizes = [8, 16], strides = [1, 1]} : vector<8x96xf32> to vector<8x16xf32>
    %29 = arith.truncf %28 : vector<8x16xf32> to vector<8x16xbf16>
    %c1_21 = arith.constant 1 : index
    %c0_22 = arith.constant 0 : index
    %c0_23 = arith.constant 0 : index
    %c0_24 = arith.constant 0 : index
    %30 = vector.load %arg6[%c1_21, %c0_22, %c0_23, %c0_24] : memref<2x1x8x16xbf16, #tpu.memory_space<vmem>>, vector<1x1x8x16xbf16>
    %31 = vector.shape_cast %30 : vector<1x1x8x16xbf16> to vector<8x16xbf16>
    %32 = vector.shape_cast %29 : vector<8x16xbf16> to vector<1x1x8x16xbf16>
    tpu.vector_store %arg6[%c1_21, %c0_22, %c0_23, %c0_24], %32 {strides = array<i32>} : memref<2x1x8x16xbf16, #tpu.memory_space<vmem>>, vector<1x1x8x16xbf16>,
    %33 = vector.extract_strided_slice %7 {offsets = [0, 80], sizes = [8, 16], strides = [1, 1]} : vector<8x96xf32> to vector<8x16xf32>
    %34 = arith.truncf %33 : vector<8x16xf32> to vector<8x16xbf16>
    %c1_25 = arith.constant 1 : index
    %c0_26 = arith.constant 0 : index
    %c0_27 = arith.constant 0 : index
    %c0_28 = arith.constant 0 : index
    %35 = vector.load %arg7[%c1_25, %c0_26, %c0_27, %c0_28] : memref<2x1x8x16xbf16, #tpu.memory_space<vmem>>, vector<1x1x8x16xbf16>
    %36 = vector.shape_cast %35 : vector<1x1x8x16xbf16> to vector<8x16xbf16>
    %37 = vector.shape_cast %34 : vector<8x16xbf16> to vector<1x1x8x16xbf16>
    tpu.vector_store %arg7[%c1_25, %c0_26, %c0_27, %c0_28], %37 {strides = array<i32>} : memref<2x1x8x16xbf16, #tpu.memory_space<vmem>>, vector<1x1x8x16xbf16>,
    return
  }
  func.func @transform_0(%arg0: i32, %arg1: i32) -> (i32, i32, i32) {
    %c0_i32 = arith.constant 0 : i32
    %c0_i32_0 = arith.constant 0 : i32
    return %arg0, %arg1, %c0_i32 : i32, i32, i32
  }
  func.func @transform_1(%arg0: i32, %arg1: i32) -> (i32, i32) {
    %c0_i32 = arith.constant 0 : i32
    %c0_i32_0 = arith.constant 0 : i32
    %c0_i32_1 = arith.constant 0 : i32
    return %c0_i32, %c0_i32_0 : i32, i32
  }
  func.func @transform_2(%arg0: i32, %arg1: i32) -> (i32, i32) {
    %c0_i32 = arith.constant 0 : i32
    %c0_i32_0 = arith.constant 0 : i32
    %c0_i32_1 = arith.constant 0 : i32
    return %c0_i32, %c0_i32_0 : i32, i32
  }
  func.func @transform_3(%arg0: i32, %arg1: i32) -> (i32, i32, i32, i32) {
    %c0_i32 = arith.constant 0 : i32
    %c0_i32_0 = arith.constant 0 : i32
    %c0_i32_1 = arith.constant 0 : i32
    return %c0_i32, %arg0, %arg1, %c0_i32_0 : i32, i32, i32, i32
  }
  func.func @transform_4(%arg0: i32, %arg1: i32) -> (i32, i32, i32, i32) {
    %c0_i32 = arith.constant 0 : i32
    %c0_i32_0 = arith.constant 0 : i32
    %c0_i32_1 = arith.constant 0 : i32
    return %c0_i32, %arg0, %arg1, %c0_i32_0 : i32, i32, i32, i32
  }
  func.func @transform_5(%arg0: i32, %arg1: i32) -> (i32, i32, i32, i32) {
    %c0_i32 = arith.constant 0 : i32
    %c0_i32_0 = arith.constant 0 : i32
    %c0_i32_1 = arith.constant 0 : i32
    return %c0_i32, %arg0, %arg1, %c0_i32_0 : i32, i32, i32, i32
  }
}

module attributes {stable_mosaic.version = 11 : i64} {
  func.func @_ffn_kernel(%arg0: i32, %arg1: memref<1x8x32xf32, #tpu.memory_space<vmem>>, %arg2: memref<3x32x64xbf16, #tpu.memory_space<vmem>>, %arg3: memref<1x64xf32, #tpu.memory_space<vmem>>, %arg4: memref<3x64x32xbf16, #tpu.memory_space<vmem>>, %arg5: memref<1x32xf32, #tpu.memory_space<vmem>>, %arg6: memref<1x32xf32, #tpu.memory_space<vmem>>, %arg7: memref<1x32xf32, #tpu.memory_space<vmem>>, %arg8: memref<1x8x1xf32, #tpu.memory_space<vmem>>, %arg9: memref<1x8x32xf32, #tpu.memory_space<vmem>>, %arg10: memref<17x32xf32, #tpu.memory_space<vmem>>, %arg11: memref<17x64xf32, #tpu.memory_space<vmem>>) attributes {dimension_semantics = [#tpu.dimension_semantics<parallel>], iteration_bounds = array<i64: 2>, scalar_prefetch = 0 : i64, scratch_operands = 2 : i64, tpu.core_type = #tpu.core_type<tc>, window_params = [{transform_indices = @transform_0, window_bounds = array<i64: 1, 8, 32>}, {pipeline_mode = #tpu.pipeline_mode<synchronous>, transform_indices = @transform_1, window_bounds = array<i64: 3, 32, 64>}, {pipeline_mode = #tpu.pipeline_mode<synchronous>, transform_indices = @transform_2, window_bounds = array<i64: 1, 64>}, {pipeline_mode = #tpu.pipeline_mode<synchronous>, transform_indices = @transform_3, window_bounds = array<i64: 3, 64, 32>}, {pipeline_mode = #tpu.pipeline_mode<synchronous>, transform_indices = @transform_4, window_bounds = array<i64: 1, 32>}, {pipeline_mode = #tpu.pipeline_mode<synchronous>, transform_indices = @transform_5, window_bounds = array<i64: 1, 32>}, {pipeline_mode = #tpu.pipeline_mode<synchronous>, transform_indices = @transform_6, window_bounds = array<i64: 1, 32>}, {transform_indices = @transform_7, window_bounds = array<i64: 1, 8, 1>}, {transform_indices = @transform_8, window_bounds = array<i64: 1, 8, 32>}]} {
    %c0 = arith.constant 0 : index
    %c0_0 = arith.constant 0 : index
    %c0_1 = arith.constant 0 : index
    %0 = vector.load %arg1[%c0, %c0_0, %c0_1] : memref<1x8x32xf32, #tpu.memory_space<vmem>>, vector<1x8x32xf32>
    %1 = vector.shape_cast %0 : vector<1x8x32xf32> to vector<8x32xf32>
    %cst = arith.constant 0.000000e+00 : f32
    %2 = vector.broadcast %cst : f32 to vector<17x32xf32>
    %c0_2 = arith.constant 0 : index
    %c0_3 = arith.constant 0 : index
    %3 = vector.load %arg10[%c0_2, %c0_3] : memref<17x32xf32, #tpu.memory_space<vmem>>, vector<17x32xf32>
    tpu.vector_store %arg10[%c0_2, %c0_3], %2 {strides = array<i32>} : memref<17x32xf32, #tpu.memory_space<vmem>>, vector<17x32xf32>,
    %c8 = arith.constant 8 : index
    %c0_4 = arith.constant 0 : index
    %4 = vector.load %arg10[%c8, %c0_4] : memref<17x32xf32, #tpu.memory_space<vmem>>, vector<8x32xf32>
    tpu.vector_store %arg10[%c8, %c0_4], %1 {strides = array<i32>} : memref<17x32xf32, #tpu.memory_space<vmem>>, vector<8x32xf32>,
    %cst_5 = arith.constant 0.000000e+00 : f32
    %5 = vector.broadcast %cst_5 : f32 to vector<8x64xf32>
    %c0_6 = arith.constant 0 : index
    %c0_7 = arith.constant 0 : index
    %6 = vector.load %arg3[%c0_6, %c0_7] : memref<1x64xf32, #tpu.memory_space<vmem>>, vector<1x64xf32>
    %7 = vector.broadcast %6 : vector<1x64xf32> to vector<8x64xf32>
    %8 = arith.addf %5, %7 : vector<8x64xf32>
    %c7 = arith.constant 7 : index
    %c0_8 = arith.constant 0 : index
    %9 = vector.load %arg10[%c7, %c0_8] : memref<17x32xf32, #tpu.memory_space<vmem>>, vector<8x32xf32>
    %10 = arith.truncf %9 : vector<8x32xf32> to vector<8x32xbf16>
    %c0_9 = arith.constant 0 : index
    %c0_10 = arith.constant 0 : index
    %c0_11 = arith.constant 0 : index
    %11 = vector.load %arg2[%c0_9, %c0_10, %c0_11] : memref<3x32x64xbf16, #tpu.memory_space<vmem>>, vector<1x32x64xbf16>
    %12 = vector.shape_cast %11 : vector<1x32x64xbf16> to vector<32x64xbf16>
    %cst_12 = arith.constant dense<0.000000e+00> : vector<8x64xf32>
    %13 = tpu.matmul %10, %12, %cst_12 {dimension_numbers = #tpu.dot_dimension_numbers<[1], [0], [0], [1], [0, 0, 1, 1], [], []>} : vector<8x32xbf16>, vector<32x64xbf16>, vector<8x64xf32> -> vector<8x64xf32>
    %14 = arith.addf %8, %13 : vector<8x64xf32>
    %c8_13 = arith.constant 8 : index
    %c0_14 = arith.constant 0 : index
    %15 = vector.load %arg10[%c8_13, %c0_14] : memref<17x32xf32, #tpu.memory_space<vmem>>, vector<8x32xf32>
    %16 = arith.truncf %15 : vector<8x32xf32> to vector<8x32xbf16>
    %c1 = arith.constant 1 : index
    %c0_15 = arith.constant 0 : index
    %c0_16 = arith.constant 0 : index
    %17 = vector.load %arg2[%c1, %c0_15, %c0_16] : memref<3x32x64xbf16, #tpu.memory_space<vmem>>, vector<1x32x64xbf16>
    %18 = vector.shape_cast %17 : vector<1x32x64xbf16> to vector<32x64xbf16>
    %cst_17 = arith.constant dense<0.000000e+00> : vector<8x64xf32>
    %19 = tpu.matmul %16, %18, %cst_17 {dimension_numbers = #tpu.dot_dimension_numbers<[1], [0], [0], [1], [0, 0, 1, 1], [], []>} : vector<8x32xbf16>, vector<32x64xbf16>, vector<8x64xf32> -> vector<8x64xf32>
    %20 = arith.addf %14, %19 : vector<8x64xf32>
    %c9 = arith.constant 9 : index
    %c0_18 = arith.constant 0 : index
    %21 = vector.load %arg10[%c9, %c0_18] : memref<17x32xf32, #tpu.memory_space<vmem>>, vector<8x32xf32>
    %22 = arith.truncf %21 : vector<8x32xf32> to vector<8x32xbf16>
    %c2 = arith.constant 2 : index
    %c0_19 = arith.constant 0 : index
    %c0_20 = arith.constant 0 : index
    %23 = vector.load %arg2[%c2, %c0_19, %c0_20] : memref<3x32x64xbf16, #tpu.memory_space<vmem>>, vector<1x32x64xbf16>
    %24 = vector.shape_cast %23 : vector<1x32x64xbf16> to vector<32x64xbf16>
    %cst_21 = arith.constant dense<0.000000e+00> : vector<8x64xf32>
    %25 = tpu.matmul %22, %24, %cst_21 {dimension_numbers = #tpu.dot_dimension_numbers<[1], [0], [0], [1], [0, 0, 1, 1], [], []>} : vector<8x32xbf16>, vector<32x64xbf16>, vector<8x64xf32> -> vector<8x64xf32>
    %26 = arith.addf %20, %25 : vector<8x64xf32>
    %cst_22 = arith.constant 0.000000e+00 : f32
    %27 = vector.broadcast %cst_22 : f32 to vector<8x64xf32>
    %28 = arith.maximumf %26, %27 : vector<8x64xf32>
    %cst_23 = arith.constant 0.000000e+00 : f32
    %29 = vector.broadcast %cst_23 : f32 to vector<17x64xf32>
    %c0_24 = arith.constant 0 : index
    %c0_25 = arith.constant 0 : index
    %30 = vector.load %arg11[%c0_24, %c0_25] : memref<17x64xf32, #tpu.memory_space<vmem>>, vector<17x64xf32>
    tpu.vector_store %arg11[%c0_24, %c0_25], %29 {strides = array<i32>} : memref<17x64xf32, #tpu.memory_space<vmem>>, vector<17x64xf32>,
    %c8_26 = arith.constant 8 : index
    %c0_27 = arith.constant 0 : index
    %31 = vector.load %arg11[%c8_26, %c0_27] : memref<17x64xf32, #tpu.memory_space<vmem>>, vector<8x64xf32>
    tpu.vector_store %arg11[%c8_26, %c0_27], %28 {strides = array<i32>} : memref<17x64xf32, #tpu.memory_space<vmem>>, vector<8x64xf32>,
    %cst_28 = arith.constant 0.000000e+00 : f32
    %32 = vector.broadcast %cst_28 : f32 to vector<8x32xf32>
    %c0_29 = arith.constant 0 : index
    %c0_30 = arith.constant 0 : index
    %33 = vector.load %arg5[%c0_29, %c0_30] : memref<1x32xf32, #tpu.memory_space<vmem>>, vector<1x32xf32>
    %34 = vector.broadcast %33 : vector<1x32xf32> to vector<8x32xf32>
    %35 = arith.addf %32, %34 : vector<8x32xf32>
    %c7_31 = arith.constant 7 : index
    %c0_32 = arith.constant 0 : index
    %36 = vector.load %arg11[%c7_31, %c0_32] : memref<17x64xf32, #tpu.memory_space<vmem>>, vector<8x64xf32>
    %37 = arith.truncf %36 : vector<8x64xf32> to vector<8x64xbf16>
    %c0_33 = arith.constant 0 : index
    %c0_34 = arith.constant 0 : index
    %c0_35 = arith.constant 0 : index
    %38 = vector.load %arg4[%c0_33, %c0_34, %c0_35] : memref<3x64x32xbf16, #tpu.memory_space<vmem>>, vector<1x64x32xbf16>
    %39 = vector.shape_cast %38 : vector<1x64x32xbf16> to vector<64x32xbf16>
    %cst_36 = arith.constant dense<0.000000e+00> : vector<8x32xf32>
    %40 = tpu.matmul %37, %39, %cst_36 {dimension_numbers = #tpu.dot_dimension_numbers<[1], [0], [0], [1], [0, 0, 1, 1], [], []>} : vector<8x64xbf16>, vector<64x32xbf16>, vector<8x32xf32> -> vector<8x32xf32>
    %41 = arith.addf %35, %40 : vector<8x32xf32>
    %c8_37 = arith.constant 8 : index
    %c0_38 = arith.constant 0 : index
    %42 = vector.load %arg11[%c8_37, %c0_38] : memref<17x64xf32, #tpu.memory_space<vmem>>, vector<8x64xf32>
    %43 = arith.truncf %42 : vector<8x64xf32> to vector<8x64xbf16>
    %c1_39 = arith.constant 1 : index
    %c0_40 = arith.constant 0 : index
    %c0_41 = arith.constant 0 : index
    %44 = vector.load %arg4[%c1_39, %c0_40, %c0_41] : memref<3x64x32xbf16, #tpu.memory_space<vmem>>, vector<1x64x32xbf16>
    %45 = vector.shape_cast %44 : vector<1x64x32xbf16> to vector<64x32xbf16>
    %cst_42 = arith.constant dense<0.000000e+00> : vector<8x32xf32>
    %46 = tpu.matmul %43, %45, %cst_42 {dimension_numbers = #tpu.dot_dimension_numbers<[1], [0], [0], [1], [0, 0, 1, 1], [], []>} : vector<8x64xbf16>, vector<64x32xbf16>, vector<8x32xf32> -> vector<8x32xf32>
    %47 = arith.addf %41, %46 : vector<8x32xf32>
    %c9_43 = arith.constant 9 : index
    %c0_44 = arith.constant 0 : index
    %48 = vector.load %arg11[%c9_43, %c0_44] : memref<17x64xf32, #tpu.memory_space<vmem>>, vector<8x64xf32>
    %49 = arith.truncf %48 : vector<8x64xf32> to vector<8x64xbf16>
    %c2_45 = arith.constant 2 : index
    %c0_46 = arith.constant 0 : index
    %c0_47 = arith.constant 0 : index
    %50 = vector.load %arg4[%c2_45, %c0_46, %c0_47] : memref<3x64x32xbf16, #tpu.memory_space<vmem>>, vector<1x64x32xbf16>
    %51 = vector.shape_cast %50 : vector<1x64x32xbf16> to vector<64x32xbf16>
    %cst_48 = arith.constant dense<0.000000e+00> : vector<8x32xf32>
    %52 = tpu.matmul %49, %51, %cst_48 {dimension_numbers = #tpu.dot_dimension_numbers<[1], [0], [0], [1], [0, 0, 1, 1], [], []>} : vector<8x64xbf16>, vector<64x32xbf16>, vector<8x32xf32> -> vector<8x32xf32>
    %53 = arith.addf %47, %52 : vector<8x32xf32>
    %54 = arith.addf %53, %1 : vector<8x32xf32>
    %cst_49 = arith.constant dense<0.000000e+00> : vector<8xf32>
    %55 = vector.multi_reduction <add>, %54, %cst_49 [1] : vector<8x32xf32> to vector<8xf32>
    %56 = vector.shape_cast %55 : vector<8xf32> to vector<8x1xf32>
    %cst_50 = arith.constant 3.200000e+01 : f32
    %57 = vector.broadcast %cst_50 : f32 to vector<8x1xf32>
    %58 = arith.divf %56, %57 : vector<8x1xf32>
    %59 = vector.broadcast %58 : vector<8x1xf32> to vector<8x32xf32>
    %60 = arith.subf %54, %59 : vector<8x32xf32>
    %61 = arith.mulf %60, %60 : vector<8x32xf32>
    %cst_51 = arith.constant dense<0.000000e+00> : vector<8xf32>
    %62 = vector.multi_reduction <add>, %61, %cst_51 [1] : vector<8x32xf32> to vector<8xf32>
    %63 = vector.shape_cast %62 : vector<8xf32> to vector<8x1xf32>
    %cst_52 = arith.constant 3.200000e+01 : f32
    %64 = vector.broadcast %cst_52 : f32 to vector<8x1xf32>
    %65 = arith.divf %63, %64 : vector<8x1xf32>
    %66 = vector.broadcast %58 : vector<8x1xf32> to vector<8x32xf32>
    %67 = arith.subf %54, %66 : vector<8x32xf32>
    %cst_53 = arith.constant 9.99999974E-6 : f32
    %68 = vector.broadcast %cst_53 : f32 to vector<8x1xf32>
    %69 = arith.addf %65, %68 : vector<8x1xf32>
    %70 = math.rsqrt %69 : vector<8x1xf32>
    %71 = vector.broadcast %70 : vector<8x1xf32> to vector<8x32xf32>
    %72 = arith.mulf %67, %71 : vector<8x32xf32>
    %c0_54 = arith.constant 0 : index
    %c0_55 = arith.constant 0 : index
    %73 = vector.load %arg6[%c0_54, %c0_55] : memref<1x32xf32, #tpu.memory_space<vmem>>, vector<1x32xf32>
    %74 = vector.broadcast %73 : vector<1x32xf32> to vector<8x32xf32>
    %75 = arith.mulf %72, %74 : vector<8x32xf32>
    %c0_56 = arith.constant 0 : index
    %c0_57 = arith.constant 0 : index
    %76 = vector.load %arg7[%c0_56, %c0_57] : memref<1x32xf32, #tpu.memory_space<vmem>>, vector<1x32xf32>
    %77 = vector.broadcast %76 : vector<1x32xf32> to vector<8x32xf32>
    %78 = arith.addf %75, %77 : vector<8x32xf32>
    %c0_58 = arith.constant 0 : index
    %c0_59 = arith.constant 0 : index
    %c0_60 = arith.constant 0 : index
    %79 = vector.load %arg8[%c0_58, %c0_59, %c0_60] : memref<1x8x1xf32, #tpu.memory_space<vmem>>, vector<1x8x1xf32>
    %80 = vector.shape_cast %79 : vector<1x8x1xf32> to vector<8x1xf32>
    %cst_61 = arith.constant 0.000000e+00 : f32
    %81 = vector.broadcast %cst_61 : f32 to vector<8x1xf32>
    %82 = arith.cmpf ogt, %80, %81 : vector<8x1xf32>
    %cst_62 = arith.constant 0.000000e+00 : f32
    %83 = vector.shape_cast %82 : vector<8x1xi1> to vector<8x1xi1>
    %84 = vector.broadcast %83 : vector<8x1xi1> to vector<8x32xi1>
    %85 = vector.broadcast %cst_62 : f32 to vector<8x32xf32>
    %86 = arith.select %84, %85, %78 : vector<8x32xi1>, vector<8x32xf32>
    %c0_63 = arith.constant 0 : index
    %c0_64 = arith.constant 0 : index
    %c0_65 = arith.constant 0 : index
    %87 = vector.load %arg9[%c0_63, %c0_64, %c0_65] : memref<1x8x32xf32, #tpu.memory_space<vmem>>, vector<1x8x32xf32>
    %88 = vector.shape_cast %87 : vector<1x8x32xf32> to vector<8x32xf32>
    %89 = vector.shape_cast %86 : vector<8x32xf32> to vector<1x8x32xf32>
    tpu.vector_store %arg9[%c0_63, %c0_64, %c0_65], %89 {strides = array<i32>} : memref<1x8x32xf32, #tpu.memory_space<vmem>>, vector<1x8x32xf32>,
    return
  }
  func.func @transform_0(%arg0: i32) -> (i32, i32, i32) {
    %c0_i32 = arith.constant 0 : i32
    %c0_i32_0 = arith.constant 0 : i32
    %c0_i32_1 = arith.constant 0 : i32
    return %arg0, %c0_i32, %c0_i32_0 : i32, i32, i32
  }
  func.func @transform_1(%arg0: i32) -> (i32, i32, i32) {
    %c0_i32 = arith.constant 0 : i32
    %c0_i32_0 = arith.constant 0 : i32
    %c0_i32_1 = arith.constant 0 : i32
    %c0_i32_2 = arith.constant 0 : i32
    return %c0_i32, %c0_i32_0, %c0_i32_1 : i32, i32, i32
  }
  func.func @transform_2(%arg0: i32) -> (i32, i32) {
    %c0_i32 = arith.constant 0 : i32
    %c0_i32_0 = arith.constant 0 : i32
    %c0_i32_1 = arith.constant 0 : i32
    return %c0_i32, %c0_i32_0 : i32, i32
  }
  func.func @transform_3(%arg0: i32) -> (i32, i32, i32) {
    %c0_i32 = arith.constant 0 : i32
    %c0_i32_0 = arith.constant 0 : i32
    %c0_i32_1 = arith.constant 0 : i32
    %c0_i32_2 = arith.constant 0 : i32
    return %c0_i32, %c0_i32_0, %c0_i32_1 : i32, i32, i32
  }
  func.func @transform_4(%arg0: i32) -> (i32, i32) {
    %c0_i32 = arith.constant 0 : i32
    %c0_i32_0 = arith.constant 0 : i32
    %c0_i32_1 = arith.constant 0 : i32
    return %c0_i32, %c0_i32_0 : i32, i32
  }
  func.func @transform_5(%arg0: i32) -> (i32, i32) {
    %c0_i32 = arith.constant 0 : i32
    %c0_i32_0 = arith.constant 0 : i32
    %c0_i32_1 = arith.constant 0 : i32
    return %c0_i32, %c0_i32_0 : i32, i32
  }
  func.func @transform_6(%arg0: i32) -> (i32, i32) {
    %c0_i32 = arith.constant 0 : i32
    %c0_i32_0 = arith.constant 0 : i32
    %c0_i32_1 = arith.constant 0 : i32
    return %c0_i32, %c0_i32_0 : i32, i32
  }
  func.func @transform_7(%arg0: i32) -> (i32, i32, i32) {
    %c0_i32 = arith.constant 0 : i32
    %c0_i32_0 = arith.constant 0 : i32
    %c0_i32_1 = arith.constant 0 : i32
    return %arg0, %c0_i32, %c0_i32_0 : i32, i32, i32
  }
  func.func @transform_8(%arg0: i32) -> (i32, i32, i32) {
    %c0_i32 = arith.constant 0 : i32
    %c0_i32_0 = arith.constant 0 : i32
    %c0_i32_1 = arith.constant 0 : i32
    return %arg0, %c0_i32, %c0_i32_0 : i32, i32, i32
  }
}

</mosaic_0001>

<llo_original>
// kernel: _lambda_.6
$region0: #{_lambda_.6}
  #allocation0 [shape = 'u32[]', space=smem, size = 0x4, offset = 0x4, fixed_abs, tag = 'smem constant byte address 0x4 - core index']
  #allocation1 [shape = 'u32[144,128]{1,0:T(1,128)}', space=vmem, size = 0x12000, scoped, tag = 'internal scratch']
  %s0 = inlined_call_operand.vmem [shape: bf16[2,2,8,16], index: 0, kind: input, shape index: {}]
  %s1 = inlined_call_operand.vmem [shape: bf16[2,16,32], index: 1, kind: input, shape index: {}]
  %s2 = inlined_call_operand.vmem [shape: f32[1,32], index: 2, kind: input, shape index: {}]
  %s3 = inlined_call_operand.vmem [shape: f32[2,8,32], index: 3, kind: input, shape index: {}]
  %s4 = inlined_call_operand.vmem [shape: f32[1,32], index: 4, kind: input, shape index: {}]
  %s5 = inlined_call_operand.vmem [shape: f32[1,32], index: 5, kind: input, shape index: {}]
  %s6 = inlined_call_operand.vmem [shape: f32[2,8,1], index: 6, kind: input, shape index: {}]
  %s7 = inlined_call_operand.vmem [shape: f32[2,8,32], index: 7, kind: output, shape index: {}]
  %s8 = sld [smem:[#allocation0]]
  $region102: #{_lambda_.6} parent=0
    _
  %s10 = ssub.s32 1, %s8
  %s11 = scalar_select 0, %s10, %s8
  $region1: #{_lambda_.6} parent=0
    #allocation2 [shape = 'u8[8192]{0}', space=vmem, size = 0x2000, scoped, tag = 'input window, operand 0']
    loop: start=0, step=1, limit=4
    $region2: #{_lambda_.6} parent=1 // loop_pre_header
      _
    $region3: #{_lambda_.6} parent=1 // loop_header
      %s13 = sphi 0, %s17
      %p14 = scmp.ge.s32.totalorder %s13, 4
      %s20 = sphi 0, %s32
      %s21 = sphi 0, %s28
      %s22 = sphi 0, %s20
      %s23 = sphi 0, %s21
      %s24 = sphi 0, %s22
      %s25 = sphi 0, %s23
      %s37 = sphi 0, %s39
      %s40 = sphi 0, %s37
      %s41 = sphi 0, %s40
      %s57 = sphi 0, %s41
      %s61 = sphi 0, %s61
      %s63 = sphi 0, %s61
      %s64 = sphi 0, %s63
      %s78 = sphi 0, %s64
      %s82 = sphi 0, %s82
      %s84 = sphi 0, %s82
      %s85 = sphi 0, %s84
      %s99 = sphi 0, %s85
      %s107 = sphi 0, %s109
      %s110 = sphi 0, %s107
      %s111 = sphi 0, %s110
      %s127 = sphi 0, %s111
      %s131 = sphi 0, %s131
      %s133 = sphi 0, %s131
      %s134 = sphi 0, %s133
      %s148 = sphi 0, %s134
      %s152 = sphi 0, %s152
      %s154 = sphi 0, %s152
      %s155 = sphi 0, %s154
      %s169 = sphi 0, %s155
      %s177 = sphi 0, %s179
      %s180 = sphi 0, %s177
      %s181 = sphi 0, %s180
      %s197 = sphi 0, %s181
      %s205 = sphi 0, %s207
      %s208 = sphi 0, %s205
      %s209 = sphi 0, %s208
      %s225 = sphi 0, %s209
    $region4: #{_lambda_.6} parent=1 // loop_header_branch
      %16 = sbr.rel (%p14) target = $region8
    $region5: #{_lambda_.6} parent=1 // loop_body
      %s18 = ssub.s32 %s13, 1
      %s19 = ssub.s32 %s13, 2
      %s26 = sadd.s32 1, %s21
      %p27 = scmp.ge.s32.totalorder %s26, 1
      %s28 = scalar_select %p27, 0, %s26
      %s29 = sadd.s32 1, %s20
      %s30 = scalar_select %p27, %s29, %s20
      %p31 = scmp.ge.s32.totalorder %s30, 2
      %s32 = scalar_select %p31, 0, %s30
      %s33 = ssub.s32 %s20, %s32
      %s34 = ssub.s32 %s21, %s28
      %s35 = sor.u32 %s33, %s34
      %p36 = scmp.eq.s32.totalorder %s35, 0
      %s38 = sadd.s32 %s37, 1
      %s39 = scalar_select %p36, %s37, %s38
      %p42 = pneg %p36
      %p43 = scmp.eq.s32.totalorder %s13, 1
      %p44 = por %p42, %p43
      %p45 = scmp.ne.s32.totalorder %s37, %s40
      %p46 = scmp.eq.s32.totalorder %s13, 0
      %p47 = por %p45, %p46
      %p48 = scmp.ne.s32.totalorder %s37, %s40
      %p49 = scmp.eq.s32.totalorder %s18, 1
      %p50 = por %p48, %p49
      %p51 = scmp.ne.s32.totalorder %s40, %s41
      %p52 = scmp.eq.s32.totalorder %s18, 0
      %p53 = por %p51, %p52
      %p54 = scmp.ne.s32.totalorder %s40, %s41
      %p55 = scmp.eq.s32.totalorder %s19, 1
      %p56 = por %p54, %p55
      %p58 = scmp.ne.s32.totalorder %s41, %s57
      %p59 = scmp.eq.s32.totalorder %s19, 0
      %p60 = por %p58, %p59
      %s62 = sadd.s32 %s61, 1
      %p65 = scmp.eq.s32.totalorder %s13, 1
      %p66 = scmp.ne.s32.totalorder %s61, %s63
      %p67 = scmp.eq.s32.totalorder %s13, 0
      %p68 = por %p66, %p67
      %p69 = scmp.ne.s32.totalorder %s61, %s63
      %p70 = scmp.eq.s32.totalorder %s18, 1
      %p71 = por %p69, %p70
      %p72 = scmp.ne.s32.totalorder %s63, %s64
      %p73 = scmp.eq.s32.totalorder %s18, 0
      %p74 = por %p72, %p73
      %p75 = scmp.ne.s32.totalorder %s63, %s64
      %p76 = scmp.eq.s32.totalorder %s19, 1
      %p77 = por %p75, %p76
      %p79 = scmp.ne.s32.totalorder %s64, %s78
      %p80 = scmp.eq.s32.totalorder %s19, 0
      %p81 = por %p79, %p80
      %s83 = sadd.s32 %s82, 1
      %p86 = scmp.eq.s32.totalorder %s13, 1
      %p87 = scmp.ne.s32.totalorder %s82, %s84
      %p88 = scmp.eq.s32.totalorder %s13, 0
      %p89 = por %p87, %p88
      %p90 = scmp.ne.s32.totalorder %s82, %s84
      %p91 = scmp.eq.s32.totalorder %s18, 1
      %p92 = por %p90, %p91
      %p93 = scmp.ne.s32.totalorder %s84, %s85
      %p94 = scmp.eq.s32.totalorder %s18, 0
      %p95 = por %p93, %p94
      %p96 = scmp.ne.s32.totalorder %s84, %s85
      %p97 = scmp.eq.s32.totalorder %s19, 1
      %p98 = por %p96, %p97
      %p100 = scmp.ne.s32.totalorder %s85, %s99
      %p101 = scmp.eq.s32.totalorder %s19, 0
      %p102 = por %p100, %p101
      %s103 = ssub.s32 %s20, %s32
      %s104 = ssub.s32 %s21, %s28
      %s105 = sor.u32 %s103, %s104
      %p106 = scmp.eq.s32.totalorder %s105, 0
      %s108 = sadd.s32 %s107, 1
      %s109 = scalar_select %p106, %s107, %s108
      %p112 = pneg %p106
      %p113 = scmp.eq.s32.totalorder %s13, 1
      %p114 = por %p112, %p113
      %p115 = scmp.ne.s32.totalorder %s107, %s110
      %p116 = scmp.eq.s32.totalorder %s13, 0
      %p117 = por %p115, %p116
      %p118 = scmp.ne.s32.totalorder %s107, %s110
      %p119 = scmp.eq.s32.totalorder %s18, 1
      %p120 = por %p118, %p119
      %p121 = scmp.ne.s32.totalorder %s110, %s111
      %p122 = scmp.eq.s32.totalorder %s18, 0
      %p123 = por %p121, %p122
      %p124 = scmp.ne.s32.totalorder %s110, %s111
      %p125 = scmp.eq.s32.totalorder %s19, 1
      %p126 = por %p124, %p125
      %p128 = scmp.ne.s32.totalorder %s111, %s127
      %p129 = scmp.eq.s32.totalorder %s19, 0
      %p130 = por %p128, %p129
      %s132 = sadd.s32 %s131, 1
      %p135 = scmp.eq.s32.totalorder %s13, 1
      %p136 = scmp.ne.s32.totalorder %s131, %s133
      %p137 = scmp.eq.s32.totalorder %s13, 0
      %p138 = por %p136, %p137
      %p139 = scmp.ne.s32.totalorder %s131, %s133
      %p140 = scmp.eq.s32.totalorder %s18, 1
      %p141 = por %p139, %p140
      %p142 = scmp.ne.s32.totalorder %s133, %s134
      %p143 = scmp.eq.s32.totalorder %s18, 0
      %p144 = por %p142, %p143
      %p145 = scmp.ne.s32.totalorder %s133, %s134
      %p146 = scmp.eq.s32.totalorder %s19, 1
      %p147 = por %p145, %p146
      %p149 = scmp.ne.s32.totalorder %s134, %s148
      %p150 = scmp.eq.s32.totalorder %s19, 0
      %p151 = por %p149, %p150
      %s153 = sadd.s32 %s152, 1
      %p156 = scmp.eq.s32.totalorder %s13, 1
      %p157 = scmp.ne.s32.totalorder %s152, %s154
      %p158 = scmp.eq.s32.totalorder %s13, 0
      %p159 = por %p157, %p158
      %p160 = scmp.ne.s32.totalorder %s152, %s154
      %p161 = scmp.eq.s32.totalorder %s18, 1
      %p162 = por %p160, %p161
      %p163 = scmp.ne.s32.totalorder %s154, %s155
      %p164 = scmp.eq.s32.totalorder %s18, 0
      %p165 = por %p163, %p164
      %p166 = scmp.ne.s32.totalorder %s154, %s155
      %p167 = scmp.eq.s32.totalorder %s19, 1
      %p168 = por %p166, %p167
      %p170 = scmp.ne.s32.totalorder %s155, %s169
      %p171 = scmp.eq.s32.totalorder %s19, 0
      %p172 = por %p170, %p171
      %s173 = ssub.s32 %s20, %s32
      %s174 = ssub.s32 %s21, %s28
      %s175 = sor.u32 %s173, %s174
      %p176 = scmp.eq.s32.totalorder %s175, 0
      %s178 = sadd.s32 %s177, 1
      %s179 = scalar_select %p176, %s177, %s178
      %p182 = pneg %p176
      %p183 = scmp.eq.s32.totalorder %s13, 1
      %p184 = por %p182, %p183
      %p185 = scmp.ne.s32.totalorder %s177, %s180
      %p186 = scmp.eq.s32.totalorder %s13, 0
      %p187 = por %p185, %p186
      %p188 = scmp.ne.s32.totalorder %s177, %s180
      %p189 = scmp.eq.s32.totalorder %s18, 1
      %p190 = por %p188, %p189
      %p191 = scmp.ne.s32.totalorder %s180, %s181
      %p192 = scmp.eq.s32.totalorder %s18, 0
      %p193 = por %p191, %p192
      %p194 = scmp.ne.s32.totalorder %s180, %s181
      %p195 = scmp.eq.s32.totalorder %s19, 1
      %p196 = por %p194, %p195
      %p198 = scmp.ne.s32.totalorder %s181, %s197
      %p199 = scmp.eq.s32.totalorder %s19, 0
      %p200 = por %p198, %p199
      %s201 = ssub.s32 %s20, %s32
      %s202 = ssub.s32 %s21, %s28
      %s203 = sor.u32 %s201, %s202
      %p204 = scmp.eq.s32.totalorder %s203, 0
      %s206 = sadd.s32 %s205, 1
      %s207 = scalar_select %p204, %s205, %s206
      %p210 = pneg %p204
      %p211 = scmp.eq.s32.totalorder %s13, 1
      %p212 = por %p210, %p211
      %p213 = scmp.ne.s32.totalorder %s205, %s208
      %p214 = scmp.eq.s32.totalorder %s13, 0
      %p215 = por %p213, %p214
      %p216 = scmp.ne.s32.totalorder %s205, %s208
      %p217 = scmp.eq.s32.totalorder %s18, 1
      %p218 = por %p216, %p217
      %p219 = scmp.ne.s32.totalorder %s208, %s209
      %p220 = scmp.eq.s32.totalorder %s18, 0
      %p221 = por %p219, %p220
      %p222 = scmp.ne.s32.totalorder %s208, %s209
      %p223 = scmp.eq.s32.totalorder %s19, 1
      %p224 = por %p222, %p223
      %p226 = scmp.ne.s32.totalorder %s209, %s225
      %p227 = scmp.eq.s32.totalorder %s19, 0
      %p228 = por %p226, %p227
      %p229 = scmp.le.s32.totalorder 1, %s13
      %p230 = scmp.lt.s32.totalorder %s13, 3
      %p231 = pnand %p229, %p230
      %p232 = pneg %p231
      // Predicated region
      $region9: #{_lambda_.6} parent=5 // pred_check
        _
      $region10: #{_lambda_.6} parent=5 // pred_check_branch
        %234 = sbr.rel (%p231) target = $region12
      $region11: #{_lambda_.6} parent=5 // pred_region
        %s235 = ssub.s32 %s13, 1
        // Predicated region
        $region13: #{_lambda_.6} parent=11 // pred_check
          %p236 = pneg %p74
        $region14: #{_lambda_.6} parent=11 // pred_check_branch
          %238 = sbr.rel (%p236) target = $region16
        $region15: #{_lambda_.6} parent=11 // pred_region
          _
        $region16: #{_lambda_.6} parent=11 // pred_fallthru
          _
        // Predicated region
        $region17: #{_lambda_.6} parent=11 // pred_check
          %p239 = pneg %p95
        $region18: #{_lambda_.6} parent=11 // pred_check_branch
          %241 = sbr.rel (%p239) target = $region20
        $region19: #{_lambda_.6} parent=11 // pred_region
          _
        $region20: #{_lambda_.6} parent=11 // pred_fallthru
          _
        // Predicated region
        $region21: #{_lambda_.6} parent=11 // pred_check
          %p242 = pneg %p144
        $region22: #{_lambda_.6} parent=11 // pred_check_branch
          %244 = sbr.rel (%p242) target = $region24
        $region23: #{_lambda_.6} parent=11 // pred_region
          _
        $region24: #{_lambda_.6} parent=11 // pred_fallthru
          _
        // Predicated region
        $region25: #{_lambda_.6} parent=11 // pred_check
          %p245 = pneg %p165
        $region26: #{_lambda_.6} parent=11 // pred_check_branch
          %247 = sbr.rel (%p245) target = $region28
        $region27: #{_lambda_.6} parent=11 // pred_region
          _
        $region28: #{_lambda_.6} parent=11 // pred_fallthru
          _
      $region12: #{_lambda_.6} parent=5 // pred_fallthru
        _
      %p248 = scmp.lt.s32.totalorder %s13, 2
      // Predicated region
      $region29: #{_lambda_.6} parent=5 // pred_check
        %p249 = pneg %p248
      $region30: #{_lambda_.6} parent=5 // pred_check_branch
        %251 = sbr.rel (%p249) target = $region32
      $region31: #{_lambda_.6} parent=5 // pred_region
        // Predicated region
        $region33: #{_lambda_.6} parent=31 // pred_check
          %p252 = pneg %p47
        $region34: #{_lambda_.6} parent=31 // pred_check_branch
          %254 = sbr.rel (%p252) target = $region36
        $region35: #{_lambda_.6} parent=31 // pred_region
          %s255 = sand.u32 %s37, 1
          %s256 = sand.u32 %s37, 1
          %s257 = smul.addr %s256, 8
          %s258 = scalar_lea.vmem [#allocation2], %s257
          %s259 = sadd.s32 %s21, %s20
          %s260 = smul.addr %s259, 4
          %s261 = scalar_lea.vmem %s0, %s260
          // Predicated region
          $region37: #{_lambda_.6} parent=35 // pred_check
            _
          $region38: #{_lambda_.6} parent=35 // pred_check_branch
            %263 = sbr.rel (0) target = $region40
          $region39: #{_lambda_.6} parent=35 // pred_region
            // Predicated region
            $region41: #{_lambda_.6} parent=39 // pred_check
              _
            $region42: #{_lambda_.6} parent=39 // pred_check_branch
              %265 = sbr.rel target = $region44
            $region43: #{_lambda_.6} parent=39 // pred_region
              // Predicated region
              $region56: #{_lambda_.6} parent=43 // pred_check
                _
              $region57: #{_lambda_.6} parent=43 // pred_check_branch
                %283 = sbr.rel (0) target = $region59
              $region58: #{_lambda_.6} parent=43 // pred_region
                loop: start=0, step=1, limit=1
                $region60: #{_lambda_.6} parent=58 // loop_pre_header
                  _
                $region61: #{_lambda_.6} parent=58 // loop_header
                  %s285 = sphi 0, %s289
                  %p286 = scmp.ge.s32.totalorder %s285, 1
                  %s290 = sphi %s261, %s261
                  %s291 = sphi %s258, %s258
                $region62: #{_lambda_.6} parent=58 // loop_header_branch
                  %288 = sbr.rel (%p286) target = $region66
                $region63: #{_lambda_.6} parent=58 // loop_body
                  _
                $region64: #{_lambda_.6} parent=58 // loop_footer
                  %s289 = sadd.s32 1, %s285
                $region65: #{_lambda_.6} parent=58 // loop_footer_branch
                  %284 = sbr.rel target = $region61
                $region66: #{_lambda_.6} parent=58 // loop_exit
                  _
                %s293 = ssub.s32 16, 1
                loop: start=0, step=1, limit=1
                $region67: #{_lambda_.6} parent=58 // loop_pre_header
                  _
                $region68: #{_lambda_.6} parent=58 // loop_header
                  %s295 = sphi 0, %s299
                  %p296 = scmp.ge.s32.totalorder %s295, 1
                  %s300 = sphi %s261, %s261
                  %s301 = sphi %s258, %s258
                $region69: #{_lambda_.6} parent=58 // loop_header_branch
                  %298 = sbr.rel (%p296) target = $region73
                $region70: #{_lambda_.6} parent=58 // loop_body
                  %v302 = vld [vmem:[%s300] sm:%s293]
                  %303 = vst [vmem:[%s301] sm:%s293] %v302
                  %v304 = vld [vmem:[%s300 + $0x8] sm:%s293]
                  %305 = vst [vmem:[%s301 + $0x4] sm:%s293] %v304
                $region71: #{_lambda_.6} parent=58 // loop_footer
                  %s299 = sadd.s32 1, %s295
                $region72: #{_lambda_.6} parent=58 // loop_footer_branch
                  %294 = sbr.rel target = $region68
                $region73: #{_lambda_.6} parent=58 // loop_exit
                  _
              $region59: #{_lambda_.6} parent=43 // pred_fallthru
                _
            $region44: #{_lambda_.6} parent=39 // pred_fallthru
              _
            // Predicated region
            $region45: #{_lambda_.6} parent=39 // pred_check
              _
            $region46: #{_lambda_.6} parent=39 // pred_check_branch
              %267 = sbr.rel (0) target = $region48
            $region47: #{_lambda_.6} parent=39 // pred_region
              %s269 = ssub.s32 16, 1
              loop: start=0, step=1, limit=1
              $region49: #{_lambda_.6} parent=47 // loop_pre_header
                _
              $region50: #{_lambda_.6} parent=47 // loop_header
                %s271 = sphi 0, %s275
                %p272 = scmp.ge.s32.totalorder %s271, 1
                %s276 = sphi %s261, %s261
                %s277 = sphi %s258, %s258
              $region51: #{_lambda_.6} parent=47 // loop_header_branch
                %274 = sbr.rel (%p272) target = $region55
              $region52: #{_lambda_.6} parent=47 // loop_body
                %v278 = vld [vmem:[%s276] sm:%s269]
                %279 = vst [vmem:[%s277] sm:%s269] %v278
                %v280 = vld [vmem:[%s276 + $0x8] sm:%s269]
                %281 = vst [vmem:[%s277 + $0x4] sm:%s269] %v280
              $region53: #{_lambda_.6} parent=47 // loop_footer
                %s275 = sadd.s32 1, %s271
              $region54: #{_lambda_.6} parent=47 // loop_footer_branch
                %270 = sbr.rel target = $region50
              $region55: #{_lambda_.6} parent=47 // loop_exit
                _
            $region48: #{_lambda_.6} parent=39 // pred_fallthru
              _
          $region40: #{_lambda_.6} parent=35 // pred_fallthru
            _
          %306 = vnop
        $region36: #{_lambda_.6} parent=31 // pred_fallthru
          _
        // Predicated region
        $region74: #{_lambda_.6} parent=31 // pred_check
          %p307 = pneg %p117
        $region75: #{_lambda_.6} parent=31 // pred_check_branch
          %309 = sbr.rel (%p307) target = $region77
        $region76: #{_lambda_.6} parent=31 // pred_region
          %p310 = scmp.lt.s32.totalorder %s20, 1
          %s311 = scalar_select %p310, %s20, 1
          %p312 = scmp.lt.s32.totalorder %s21, 0
          %s313 = scalar_select %p312, %s21, 0
          %s314 = sadd.s32 %s313, %s311
          %s315 = smul.addr %s314, 8
          %s316 = scalar_lea.vmem %s3, %s315
        $region77: #{_lambda_.6} parent=31 // pred_fallthru
          _
        // Predicated region
        $region78: #{_lambda_.6} parent=31 // pred_check
          %p317 = pneg %p187
        $region79: #{_lambda_.6} parent=31 // pred_check_branch
          %319 = sbr.rel (%p317) target = $region81
        $region80: #{_lambda_.6} parent=31 // pred_region
          %p320 = scmp.lt.s32.totalorder %s20, 1
          %s321 = scalar_select %p320, %s20, 1
          %p322 = scmp.lt.s32.totalorder %s21, 0
          %s323 = scalar_select %p322, %s21, 0
          %s324 = sadd.s32 %s323, %s321
          %s325 = smul.addr %s324, 8
          %s326 = scalar_lea.vmem %s6, %s325
        $region81: #{_lambda_.6} parent=31 // pred_fallthru
          _
      $region32: #{_lambda_.6} parent=5 // pred_fallthru
        _
      %p327 = scmp.le.s32.totalorder 1, %s13
      %p328 = scmp.lt.s32.totalorder %s13, 3
      %p329 = pnand %p327, %p328
      %p330 = pneg %p329
      // Predicated region
      $region82: #{_lambda_.6} parent=5 // pred_check
        _
      $region83: #{_lambda_.6} parent=5 // pred_check_branch
        %332 = sbr.rel (%p329) target = $region85
      $region84: #{_lambda_.6} parent=5 // pred_region
        %s333 = ssub.s32 %s13, 1
        %s334 = sand.u32 %s40, 1
        %s335 = sand.u32 %s40, 1
        %s336 = smul.addr %s335, 8
        %s337 = scalar_lea.vmem [#allocation2], %s336
        // Predicated region
        $region86: #{_lambda_.6} parent=84 // pred_check
          %p338 = pneg %p53
        $region87: #{_lambda_.6} parent=84 // pred_check_branch
          %340 = sbr.rel (%p338) target = $region89
        $region88: #{_lambda_.6} parent=84 // pred_region
          _
        $region89: #{_lambda_.6} parent=84 // pred_fallthru
          _
        %s341 = sand.u32 %s40, 1
        %s342 = sand.u32 %s40, 1
        %s343 = smul.addr %s342, 8
        %s344 = scalar_lea.vmem [#allocation2], %s343
        %p345 = pneg %p53
        %p346 = pneg %p50
        %p347 = pneg %p74
        %p348 = pneg %p71
        %p349 = pneg %p95
        %p350 = pneg %p92
        %p351 = scmp.lt.s32.totalorder %s22, 1
        %s352 = scalar_select %p351, %s22, 1
        %p353 = scmp.lt.s32.totalorder %s23, 0
        %s354 = scalar_select %p353, %s23, 0
        %s355 = sadd.s32 %s354, %s352
        %s356 = smul.addr %s355, 8
        %s357 = scalar_lea.vmem %s3, %s356
        %p358 = pneg %p123
        %p359 = pneg %p120
        %p360 = pneg %p144
        %p361 = pneg %p141
        %p362 = pneg %p165
        %p363 = pneg %p162
        %p364 = scmp.lt.s32.totalorder %s22, 1
        %s365 = scalar_select %p364, %s22, 1
        %p366 = scmp.lt.s32.totalorder %s23, 0
        %s367 = scalar_select %p366, %s23, 0
        %s368 = sadd.s32 %s367, %s365
        %s369 = smul.addr %s368, 8
        %s370 = scalar_lea.vmem %s6, %s369
        %p371 = pneg %p193
        %p372 = pneg %p190
        %p373 = pneg %p221
        %p374 = pneg %p218
        %p375 = scmp.lt.s32.totalorder %s22, 1
        %s376 = scalar_select %p375, %s22, 1
        %p377 = scmp.lt.s32.totalorder %s23, 0
        %s378 = scalar_select %p377, %s23, 0
        %s379 = sadd.s32 %s378, %s376
        %s380 = smul.addr %s379, 8
        %s381 = scalar_lea.vmem %s7, %s380
        %p382 = scmp.lt.s32.totalorder %s22, 1
        %s383 = scalar_select %p382, %s22, 1
        %p384 = scmp.lt.s32.totalorder %s23, 0
        %s385 = scalar_select %p384, %s23, 0
        %s386 = sadd.s32 %s385, %s383
        %s387 = smul.addr %s386, 8
        %s388 = scalar_lea.vmem %s3, %s387
        %p389 = scmp.lt.s32.totalorder %s22, 1
        %s390 = scalar_select %p389, %s22, 1
        %p391 = scmp.lt.s32.totalorder %s23, 0
        %s392 = scalar_select %p391, %s23, 0
        %s393 = sadd.s32 %s392, %s390
        %s394 = smul.addr %s393, 8
        %s395 = scalar_lea.vmem %s6, %s394
        %p396 = scmp.lt.s32.totalorder %s22, 1
        %s397 = scalar_select %p396, %s22, 1
        %p398 = scmp.lt.s32.totalorder %s23, 0
        %s399 = scalar_select %p398, %s23, 0
        %s400 = sadd.s32 %s399, %s397
        %s401 = smul.addr %s400, 8
        %s402 = scalar_lea.vmem %s7, %s401
        %v404 = vld [vmem:[%s2] sm:$0x1]
        %v406 = vlaneseq
        %v407 = vshrl.u32 %v406, 7
        %v408 = vsub.s32 0, %v407
        %v409 = vrot.slane %v404, %v408
        %v411 = vadd.f32 %v409, 0.0
        %v412 = vld [vmem:[%s337] sm:$0xf]
        %v413 = vld [vmem:[%s1] sm:$0xf]
        %v414 = vld [vmem:[%s1 + $0x4] sm:$0xf]
        %v417 = vunpack.c.l.b16 %v413
        %v418 = vunpack.c.l.b16 %v414
        %v419 = vpack.c.b16 %v418, %v417
        %vm421 = vcmask 130048
        %v423 = vsel %vm421, %v412, 0
        %425 = vmatprep.subr.bf16.mxu0 0
        %426 = vmatpush1.bf16.msra.mxu0 0
        %427 = vmatprep.subr.bf16.mxu0 0
        %428 = vmatpush1.bf16.msra.mxu0 0
        %429 = vmatprep.subr.bf16.mxu0 0
        %430 = vmatpush1.bf16.msra.mxu0 0
        %431 = vmatprep.subr.bf16.mxu0 0
        %432 = vmatpush1.bf16.msra.mxu0 0
        %433 = vmatprep.subr.bf16.mxu0 0
        %434 = vmatpush1.bf16.msra.mxu0 0
        %435 = vmatprep.subr.bf16.mxu0 0
        %436 = vmatpush1.bf16.msra.mxu0 0
        %437 = vmatprep.subr.bf16.mxu0 0
        %438 = vmatpush1.bf16.msra.mxu0 0
        %439 = vmatprep.subr.bf16.mxu0 0
        %440 = vmatpush1.bf16.msra.mxu0 %v419
        %441 = vmatprep.subr.bf16.mxu0 0
        %442 = vmatpush2.bf16.msra.mxu0 0
        %443 = vmatprep.subr.bf16.mxu0 0
        %444 = vmatpush2.bf16.msra.mxu0 0
        %445 = vmatprep.subr.bf16.mxu0 0
        %446 = vmatpush2.bf16.msra.mxu0 0
        %447 = vmatprep.subr.bf16.mxu0 0
        %448 = vmatpush2.bf16.msra.mxu0 0
        %449 = vmatprep.subr.bf16.mxu0 0
        %450 = vmatpush2.bf16.msra.mxu0 0
        %451 = vmatprep.subr.bf16.mxu0 0
        %452 = vmatpush2.bf16.msra.mxu0 0
        %453 = vmatprep.subr.bf16.mxu0 0
        %454 = vmatpush2.bf16.msra.mxu0 0
        %455 = vmatprep.subr.bf16.mxu0 0
        %456 = vmatpush2.bf16.msra.mxu0 0
        %457 = vmatprep.mubr.bf16.mxu0 0
        %458 = vmatmul.mubr.bf16.gmra.mxu0 %v423
        %v459 = vpop.f32.mrf.mxu0
        %v460 = vadd.f32 0.0, %v459
        %v461 = vpop.f32.mrf.mxu0
        %v462 = vpop.f32.mrf.mxu0
        %v463 = vpop.f32.mrf.mxu0
        %464 = vdwg.mxu0
        %v465 = vadd.f32 %v411, %v460
        %s466 = scalar_lea.vmem %s337, 4 [#allocation2]
        %v467 = vld [vmem:[%s466] sm:$0xf]
        %s468 = scalar_lea.vmem %s1, 8
        %v469 = vld [vmem:[%s468] sm:$0xf]
        %v470 = vld [vmem:[%s468 + $0x4] sm:$0xf]
        %v473 = vunpack.c.l.b16 %v469
        %v474 = vunpack.c.l.b16 %v470
        %v475 = vpack.c.b16 %v474, %v473
        %v478 = vsel %vm421, %v467, 0
        %480 = vmatprep.subr.bf16.mxu0 0
        %481 = vmatpush1.bf16.msra.mxu0 0
        %482 = vmatprep.subr.bf16.mxu0 0
        %483 = vmatpush1.bf16.msra.mxu0 0
        %484 = vmatprep.subr.bf16.mxu0 0
        %485 = vmatpush1.bf16.msra.mxu0 0
        %486 = vmatprep.subr.bf16.mxu0 0
        %487 = vmatpush1.bf16.msra.mxu0 0
        %488 = vmatprep.subr.bf16.mxu0 0
        %489 = vmatpush1.bf16.msra.mxu0 0
        %490 = vmatprep.subr.bf16.mxu0 0
        %491 = vmatpush1.bf16.msra.mxu0 0
        %492 = vmatprep.subr.bf16.mxu0 0
        %493 = vmatpush1.bf16.msra.mxu0 0
        %494 = vmatprep.subr.bf16.mxu0 0
        %495 = vmatpush1.bf16.msra.mxu0 %v475
        %496 = vmatprep.subr.bf16.mxu0 0
        %497 = vmatpush2.bf16.msra.mxu0 0
        %498 = vmatprep.subr.bf16.mxu0 0
        %499 = vmatpush2.bf16.msra.mxu0 0
        %500 = vmatprep.subr.bf16.mxu0 0
        %501 = vmatpush2.bf16.msra.mxu0 0
        %502 = vmatprep.subr.bf16.mxu0 0
        %503 = vmatpush2.bf16.msra.mxu0 0
        %504 = vmatprep.subr.bf16.mxu0 0
        %505 = vmatpush2.bf16.msra.mxu0 0
        %506 = vmatprep.subr.bf16.mxu0 0
        %507 = vmatpush2.bf16.msra.mxu0 0
        %508 = vmatprep.subr.bf16.mxu0 0
        %509 = vmatpush2.bf16.msra.mxu0 0
        %510 = vmatprep.subr.bf16.mxu0 0
        %511 = vmatpush2.bf16.msra.mxu0 0
        %512 = vmatprep.mubr.bf16.mxu0 0
        %513 = vmatmul.mubr.bf16.gmra.mxu0 %v478
        %v514 = vpop.f32.mrf.mxu0
        %v515 = vadd.f32 0.0, %v514
        %v516 = vpop.f32.mrf.mxu0
        %v517 = vpop.f32.mrf.mxu0
        %v518 = vpop.f32.mrf.mxu0
        %519 = vdwg.mxu0
        %v520 = vadd.f32 %v465, %v515
        %v521 = vld [vmem:[%s388] sm:$0xff]
        %v522 = vadd.f32 %v520, %v521
        %vm523 = vcmask 261120
        %v524 = vsel %vm523, %v522, 0.0
        %525 = vadd.xlane.f32.xlu0 %v524
        %v526 = vpop.xlane.xlu0 %525
        %v527 = vrcp.pop 32.0
        %v528 = vmul.f32 %v526, %v527
        %v529 = vsub.f32 %v522, %v528
        %v530 = vmul.f32 %v529, %v529
        %v531 = vsel %vm523, %v530, 0.0
        %532 = vadd.xlane.f32.xlu0 %v531
        %v533 = vpop.xlane.xlu0 %532
        %v534 = vmul.f32 %v533, %v527
        %v535 = vadd.f32 %v534, 1e-05
        %v536 = vrsqrt.pop %v535
        %v537 = vmul.f32 %v529, %v536
        %v538 = vld [vmem:[%s4] sm:$0x1]
        %v540 = vlaneseq
        %v541 = vshrl.u32 %v540, 7
        %v542 = vsub.s32 0, %v541
        %v543 = vrot.slane %v538, %v542
        %v545 = vmul.f32 %v537, %v543
        %v546 = vld [vmem:[%s5] sm:$0x1]
        %v548 = vlaneseq
        %v549 = vshrl.u32 %v548, 7
        %v550 = vsub.s32 0, %v549
        %v551 = vrot.slane %v546, %v550
        %v553 = vadd.f32 %v545, %v551
        %v554 = vld [vmem:[%s395] sm:$0xff]
        %vm555 = vcmp.gt.f32.partialorder %v554, 0.0
        %v556 = vsel %vm555, 1, 0
        %557 = vset.pattern.permute.xlu0 0
        %558 = vperm.xlu0 %557, %v556
        %v559 = vpop.permute.xlu0 %558
        %vm560 = vcmp.eq.s32.totalorder %v559, 1
        %v561 = vsel %vm560, 0.0, %v553
        %562 = vst.msk [vmem:[%s402] sm:$0xff] %vm523, %v561
        %p563 = scmp.lt.s32.totalorder %s22, 1
        %s564 = scalar_select %p563, %s22, 1
        %p565 = scmp.lt.s32.totalorder %s23, 0
        %s566 = scalar_select %p565, %s23, 0
        %s567 = sadd.s32 %s566, %s564
        %s568 = smul.addr %s567, 8
        %s569 = scalar_lea.vmem %s7, %s568
        // Predicated region
        $region90: #{_lambda_.6} parent=84 // pred_check
          %p570 = pneg %p218
        $region91: #{_lambda_.6} parent=84 // pred_check_branch
          %572 = sbr.rel (%p570) target = $region93
        $region92: #{_lambda_.6} parent=84 // pred_region
          _
        $region93: #{_lambda_.6} parent=84 // pred_fallthru
          _
      $region85: #{_lambda_.6} parent=5 // pred_fallthru
        _
      %p573 = scmp.le.s32.totalorder 2, %s13
      // Predicated region
      $region94: #{_lambda_.6} parent=5 // pred_check
        %p574 = pneg %p573
      $region95: #{_lambda_.6} parent=5 // pred_check_branch
        %576 = sbr.rel (%p574) target = $region97
      $region96: #{_lambda_.6} parent=5 // pred_region
        %s577 = ssub.s32 %s13, 2
        // Predicated region
        $region98: #{_lambda_.6} parent=96 // pred_check
          %p578 = pneg %p224
        $region99: #{_lambda_.6} parent=96 // pred_check_branch
          %580 = sbr.rel (%p578) target = $region101
        $region100: #{_lambda_.6} parent=96 // pred_region
          %p581 = scmp.lt.s32.totalorder %s24, 1
          %s582 = scalar_select %p581, %s24, 1
          %p583 = scmp.lt.s32.totalorder %s25, 0
          %s584 = scalar_select %p583, %s25, 0
          %s585 = sadd.s32 %s584, %s582
          %s586 = smul.addr %s585, 8
          %s587 = scalar_lea.vmem %s7, %s586
        $region101: #{_lambda_.6} parent=96 // pred_fallthru
          _
      $region97: #{_lambda_.6} parent=5 // pred_fallthru
        _
    $region6: #{_lambda_.6} parent=1 // loop_footer
      %s17 = sadd.s32 1, %s13
    $region7: #{_lambda_.6} parent=1 // loop_footer_branch
      %12 = sbr.rel target = $region3
    $region8: #{_lambda_.6} parent=1 // loop_exit
      _

// kernel: _lambda_.4
$region0: #{_lambda_.4}
  #allocation0 [shape = 'u32[]', space=smem, size = 0x4, offset = 0x4, fixed_abs, tag = 'smem constant byte address 0x4 - core index']
  #allocation1 [shape = 'u32[144,128]{1,0:T(1,128)}', space=vmem, size = 0x12000, scoped, tag = 'internal scratch']
  %s0 = inlined_call_operand.vmem [shape: f32[2,8,32], index: 0, kind: input, shape index: {}]
  %s1 = inlined_call_operand.vmem [shape: bf16[32,96], index: 1, kind: input, shape index: {}]
  %s2 = inlined_call_operand.vmem [shape: f32[1,96], index: 2, kind: input, shape index: {}]
  %s3 = inlined_call_operand.vmem [shape: bf16[2,2,8,16], index: 3, kind: output, shape index: {0}]
  %s4 = inlined_call_operand.vmem [shape: bf16[2,2,8,16], index: 4, kind: output, shape index: {1}]
  %s5 = inlined_call_operand.vmem [shape: bf16[2,2,8,16], index: 5, kind: output, shape index: {2}]
  %6 = xla_tuple %s3, %s4, %s5
  %s7 = sld [smem:[#allocation0]]
  $region172: #{_lambda_.4} parent=0
    _
  %s9 = ssub.s32 1, %s7
  %s10 = scalar_select 0, %s9, %s7
  $region1: #{_lambda_.4} parent=0
    #allocation2 [shape = 'u8[8192]{0}', space=vmem, size = 0x2000, scoped, tag = 'output window, operand 0']
    #allocation3 [shape = 'u8[8192]{0}', space=vmem, size = 0x2000, scoped, tag = 'output window, operand 1']
    #allocation4 [shape = 'u8[8192]{0}', space=vmem, size = 0x2000, scoped, tag = 'output window, operand 2']
    loop: start=0, step=1, limit=4
    $region2: #{_lambda_.4} parent=1 // loop_pre_header
      _
    $region3: #{_lambda_.4} parent=1 // loop_header
      %s12 = sphi 0, %s16
      %p13 = scmp.ge.s32.totalorder %s12, 4
      %s19 = sphi 0, %s31
      %s20 = sphi 0, %s27
      %s21 = sphi 0, %s19
      %s22 = sphi 0, %s20
      %s23 = sphi 0, %s21
      %s24 = sphi 0, %s22
      %s36 = sphi 0, %s38
      %s39 = sphi 0, %s36
      %s40 = sphi 0, %s39
      %s56 = sphi 0, %s40
      %s60 = sphi 0, %s60
      %s62 = sphi 0, %s60
      %s63 = sphi 0, %s62
      %s77 = sphi 0, %s63
      %s81 = sphi 0, %s81
      %s83 = sphi 0, %s81
      %s84 = sphi 0, %s83
      %s98 = sphi 0, %s84
      %s106 = sphi 0, %s108
      %s109 = sphi 0, %s106
      %s110 = sphi 0, %s109
      %s126 = sphi 0, %s110
      %s134 = sphi 0, %s136
      %s137 = sphi 0, %s134
      %s138 = sphi 0, %s137
      %s154 = sphi 0, %s138
      %s162 = sphi 0, %s164
      %s165 = sphi 0, %s162
      %s166 = sphi 0, %s165
      %s182 = sphi 0, %s166
    $region4: #{_lambda_.4} parent=1 // loop_header_branch
      %15 = sbr.rel (%p13) target = $region8
    $region5: #{_lambda_.4} parent=1 // loop_body
      %s17 = ssub.s32 %s12, 1
      %s18 = ssub.s32 %s12, 2
      %s25 = sadd.s32 1, %s20
      %p26 = scmp.ge.s32.totalorder %s25, 1
      %s27 = scalar_select %p26, 0, %s25
      %s28 = sadd.s32 1, %s19
      %s29 = scalar_select %p26, %s28, %s19
      %p30 = scmp.ge.s32.totalorder %s29, 2
      %s31 = scalar_select %p30, 0, %s29
      %s32 = ssub.s32 %s19, %s31
      %s33 = ssub.s32 %s20, %s27
      %s34 = sor.u32 %s32, %s33
      %p35 = scmp.eq.s32.totalorder %s34, 0
      %s37 = sadd.s32 %s36, 1
      %s38 = scalar_select %p35, %s36, %s37
      %p41 = pneg %p35
      %p42 = scmp.eq.s32.totalorder %s12, 1
      %p43 = por %p41, %p42
      %p44 = scmp.ne.s32.totalorder %s36, %s39
      %p45 = scmp.eq.s32.totalorder %s12, 0
      %p46 = por %p44, %p45
      %p47 = scmp.ne.s32.totalorder %s36, %s39
      %p48 = scmp.eq.s32.totalorder %s17, 1
      %p49 = por %p47, %p48
      %p50 = scmp.ne.s32.totalorder %s39, %s40
      %p51 = scmp.eq.s32.totalorder %s17, 0
      %p52 = por %p50, %p51
      %p53 = scmp.ne.s32.totalorder %s39, %s40
      %p54 = scmp.eq.s32.totalorder %s18, 1
      %p55 = por %p53, %p54
      %p57 = scmp.ne.s32.totalorder %s40, %s56
      %p58 = scmp.eq.s32.totalorder %s18, 0
      %p59 = por %p57, %p58
      %s61 = sadd.s32 %s60, 1
      %p64 = scmp.eq.s32.totalorder %s12, 1
      %p65 = scmp.ne.s32.totalorder %s60, %s62
      %p66 = scmp.eq.s32.totalorder %s12, 0
      %p67 = por %p65, %p66
      %p68 = scmp.ne.s32.totalorder %s60, %s62
      %p69 = scmp.eq.s32.totalorder %s17, 1
      %p70 = por %p68, %p69
      %p71 = scmp.ne.s32.totalorder %s62, %s63
      %p72 = scmp.eq.s32.totalorder %s17, 0
      %p73 = por %p71, %p72
      %p74 = scmp.ne.s32.totalorder %s62, %s63
      %p75 = scmp.eq.s32.totalorder %s18, 1
      %p76 = por %p74, %p75
      %p78 = scmp.ne.s32.totalorder %s63, %s77
      %p79 = scmp.eq.s32.totalorder %s18, 0
      %p80 = por %p78, %p79
      %s82 = sadd.s32 %s81, 1
      %p85 = scmp.eq.s32.totalorder %s12, 1
      %p86 = scmp.ne.s32.totalorder %s81, %s83
      %p87 = scmp.eq.s32.totalorder %s12, 0
      %p88 = por %p86, %p87
      %p89 = scmp.ne.s32.totalorder %s81, %s83
      %p90 = scmp.eq.s32.totalorder %s17, 1
      %p91 = por %p89, %p90
      %p92 = scmp.ne.s32.totalorder %s83, %s84
      %p93 = scmp.eq.s32.totalorder %s17, 0
      %p94 = por %p92, %p93
      %p95 = scmp.ne.s32.totalorder %s83, %s84
      %p96 = scmp.eq.s32.totalorder %s18, 1
      %p97 = por %p95, %p96
      %p99 = scmp.ne.s32.totalorder %s84, %s98
      %p100 = scmp.eq.s32.totalorder %s18, 0
      %p101 = por %p99, %p100
      %s102 = ssub.s32 %s19, %s31
      %s103 = ssub.s32 %s20, %s27
      %s104 = sor.u32 %s102, %s103
      %p105 = scmp.eq.s32.totalorder %s104, 0
      %s107 = sadd.s32 %s106, 1
      %s108 = scalar_select %p105, %s106, %s107
      %p111 = pneg %p105
      %p112 = scmp.eq.s32.totalorder %s12, 1
      %p113 = por %p111, %p112
      %p114 = scmp.ne.s32.totalorder %s106, %s109
      %p115 = scmp.eq.s32.totalorder %s12, 0
      %p116 = por %p114, %p115
      %p117 = scmp.ne.s32.totalorder %s106, %s109
      %p118 = scmp.eq.s32.totalorder %s17, 1
      %p119 = por %p117, %p118
      %p120 = scmp.ne.s32.totalorder %s109, %s110
      %p121 = scmp.eq.s32.totalorder %s17, 0
      %p122 = por %p120, %p121
      %p123 = scmp.ne.s32.totalorder %s109, %s110
      %p124 = scmp.eq.s32.totalorder %s18, 1
      %p125 = por %p123, %p124
      %p127 = scmp.ne.s32.totalorder %s110, %s126
      %p128 = scmp.eq.s32.totalorder %s18, 0
      %p129 = por %p127, %p128
      %s130 = ssub.s32 %s19, %s31
      %s131 = ssub.s32 %s20, %s27
      %s132 = sor.u32 %s130, %s131
      %p133 = scmp.eq.s32.totalorder %s132, 0
      %s135 = sadd.s32 %s134, 1
      %s136 = scalar_select %p133, %s134, %s135
      %p139 = pneg %p133
      %p140 = scmp.eq.s32.totalorder %s12, 1
      %p141 = por %p139, %p140
      %p142 = scmp.ne.s32.totalorder %s134, %s137
      %p143 = scmp.eq.s32.totalorder %s12, 0
      %p144 = por %p142, %p143
      %p145 = scmp.ne.s32.totalorder %s134, %s137
      %p146 = scmp.eq.s32.totalorder %s17, 1
      %p147 = por %p145, %p146
      %p148 = scmp.ne.s32.totalorder %s137, %s138
      %p149 = scmp.eq.s32.totalorder %s17, 0
      %p150 = por %p148, %p149
      %p151 = scmp.ne.s32.totalorder %s137, %s138
      %p152 = scmp.eq.s32.totalorder %s18, 1
      %p153 = por %p151, %p152
      %p155 = scmp.ne.s32.totalorder %s138, %s154
      %p156 = scmp.eq.s32.totalorder %s18, 0
      %p157 = por %p155, %p156
      %s158 = ssub.s32 %s19, %s31
      %s159 = ssub.s32 %s20, %s27
      %s160 = sor.u32 %s158, %s159
      %p161 = scmp.eq.s32.totalorder %s160, 0
      %s163 = sadd.s32 %s162, 1
      %s164 = scalar_select %p161, %s162, %s163
      %p167 = pneg %p161
      %p168 = scmp.eq.s32.totalorder %s12, 1
      %p169 = por %p167, %p168
      %p170 = scmp.ne.s32.totalorder %s162, %s165
      %p171 = scmp.eq.s32.totalorder %s12, 0
      %p172 = por %p170, %p171
      %p173 = scmp.ne.s32.totalorder %s162, %s165
      %p174 = scmp.eq.s32.totalorder %s17, 1
      %p175 = por %p173, %p174
      %p176 = scmp.ne.s32.totalorder %s165, %s166
      %p177 = scmp.eq.s32.totalorder %s17, 0
      %p178 = por %p176, %p177
      %p179 = scmp.ne.s32.totalorder %s165, %s166
      %p180 = scmp.eq.s32.totalorder %s18, 1
      %p181 = por %p179, %p180
      %p183 = scmp.ne.s32.totalorder %s166, %s182
      %p184 = scmp.eq.s32.totalorder %s18, 0
      %p185 = por %p183, %p184
      %p186 = scmp.le.s32.totalorder 1, %s12
      %p187 = scmp.lt.s32.totalorder %s12, 3
      %p188 = pnand %p186, %p187
      %p189 = pneg %p188
      // Predicated region
      $region9: #{_lambda_.4} parent=5 // pred_check
        _
      $region10: #{_lambda_.4} parent=5 // pred_check_branch
        %191 = sbr.rel (%p188) target = $region12
      $region11: #{_lambda_.4} parent=5 // pred_region
        %s192 = ssub.s32 %s12, 1
        // Predicated region
        $region13: #{_lambda_.4} parent=11 // pred_check
          %p193 = pneg %p73
        $region14: #{_lambda_.4} parent=11 // pred_check_branch
          %195 = sbr.rel (%p193) target = $region16
        $region15: #{_lambda_.4} parent=11 // pred_region
          _
        $region16: #{_lambda_.4} parent=11 // pred_fallthru
          _
        // Predicated region
        $region17: #{_lambda_.4} parent=11 // pred_check
          %p196 = pneg %p94
        $region18: #{_lambda_.4} parent=11 // pred_check_branch
          %198 = sbr.rel (%p196) target = $region20
        $region19: #{_lambda_.4} parent=11 // pred_region
          _
        $region20: #{_lambda_.4} parent=11 // pred_fallthru
          _
      $region12: #{_lambda_.4} parent=5 // pred_fallthru
        _
      %p199 = scmp.lt.s32.totalorder %s12, 2
      // Predicated region
      $region21: #{_lambda_.4} parent=5 // pred_check
        %p200 = pneg %p199
      $region22: #{_lambda_.4} parent=5 // pred_check_branch
        %202 = sbr.rel (%p200) target = $region24
      $region23: #{_lambda_.4} parent=5 // pred_region
        // Predicated region
        $region25: #{_lambda_.4} parent=23 // pred_check
          %p203 = pneg %p46
        $region26: #{_lambda_.4} parent=23 // pred_check_branch
          %205 = sbr.rel (%p203) target = $region28
        $region27: #{_lambda_.4} parent=23 // pred_region
          %p206 = scmp.lt.s32.totalorder %s19, 1
          %s207 = scalar_select %p206, %s19, 1
          %p208 = scmp.lt.s32.totalorder %s20, 0
          %s209 = scalar_select %p208, %s20, 0
          %s210 = sadd.s32 %s209, %s207
          %s211 = smul.addr %s210, 8
          %s212 = scalar_lea.vmem %s0, %s211
        $region28: #{_lambda_.4} parent=23 // pred_fallthru
          _
      $region24: #{_lambda_.4} parent=5 // pred_fallthru
        _
      %p213 = scmp.le.s32.totalorder 1, %s12
      %p214 = scmp.lt.s32.totalorder %s12, 3
      %p215 = pnand %p213, %p214
      %p216 = pneg %p215
      // Predicated region
      $region29: #{_lambda_.4} parent=5 // pred_check
        _
      $region30: #{_lambda_.4} parent=5 // pred_check_branch
        %218 = sbr.rel (%p215) target = $region32
      $region31: #{_lambda_.4} parent=5 // pred_region
        %s219 = ssub.s32 %s12, 1
        %p220 = scmp.lt.s32.totalorder %s21, 1
        %s221 = scalar_select %p220, %s21, 1
        %p222 = scmp.lt.s32.totalorder %s22, 0
        %s223 = scalar_select %p222, %s22, 0
        %s224 = sadd.s32 %s223, %s221
        %s225 = smul.addr %s224, 8
        %s226 = scalar_lea.vmem %s0, %s225
        %p227 = pneg %p52
        %p228 = pneg %p49
        %p229 = pneg %p73
        %p230 = pneg %p70
        %p231 = pneg %p94
        %p232 = pneg %p91
        %p233 = pneg %p122
        %p234 = pneg %p119
        %s235 = sand.u32 %s109, 1
        %s236 = sand.u32 %s109, 1
        %s237 = smul.addr %s236, 8
        %s238 = scalar_lea.vmem [#allocation2], %s237
        %p239 = pneg %p150
        %p240 = pneg %p147
        %s241 = sand.u32 %s137, 1
        %s242 = sand.u32 %s137, 1
        %s243 = smul.addr %s242, 8
        %s244 = scalar_lea.vmem [#allocation3], %s243
        %p245 = pneg %p178
        %p246 = pneg %p175
        %s247 = sand.u32 %s165, 1
        %s248 = sand.u32 %s165, 1
        %s249 = smul.addr %s248, 8
        %s250 = scalar_lea.vmem [#allocation4], %s249
        %p251 = scmp.lt.s32.totalorder %s21, 1
        %s252 = scalar_select %p251, %s21, 1
        %p253 = scmp.lt.s32.totalorder %s22, 0
        %s254 = scalar_select %p253, %s22, 0
        %s255 = sadd.s32 %s254, %s252
        %s256 = smul.addr %s255, 8
        %s257 = scalar_lea.vmem %s0, %s256
        %v259 = vld [vmem:[%s257] sm:$0xff]
        %v260 = vpack.c.bf16 %v259, %v259
        %v261 = vld [vmem:[%s1] sm:$0xf]
        %v262 = vld [vmem:[%s1 + $0x4] sm:$0xf]
        %v263 = vld [vmem:[%s1 + $0x8] sm:$0xf]
        %v264 = vld [vmem:[%s1 + $0xc] sm:$0xf]
        %v265 = vld [vmem:[%s2] sm:$0x1]
        %v267 = vlaneseq
        %v268 = vshrl.u32 %v267, 7
        %v269 = vsub.s32 0, %v268
        %v270 = vrot.slane %v265, %v269
        %v276 = vunpack.c.l.b16 %v261
        %v277 = vunpack.c.l.b16 %v262
        %v278 = vunpack.c.l.b16 %v263
        %v279 = vunpack.c.l.b16 %v264
        %v280 = vpack.c.b16 %v277, %v276
        %v281 = vpack.c.b16 %v279, %v278
        %vm284 = vcmask 261120
        %v286 = vsel %vm284, %v260, 0
        %288 = vmatprep.subr.bf16.mxu0 0
        %289 = vmatpush1.bf16.msra.mxu0 0
        %290 = vmatprep.subr.bf16.mxu0 0
        %291 = vmatpush1.bf16.msra.mxu0 0
        %292 = vmatprep.subr.bf16.mxu0 0
        %293 = vmatpush1.bf16.msra.mxu0 0
        %294 = vmatprep.subr.bf16.mxu0 0
        %295 = vmatpush1.bf16.msra.mxu0 0
        %296 = vmatprep.subr.bf16.mxu0 0
        %297 = vmatpush1.bf16.msra.mxu0 0
        %298 = vmatprep.subr.bf16.mxu0 0
        %299 = vmatpush1.bf16.msra.mxu0 0
        %300 = vmatprep.subr.bf16.mxu0 0
        %301 = vmatpush1.bf16.msra.mxu0 %v281
        %302 = vmatprep.subr.bf16.mxu0 0
        %303 = vmatpush1.bf16.msra.mxu0 %v280
        %304 = vmatprep.subr.bf16.mxu0 0
        %305 = vmatpush2.bf16.msra.mxu0 0
        %306 = vmatprep.subr.bf16.mxu0 0
        %307 = vmatpush2.bf16.msra.mxu0 0
        %308 = vmatprep.subr.bf16.mxu0 0
        %309 = vmatpush2.bf16.msra.mxu0 0
        %310 = vmatprep.subr.bf16.mxu0 0
        %311 = vmatpush2.bf16.msra.mxu0 0
        %312 = vmatprep.subr.bf16.mxu0 0
        %313 = vmatpush2.bf16.msra.mxu0 0
        %314 = vmatprep.subr.bf16.mxu0 0
        %315 = vmatpush2.bf16.msra.mxu0 0
        %316 = vmatprep.subr.bf16.mxu0 0
        %317 = vmatpush2.bf16.msra.mxu0 0
        %318 = vmatprep.subr.bf16.mxu0 0
        %319 = vmatpush2.bf16.msra.mxu0 0
        %320 = vmatprep.mubr.bf16.mxu0 0
        %321 = vmatmul.mubr.bf16.gmra.mxu0 %v286
        %v322 = vpop.f32.mrf.mxu0
        %v323 = vadd.f32 %v270, %v322
        %v324 = vpop.f32.mrf.mxu0
        %v325 = vpop.f32.mrf.mxu0
        %v326 = vpop.f32.mrf.mxu0
        %327 = vdwg.mxu0
        %v328 = vpack.c.bf16 %v323, %v323
        %vm329 = vcmask 125952
        %330 = vst.msk [vmem:[%s238] sm:$0xf] %vm329, %v328
        %v332 = vunpack.c.l.b16 %v328
        %v333 = vpack.c.b16 %v332, %v332
        %334 = vrot.lane.b32.xlu0 %v333, 96
        %v335 = vpop.permute.xlu0 %334
        %337 = vst.msk [vmem:[%s244] sm:$0xf] %vm329, %v335
        %338 = vrot.lane.b32.xlu0 %v333, 64
        %v339 = vpop.permute.xlu0 %338
        %341 = vst.msk [vmem:[%s250] sm:$0xf] %vm329, %v339
        %342 = vrot.lane.b32.xlu0 %v333, 112
        %v343 = vpop.permute.xlu0 %342
        %s345 = scalar_lea.vmem %s238, 4 [#allocation2]
        %346 = vst.msk [vmem:[%s345] sm:$0xf] %vm329, %v343
        %347 = vrot.lane.b32.xlu0 %v333, 80
        %v348 = vpop.permute.xlu0 %347
        %s350 = scalar_lea.vmem %s244, 4 [#allocation3]
        %351 = vst.msk [vmem:[%s350] sm:$0xf] %vm329, %v348
        %352 = vrot.lane.b32.xlu0 %v333, 48
        %v353 = vpop.permute.xlu0 %352
        %s355 = scalar_lea.vmem %s250, 4 [#allocation4]
        %356 = vst.msk [vmem:[%s355] sm:$0xf] %vm329, %v353
        %s357 = sand.u32 %s109, 1
        %s358 = sand.u32 %s109, 1
        %s359 = smul.addr %s358, 8
        %s360 = scalar_lea.vmem [#allocation2], %s359
        %s361 = sand.u32 %s137, 1
        %s362 = sand.u32 %s137, 1
        %s363 = smul.addr %s362, 8
        %s364 = scalar_lea.vmem [#allocation3], %s363
        %s365 = sand.u32 %s165, 1
        %s366 = sand.u32 %s165, 1
        %s367 = smul.addr %s366, 8
        %s368 = scalar_lea.vmem [#allocation4], %s367
        // Predicated region
        $region33: #{_lambda_.4} parent=31 // pred_check
          %p369 = pneg %p119
        $region34: #{_lambda_.4} parent=31 // pred_check_branch
          %371 = sbr.rel (%p369) target = $region36
        $region35: #{_lambda_.4} parent=31 // pred_region
          %s372 = sadd.s32 %s22, %s21
          %s373 = smul.addr %s372, 4
          %s374 = scalar_lea.vmem %s3, %s373
          // Predicated region
          $region37: #{_lambda_.4} parent=35 // pred_check
            _
          $region38: #{_lambda_.4} parent=35 // pred_check_branch
            %376 = sbr.rel (0) target = $region40
          $region39: #{_lambda_.4} parent=35 // pred_region
            // Predicated region
            $region41: #{_lambda_.4} parent=39 // pred_check
              _
            $region42: #{_lambda_.4} parent=39 // pred_check_branch
              %378 = sbr.rel target = $region44
            $region43: #{_lambda_.4} parent=39 // pred_region
              // Predicated region
              $region56: #{_lambda_.4} parent=43 // pred_check
                _
              $region57: #{_lambda_.4} parent=43 // pred_check_branch
                %396 = sbr.rel (0) target = $region59
              $region58: #{_lambda_.4} parent=43 // pred_region
                loop: start=0, step=1, limit=1
                $region60: #{_lambda_.4} parent=58 // loop_pre_header
                  _
                $region61: #{_lambda_.4} parent=58 // loop_header
                  %s398 = sphi 0, %s402
                  %p399 = scmp.ge.s32.totalorder %s398, 1
                  %s403 = sphi %s360, %s360
                  %s404 = sphi %s374, %s374
                $region62: #{_lambda_.4} parent=58 // loop_header_branch
                  %401 = sbr.rel (%p399) target = $region66
                $region63: #{_lambda_.4} parent=58 // loop_body
                  _
                $region64: #{_lambda_.4} parent=58 // loop_footer
                  %s402 = sadd.s32 1, %s398
                $region65: #{_lambda_.4} parent=58 // loop_footer_branch
                  %397 = sbr.rel target = $region61
                $region66: #{_lambda_.4} parent=58 // loop_exit
                  _
                %s406 = ssub.s32 16, 1
                loop: start=0, step=1, limit=1
                $region67: #{_lambda_.4} parent=58 // loop_pre_header
                  _
                $region68: #{_lambda_.4} parent=58 // loop_header
                  %s408 = sphi 0, %s412
                  %p409 = scmp.ge.s32.totalorder %s408, 1
                  %s413 = sphi %s360, %s360
                  %s414 = sphi %s374, %s374
                $region69: #{_lambda_.4} parent=58 // loop_header_branch
                  %411 = sbr.rel (%p409) target = $region73
                $region70: #{_lambda_.4} parent=58 // loop_body
                  %v415 = vld [vmem:[%s413] sm:%s406]
                  %416 = vst [vmem:[%s414] sm:%s406] %v415
                  %v417 = vld [vmem:[%s413 + $0x4] sm:%s406]
                  %418 = vst [vmem:[%s414 + $0x8] sm:%s406] %v417
                $region71: #{_lambda_.4} parent=58 // loop_footer
                  %s412 = sadd.s32 1, %s408
                $region72: #{_lambda_.4} parent=58 // loop_footer_branch
                  %407 = sbr.rel target = $region68
                $region73: #{_lambda_.4} parent=58 // loop_exit
                  _
              $region59: #{_lambda_.4} parent=43 // pred_fallthru
                _
            $region44: #{_lambda_.4} parent=39 // pred_fallthru
              _
            // Predicated region
            $region45: #{_lambda_.4} parent=39 // pred_check
              _
            $region46: #{_lambda_.4} parent=39 // pred_check_branch
              %380 = sbr.rel (0) target = $region48
            $region47: #{_lambda_.4} parent=39 // pred_region
              %s382 = ssub.s32 16, 1
              loop: start=0, step=1, limit=1
              $region49: #{_lambda_.4} parent=47 // loop_pre_header
                _
              $region50: #{_lambda_.4} parent=47 // loop_header
                %s384 = sphi 0, %s388
                %p385 = scmp.ge.s32.totalorder %s384, 1
                %s389 = sphi %s360, %s360
                %s390 = sphi %s374, %s374
              $region51: #{_lambda_.4} parent=47 // loop_header_branch
                %387 = sbr.rel (%p385) target = $region55
              $region52: #{_lambda_.4} parent=47 // loop_body
                %v391 = vld [vmem:[%s389] sm:%s382]
                %392 = vst [vmem:[%s390] sm:%s382] %v391
                %v393 = vld [vmem:[%s389 + $0x4] sm:%s382]
                %394 = vst [vmem:[%s390 + $0x8] sm:%s382] %v393
              $region53: #{_lambda_.4} parent=47 // loop_footer
                %s388 = sadd.s32 1, %s384
              $region54: #{_lambda_.4} parent=47 // loop_footer_branch
                %383 = sbr.rel target = $region50
              $region55: #{_lambda_.4} parent=47 // loop_exit
                _
            $region48: #{_lambda_.4} parent=39 // pred_fallthru
              _
          $region40: #{_lambda_.4} parent=35 // pred_fallthru
            _
          %419 = vnop
        $region36: #{_lambda_.4} parent=31 // pred_fallthru
          _
        // Predicated region
        $region74: #{_lambda_.4} parent=31 // pred_check
          %p420 = pneg %p147
        $region75: #{_lambda_.4} parent=31 // pred_check_branch
          %422 = sbr.rel (%p420) target = $region77
        $region76: #{_lambda_.4} parent=31 // pred_region
          %s423 = sadd.s32 %s22, %s21
          %s424 = smul.addr %s423, 4
          %s425 = scalar_lea.vmem %s4, %s424
          // Predicated region
          $region78: #{_lambda_.4} parent=76 // pred_check
            _
          $region79: #{_lambda_.4} parent=76 // pred_check_branch
            %427 = sbr.rel (0) target = $region81
          $region80: #{_lambda_.4} parent=76 // pred_region
            // Predicated region
            $region82: #{_lambda_.4} parent=80 // pred_check
              _
            $region83: #{_lambda_.4} parent=80 // pred_check_branch
              %429 = sbr.rel target = $region85
            $region84: #{_lambda_.4} parent=80 // pred_region
              // Predicated region
              $region97: #{_lambda_.4} parent=84 // pred_check
                _
              $region98: #{_lambda_.4} parent=84 // pred_check_branch
                %447 = sbr.rel (0) target = $region100
              $region99: #{_lambda_.4} parent=84 // pred_region
                loop: start=0, step=1, limit=1
                $region101: #{_lambda_.4} parent=99 // loop_pre_header
                  _
                $region102: #{_lambda_.4} parent=99 // loop_header
                  %s449 = sphi 0, %s453
                  %p450 = scmp.ge.s32.totalorder %s449, 1
                  %s454 = sphi %s364, %s364
                  %s455 = sphi %s425, %s425
                $region103: #{_lambda_.4} parent=99 // loop_header_branch
                  %452 = sbr.rel (%p450) target = $region107
                $region104: #{_lambda_.4} parent=99 // loop_body
                  _
                $region105: #{_lambda_.4} parent=99 // loop_footer
                  %s453 = sadd.s32 1, %s449
                $region106: #{_lambda_.4} parent=99 // loop_footer_branch
                  %448 = sbr.rel target = $region102
                $region107: #{_lambda_.4} parent=99 // loop_exit
                  _
                %s457 = ssub.s32 16, 1
                loop: start=0, step=1, limit=1
                $region108: #{_lambda_.4} parent=99 // loop_pre_header
                  _
                $region109: #{_lambda_.4} parent=99 // loop_header
                  %s459 = sphi 0, %s463
                  %p460 = scmp.ge.s32.totalorder %s459, 1
                  %s464 = sphi %s364, %s364
                  %s465 = sphi %s425, %s425
                $region110: #{_lambda_.4} parent=99 // loop_header_branch
                  %462 = sbr.rel (%p460) target = $region114
                $region111: #{_lambda_.4} parent=99 // loop_body
                  %v466 = vld [vmem:[%s464] sm:%s457]
                  %467 = vst [vmem:[%s465] sm:%s457] %v466
                  %v468 = vld [vmem:[%s464 + $0x4] sm:%s457]
                  %469 = vst [vmem:[%s465 + $0x8] sm:%s457] %v468
                $region112: #{_lambda_.4} parent=99 // loop_footer
                  %s463 = sadd.s32 1, %s459
                $region113: #{_lambda_.4} parent=99 // loop_footer_branch
                  %458 = sbr.rel target = $region109
                $region114: #{_lambda_.4} parent=99 // loop_exit
                  _
              $region100: #{_lambda_.4} parent=84 // pred_fallthru
                _
            $region85: #{_lambda_.4} parent=80 // pred_fallthru
              _
            // Predicated region
            $region86: #{_lambda_.4} parent=80 // pred_check
              _
            $region87: #{_lambda_.4} parent=80 // pred_check_branch
              %431 = sbr.rel (0) target = $region89
            $region88: #{_lambda_.4} parent=80 // pred_region
              %s433 = ssub.s32 16, 1
              loop: start=0, step=1, limit=1
              $region90: #{_lambda_.4} parent=88 // loop_pre_header
                _
              $region91: #{_lambda_.4} parent=88 // loop_header
                %s435 = sphi 0, %s439
                %p436 = scmp.ge.s32.totalorder %s435, 1
                %s440 = sphi %s364, %s364
                %s441 = sphi %s425, %s425
              $region92: #{_lambda_.4} parent=88 // loop_header_branch
                %438 = sbr.rel (%p436) target = $region96
              $region93: #{_lambda_.4} parent=88 // loop_body
                %v442 = vld [vmem:[%s440] sm:%s433]
                %443 = vst [vmem:[%s441] sm:%s433] %v442
                %v444 = vld [vmem:[%s440 + $0x4] sm:%s433]
                %445 = vst [vmem:[%s441 + $0x8] sm:%s433] %v444
              $region94: #{_lambda_.4} parent=88 // loop_footer
                %s439 = sadd.s32 1, %s435
              $region95: #{_lambda_.4} parent=88 // loop_footer_branch
                %434 = sbr.rel target = $region91
              $region96: #{_lambda_.4} parent=88 // loop_exit
                _
            $region89: #{_lambda_.4} parent=80 // pred_fallthru
              _
          $region81: #{_lambda_.4} parent=76 // pred_fallthru
            _
          %470 = vnop
        $region77: #{_lambda_.4} parent=31 // pred_fallthru
          _
        // Predicated region
        $region115: #{_lambda_.4} parent=31 // pred_check
          %p471 = pneg %p175
        $region116: #{_lambda_.4} parent=31 // pred_check_branch
          %473 = sbr.rel (%p471) target = $region118
        $region117: #{_lambda_.4} parent=31 // pred_region
          %s474 = sadd.s32 %s22, %s21
          %s475 = smul.addr %s474, 4
          %s476 = scalar_lea.vmem %s5, %s475
          // Predicated region
          $region119: #{_lambda_.4} parent=117 // pred_check
            _
          $region120: #{_lambda_.4} parent=117 // pred_check_branch
            %478 = sbr.rel (0) target = $region122
          $region121: #{_lambda_.4} parent=117 // pred_region
            // Predicated region
            $region123: #{_lambda_.4} parent=121 // pred_check
              _
            $region124: #{_lambda_.4} parent=121 // pred_check_branch
              %480 = sbr.rel target = $region126
            $region125: #{_lambda_.4} parent=121 // pred_region
              // Predicated region
              $region138: #{_lambda_.4} parent=125 // pred_check
                _
              $region139: #{_lambda_.4} parent=125 // pred_check_branch
                %498 = sbr.rel (0) target = $region141
              $region140: #{_lambda_.4} parent=125 // pred_region
                loop: start=0, step=1, limit=1
                $region142: #{_lambda_.4} parent=140 // loop_pre_header
                  _
                $region143: #{_lambda_.4} parent=140 // loop_header
                  %s500 = sphi 0, %s504
                  %p501 = scmp.ge.s32.totalorder %s500, 1
                  %s505 = sphi %s368, %s368
                  %s506 = sphi %s476, %s476
                $region144: #{_lambda_.4} parent=140 // loop_header_branch
                  %503 = sbr.rel (%p501) target = $region148
                $region145: #{_lambda_.4} parent=140 // loop_body
                  _
                $region146: #{_lambda_.4} parent=140 // loop_footer
                  %s504 = sadd.s32 1, %s500
                $region147: #{_lambda_.4} parent=140 // loop_footer_branch
                  %499 = sbr.rel target = $region143
                $region148: #{_lambda_.4} parent=140 // loop_exit
                  _
                %s508 = ssub.s32 16, 1
                loop: start=0, step=1, limit=1
                $region149: #{_lambda_.4} parent=140 // loop_pre_header
                  _
                $region150: #{_lambda_.4} parent=140 // loop_header
                  %s510 = sphi 0, %s514
                  %p511 = scmp.ge.s32.totalorder %s510, 1
                  %s515 = sphi %s368, %s368
                  %s516 = sphi %s476, %s476
                $region151: #{_lambda_.4} parent=140 // loop_header_branch
                  %513 = sbr.rel (%p511) target = $region155
                $region152: #{_lambda_.4} parent=140 // loop_body
                  %v517 = vld [vmem:[%s515] sm:%s508]
                  %518 = vst [vmem:[%s516] sm:%s508] %v517
                  %v519 = vld [vmem:[%s515 + $0x4] sm:%s508]
                  %520 = vst [vmem:[%s516 + $0x8] sm:%s508] %v519
                $region153: #{_lambda_.4} parent=140 // loop_footer
                  %s514 = sadd.s32 1, %s510
                $region154: #{_lambda_.4} parent=140 // loop_footer_branch
                  %509 = sbr.rel target = $region150
                $region155: #{_lambda_.4} parent=140 // loop_exit
                  _
              $region141: #{_lambda_.4} parent=125 // pred_fallthru
                _
            $region126: #{_lambda_.4} parent=121 // pred_fallthru
              _
            // Predicated region
            $region127: #{_lambda_.4} parent=121 // pred_check
              _
            $region128: #{_lambda_.4} parent=121 // pred_check_branch
              %482 = sbr.rel (0) target = $region130
            $region129: #{_lambda_.4} parent=121 // pred_region
              %s484 = ssub.s32 16, 1
              loop: start=0, step=1, limit=1
              $region131: #{_lambda_.4} parent=129 // loop_pre_header
                _
              $region132: #{_lambda_.4} parent=129 // loop_header
                %s486 = sphi 0, %s490
                %p487 = scmp.ge.s32.totalorder %s486, 1
                %s491 = sphi %s368, %s368
                %s492 = sphi %s476, %s476
              $region133: #{_lambda_.4} parent=129 // loop_header_branch
                %489 = sbr.rel (%p487) target = $region137
              $region134: #{_lambda_.4} parent=129 // loop_body
                %v493 = vld [vmem:[%s491] sm:%s484]
                %494 = vst [vmem:[%s492] sm:%s484] %v493
                %v495 = vld [vmem:[%s491 + $0x4] sm:%s484]
                %496 = vst [vmem:[%s492 + $0x8] sm:%s484] %v495
              $region135: #{_lambda_.4} parent=129 // loop_footer
                %s490 = sadd.s32 1, %s486
              $region136: #{_lambda_.4} parent=129 // loop_footer_branch
                %485 = sbr.rel target = $region132
              $region137: #{_lambda_.4} parent=129 // loop_exit
                _
            $region130: #{_lambda_.4} parent=121 // pred_fallthru
              _
          $region122: #{_lambda_.4} parent=117 // pred_fallthru
            _
          %521 = vnop
        $region118: #{_lambda_.4} parent=31 // pred_fallthru
          _
      $region32: #{_lambda_.4} parent=5 // pred_fallthru
        _
      %p522 = scmp.le.s32.totalorder 2, %s12
      // Predicated region
      $region156: #{_lambda_.4} parent=5 // pred_check
        %p523 = pneg %p522
      $region157: #{_lambda_.4} parent=5 // pred_check_branch
        %525 = sbr.rel (%p523) target = $region159
      $region158: #{_lambda_.4} parent=5 // pred_region
        %s526 = ssub.s32 %s12, 2
        // Predicated region
        $region160: #{_lambda_.4} parent=158 // pred_check
          %p527 = pneg %p125
        $region161: #{_lambda_.4} parent=158 // pred_check_branch
          %529 = sbr.rel (%p527) target = $region163
        $region162: #{_lambda_.4} parent=158 // pred_region
          %s530 = sand.u32 %s110, 1
          %s531 = sand.u32 %s110, 1
          %s532 = smul.addr %s531, 8
          %s533 = scalar_lea.vmem [#allocation2], %s532
        $region163: #{_lambda_.4} parent=158 // pred_fallthru
          _
        // Predicated region
        $region164: #{_lambda_.4} parent=158 // pred_check
          %p534 = pneg %p153
        $region165: #{_lambda_.4} parent=158 // pred_check_branch
          %536 = sbr.rel (%p534) target = $region167
        $region166: #{_lambda_.4} parent=158 // pred_region
          %s537 = sand.u32 %s138, 1
          %s538 = sand.u32 %s138, 1
          %s539 = smul.addr %s538, 8
          %s540 = scalar_lea.vmem [#allocation3], %s539
        $region167: #{_lambda_.4} parent=158 // pred_fallthru
          _
        // Predicated region
        $region168: #{_lambda_.4} parent=158 // pred_check
          %p541 = pneg %p181
        $region169: #{_lambda_.4} parent=158 // pred_check_branch
          %543 = sbr.rel (%p541) target = $region171
        $region170: #{_lambda_.4} parent=158 // pred_region
          %s544 = sand.u32 %s166, 1
          %s545 = sand.u32 %s166, 1
          %s546 = smul.addr %s545, 8
          %s547 = scalar_lea.vmem [#allocation4], %s546
        $region171: #{_lambda_.4} parent=158 // pred_fallthru
          _
      $region159: #{_lambda_.4} parent=5 // pred_fallthru
        _
    $region6: #{_lambda_.4} parent=1 // loop_footer
      %s16 = sadd.s32 1, %s12
    $region7: #{_lambda_.4} parent=1 // loop_footer_branch
      %11 = sbr.rel target = $region3
    $region8: #{_lambda_.4} parent=1 // loop_exit
      _

// kernel: _lambda_.5
$region0: #{_lambda_.5}
  #allocation0 [shape = 'u32[]', space=smem, size = 0x4, offset = 0x4, fixed_abs, tag = 'smem constant byte address 0x4 - core index']
  #allocation1 [shape = 'u32[144,128]{1,0:T(1,128)}', space=vmem, size = 0x12000, scoped, tag = 'internal scratch']
  %s0 = inlined_call_operand.vmem [shape: bf16[2,2,8,16], index: 0, kind: input, shape index: {}]
  %s1 = inlined_call_operand.vmem [shape: bf16[2,2,8,16], index: 1, kind: input, shape index: {}]
  %s2 = inlined_call_operand.vmem [shape: bf16[2,2,8,16], index: 2, kind: input, shape index: {}]
  %s3 = inlined_call_operand.vmem [shape: f32[2,8,8], index: 3, kind: input, shape index: {}]
  %s4 = inlined_call_operand.vmem [shape: bf16[2,2,8,16], index: 4, kind: output, shape index: {0}]
  %s5 = inlined_call_operand.hbm [shape: f32[2,2,8,8], index: 5, kind: output, shape index: {1}]
  %6 = xla_tuple %s4, %s5
  %s7 = sld [smem:[#allocation0]]
  $region57: #{_lambda_.5} parent=0
    _
  %s9 = ssub.s32 1, %s7
  %s10 = scalar_select 0, %s9, %s7
  $region1: #{_lambda_.5} parent=0
    #allocation2 [shape = 'u8[8192]{0}', space=vmem, size = 0x2000, scoped, tag = 'output window, operand 1']
    #allocation3 [shape = 's32[2]{0}', space=sflag, size = 0x8, scoped, tag = 'scoped memory for _lambda_.5']
    %11 = vsyncpa [#allocation3], 0
    %s12 = scalar_lea.sflag [#allocation3], 1
    %13 = vsyncpa %s12, 0
    loop: start=0, step=1, limit=6
    $region2: #{_lambda_.5} parent=1 // loop_pre_header
      _
    $region3: #{_lambda_.5} parent=1 // loop_header
      %s15 = sphi 0, %s19
      %p16 = scmp.ge.s32.totalorder %s15, 6
      %s22 = sphi 0, %s34
      %s23 = sphi 0, %s30
      %s24 = sphi 0, %s22
      %s25 = sphi 0, %s23
      %s26 = sphi 0, %s24
      %s27 = sphi 0, %s25
      %s39 = sphi 0, %s41
      %s42 = sphi 0, %s39
      %s43 = sphi 0, %s42
      %s59 = sphi 0, %s43
      %s67 = sphi 0, %s69
      %s70 = sphi 0, %s67
      %s71 = sphi 0, %s70
      %s87 = sphi 0, %s71
      %s95 = sphi 0, %s97
      %s98 = sphi 0, %s95
      %s99 = sphi 0, %s98
      %s115 = sphi 0, %s99
      %s121 = sphi 0, %s123
      %s124 = sphi 0, %s121
      %s125 = sphi 0, %s124
      %s141 = sphi 0, %s125
      %s149 = sphi 0, %s151
      %s152 = sphi 0, %s149
      %s153 = sphi 0, %s152
      %s169 = sphi 0, %s153
      %s177 = sphi 0, %s179
      %s180 = sphi 0, %s177
      %s181 = sphi 0, %s180
      %s197 = sphi 0, %s181
    $region4: #{_lambda_.5} parent=1 // loop_header_branch
      %18 = sbr.rel (%p16) target = $region8
    $region5: #{_lambda_.5} parent=1 // loop_body
      %s20 = ssub.s32 %s15, 1
      %s21 = ssub.s32 %s15, 2
      %s28 = sadd.s32 1, %s23
      %p29 = scmp.ge.s32.totalorder %s28, 2
      %s30 = scalar_select %p29, 0, %s28
      %s31 = sadd.s32 1, %s22
      %s32 = scalar_select %p29, %s31, %s22
      %p33 = scmp.ge.s32.totalorder %s32, 2
      %s34 = scalar_select %p33, 0, %s32
      %s35 = ssub.s32 %s23, %s30
      %s36 = ssub.s32 %s22, %s34
      %s37 = sor.u32 %s35, %s36
      %p38 = scmp.eq.s32.totalorder %s37, 0
      %s40 = sadd.s32 %s39, 1
      %s41 = scalar_select %p38, %s39, %s40
      %p44 = pneg %p38
      %p45 = scmp.eq.s32.totalorder %s15, 3
      %p46 = por %p44, %p45
      %p47 = scmp.ne.s32.totalorder %s39, %s42
      %p48 = scmp.eq.s32.totalorder %s15, 0
      %p49 = por %p47, %p48
      %p50 = scmp.ne.s32.totalorder %s39, %s42
      %p51 = scmp.eq.s32.totalorder %s20, 3
      %p52 = por %p50, %p51
      %p53 = scmp.ne.s32.totalorder %s42, %s43
      %p54 = scmp.eq.s32.totalorder %s20, 0
      %p55 = por %p53, %p54
      %p56 = scmp.ne.s32.totalorder %s42, %s43
      %p57 = scmp.eq.s32.totalorder %s21, 3
      %p58 = por %p56, %p57
      %p60 = scmp.ne.s32.totalorder %s43, %s59
      %p61 = scmp.eq.s32.totalorder %s21, 0
      %p62 = por %p60, %p61
      %s63 = ssub.s32 %s23, %s30
      %s64 = ssub.s32 %s22, %s34
      %s65 = sor.u32 %s63, %s64
      %p66 = scmp.eq.s32.totalorder %s65, 0
      %s68 = sadd.s32 %s67, 1
      %s69 = scalar_select %p66, %s67, %s68
      %p72 = pneg %p66
      %p73 = scmp.eq.s32.totalorder %s15, 3
      %p74 = por %p72, %p73
      %p75 = scmp.ne.s32.totalorder %s67, %s70
      %p76 = scmp.eq.s32.totalorder %s15, 0
      %p77 = por %p75, %p76
      %p78 = scmp.ne.s32.totalorder %s67, %s70
      %p79 = scmp.eq.s32.totalorder %s20, 3
      %p80 = por %p78, %p79
      %p81 = scmp.ne.s32.totalorder %s70, %s71
      %p82 = scmp.eq.s32.totalorder %s20, 0
      %p83 = por %p81, %p82
      %p84 = scmp.ne.s32.totalorder %s70, %s71
      %p85 = scmp.eq.s32.totalorder %s21, 3
      %p86 = por %p84, %p85
      %p88 = scmp.ne.s32.totalorder %s71, %s87
      %p89 = scmp.eq.s32.totalorder %s21, 0
      %p90 = por %p88, %p89
      %s91 = ssub.s32 %s23, %s30
      %s92 = ssub.s32 %s22, %s34
      %s93 = sor.u32 %s91, %s92
      %p94 = scmp.eq.s32.totalorder %s93, 0
      %s96 = sadd.s32 %s95, 1
      %s97 = scalar_select %p94, %s95, %s96
      %p100 = pneg %p94
      %p101 = scmp.eq.s32.totalorder %s15, 3
      %p102 = por %p100, %p101
      %p103 = scmp.ne.s32.totalorder %s95, %s98
      %p104 = scmp.eq.s32.totalorder %s15, 0
      %p105 = por %p103, %p104
      %p106 = scmp.ne.s32.totalorder %s95, %s98
      %p107 = scmp.eq.s32.totalorder %s20, 3
      %p108 = por %p106, %p107
      %p109 = scmp.ne.s32.totalorder %s98, %s99
      %p110 = scmp.eq.s32.totalorder %s20, 0
      %p111 = por %p109, %p110
      %p112 = scmp.ne.s32.totalorder %s98, %s99
      %p113 = scmp.eq.s32.totalorder %s21, 3
      %p114 = por %p112, %p113
      %p116 = scmp.ne.s32.totalorder %s99, %s115
      %p117 = scmp.eq.s32.totalorder %s21, 0
      %p118 = por %p116, %p117
      %s119 = ssub.s32 %s22, %s34
      %p120 = scmp.eq.s32.totalorder %s119, 0
      %s122 = sadd.s32 %s121, 1
      %s123 = scalar_select %p120, %s121, %s122
      %p126 = pneg %p120
      %p127 = scmp.eq.s32.totalorder %s15, 3
      %p128 = por %p126, %p127
      %p129 = scmp.ne.s32.totalorder %s121, %s124
      %p130 = scmp.eq.s32.totalorder %s15, 0
      %p131 = por %p129, %p130
      %p132 = scmp.ne.s32.totalorder %s121, %s124
      %p133 = scmp.eq.s32.totalorder %s20, 3
      %p134 = por %p132, %p133
      %p135 = scmp.ne.s32.totalorder %s124, %s125
      %p136 = scmp.eq.s32.totalorder %s20, 0
      %p137 = por %p135, %p136
      %p138 = scmp.ne.s32.totalorder %s124, %s125
      %p139 = scmp.eq.s32.totalorder %s21, 3
      %p140 = por %p138, %p139
      %p142 = scmp.ne.s32.totalorder %s125, %s141
      %p143 = scmp.eq.s32.totalorder %s21, 0
      %p144 = por %p142, %p143
      %s145 = ssub.s32 %s23, %s30
      %s146 = ssub.s32 %s22, %s34
      %s147 = sor.u32 %s145, %s146
      %p148 = scmp.eq.s32.totalorder %s147, 0
      %s150 = sadd.s32 %s149, 1
      %s151 = scalar_select %p148, %s149, %s150
      %p154 = pneg %p148
      %p155 = scmp.eq.s32.totalorder %s15, 3
      %p156 = por %p154, %p155
      %p157 = scmp.ne.s32.totalorder %s149, %s152
      %p158 = scmp.eq.s32.totalorder %s15, 0
      %p159 = por %p157, %p158
      %p160 = scmp.ne.s32.totalorder %s149, %s152
      %p161 = scmp.eq.s32.totalorder %s20, 3
      %p162 = por %p160, %p161
      %p163 = scmp.ne.s32.totalorder %s152, %s153
      %p164 = scmp.eq.s32.totalorder %s20, 0
      %p165 = por %p163, %p164
      %p166 = scmp.ne.s32.totalorder %s152, %s153
      %p167 = scmp.eq.s32.totalorder %s21, 3
      %p168 = por %p166, %p167
      %p170 = scmp.ne.s32.totalorder %s153, %s169
      %p171 = scmp.eq.s32.totalorder %s21, 0
      %p172 = por %p170, %p171
      %s173 = ssub.s32 %s23, %s30
      %s174 = ssub.s32 %s22, %s34
      %s175 = sor.u32 %s173, %s174
      %p176 = scmp.eq.s32.totalorder %s175, 0
      %s178 = sadd.s32 %s177, 1
      %s179 = scalar_select %p176, %s177, %s178
      %p182 = pneg %p176
      %p183 = scmp.eq.s32.totalorder %s15, 3
      %p184 = por %p182, %p183
      %p185 = scmp.ne.s32.totalorder %s177, %s180
      %p186 = scmp.eq.s32.totalorder %s15, 0
      %p187 = por %p185, %p186
      %p188 = scmp.ne.s32.totalorder %s177, %s180
      %p189 = scmp.eq.s32.totalorder %s20, 3
      %p190 = por %p188, %p189
      %p191 = scmp.ne.s32.totalorder %s180, %s181
      %p192 = scmp.eq.s32.totalorder %s20, 0
      %p193 = por %p191, %p192
      %p194 = scmp.ne.s32.totalorder %s180, %s181
      %p195 = scmp.eq.s32.totalorder %s21, 3
      %p196 = por %p194, %p195
      %p198 = scmp.ne.s32.totalorder %s181, %s197
      %p199 = scmp.eq.s32.totalorder %s21, 0
      %p200 = por %p198, %p199
      %p201 = scmp.le.s32.totalorder 1, %s15
      %p202 = scmp.lt.s32.totalorder %s15, 5
      %p203 = pnand %p201, %p202
      %p204 = pneg %p203
      // Predicated region
      $region9: #{_lambda_.5} parent=5 // pred_check
        _
      $region10: #{_lambda_.5} parent=5 // pred_check_branch
        %206 = sbr.rel (%p203) target = $region12
      $region11: #{_lambda_.5} parent=5 // pred_region
        %s207 = ssub.s32 %s15, 1
      $region12: #{_lambda_.5} parent=5 // pred_fallthru
        _
      %p208 = scmp.lt.s32.totalorder %s15, 4
      // Predicated region
      $region13: #{_lambda_.5} parent=5 // pred_check
        %p209 = pneg %p208
      $region14: #{_lambda_.5} parent=5 // pred_check_branch
        %211 = sbr.rel (%p209) target = $region16
      $region15: #{_lambda_.5} parent=5 // pred_region
        // Predicated region
        $region17: #{_lambda_.5} parent=15 // pred_check
          %p212 = pneg %p49
        $region18: #{_lambda_.5} parent=15 // pred_check_branch
          %214 = sbr.rel (%p212) target = $region20
        $region19: #{_lambda_.5} parent=15 // pred_region
          %p215 = scmp.lt.s32.totalorder %s23, 1
          %s216 = scalar_select %p215, %s23, 1
          %p217 = scmp.lt.s32.totalorder %s22, 1
          %s218 = scalar_select %p217, %s22, 1
          %s219 = smul.addr %s216, 2
          %s220 = sadd.s32 %s218, %s219
          %s221 = smul.addr %s220, 4
          %s222 = scalar_lea.vmem %s0, %s221
        $region20: #{_lambda_.5} parent=15 // pred_fallthru
          _
        // Predicated region
        $region21: #{_lambda_.5} parent=15 // pred_check
          %p223 = pneg %p77
        $region22: #{_lambda_.5} parent=15 // pred_check_branch
          %225 = sbr.rel (%p223) target = $region24
        $region23: #{_lambda_.5} parent=15 // pred_region
          %p226 = scmp.lt.s32.totalorder %s23, 1
          %s227 = scalar_select %p226, %s23, 1
          %p228 = scmp.lt.s32.totalorder %s22, 1
          %s229 = scalar_select %p228, %s22, 1
          %s230 = smul.addr %s227, 2
          %s231 = sadd.s32 %s229, %s230
          %s232 = smul.addr %s231, 4
          %s233 = scalar_lea.vmem %s1, %s232
        $region24: #{_lambda_.5} parent=15 // pred_fallthru
          _
        // Predicated region
        $region25: #{_lambda_.5} parent=15 // pred_check
          %p234 = pneg %p105
        $region26: #{_lambda_.5} parent=15 // pred_check_branch
          %236 = sbr.rel (%p234) target = $region28
        $region27: #{_lambda_.5} parent=15 // pred_region
          %p237 = scmp.lt.s32.totalorder %s23, 1
          %s238 = scalar_select %p237, %s23, 1
          %p239 = scmp.lt.s32.totalorder %s22, 1
          %s240 = scalar_select %p239, %s22, 1
          %s241 = smul.addr %s238, 2
          %s242 = sadd.s32 %s240, %s241
          %s243 = smul.addr %s242, 4
          %s244 = scalar_lea.vmem %s2, %s243
        $region28: #{_lambda_.5} parent=15 // pred_fallthru
          _
        // Predicated region
        $region29: #{_lambda_.5} parent=15 // pred_check
          %p245 = pneg %p131
        $region30: #{_lambda_.5} parent=15 // pred_check_branch
          %247 = sbr.rel (%p245) target = $region32
        $region31: #{_lambda_.5} parent=15 // pred_region
          %p248 = scmp.lt.s32.totalorder %s22, 1
          %s249 = scalar_select %p248, %s22, 1
          %s250 = smul.addr %s249, 8
          %s251 = scalar_lea.vmem %s3, %s250
        $region32: #{_lambda_.5} parent=15 // pred_fallthru
          _
      $region16: #{_lambda_.5} parent=5 // pred_fallthru
        _
      %p252 = scmp.le.s32.totalorder 1, %s15
      %p253 = scmp.lt.s32.totalorder %s15, 5
      %p254 = pnand %p252, %p253
      %p255 = pneg %p254
      // Predicated region
      $region33: #{_lambda_.5} parent=5 // pred_check
        _
      $region34: #{_lambda_.5} parent=5 // pred_check_branch
        %257 = sbr.rel (%p254) target = $region36
      $region35: #{_lambda_.5} parent=5 // pred_region
        %s258 = ssub.s32 %s15, 1
        %p259 = scmp.lt.s32.totalorder %s25, 1
        %s260 = scalar_select %p259, %s25, 1
        %p261 = scmp.lt.s32.totalorder %s24, 1
        %s262 = scalar_select %p261, %s24, 1
        %s263 = smul.addr %s260, 2
        %s264 = sadd.s32 %s262, %s263
        %s265 = smul.addr %s264, 4
        %s266 = scalar_lea.vmem %s0, %s265
        %p267 = pneg %p55
        %p268 = pneg %p52
        %p269 = scmp.lt.s32.totalorder %s25, 1
        %s270 = scalar_select %p269, %s25, 1
        %p271 = scmp.lt.s32.totalorder %s24, 1
        %s272 = scalar_select %p271, %s24, 1
        %s273 = smul.addr %s270, 2
        %s274 = sadd.s32 %s272, %s273
        %s275 = smul.addr %s274, 4
        %s276 = scalar_lea.vmem %s1, %s275
        %p277 = pneg %p83
        %p278 = pneg %p80
        %p279 = scmp.lt.s32.totalorder %s25, 1
        %s280 = scalar_select %p279, %s25, 1
        %p281 = scmp.lt.s32.totalorder %s24, 1
        %s282 = scalar_select %p281, %s24, 1
        %s283 = smul.addr %s280, 2
        %s284 = sadd.s32 %s282, %s283
        %s285 = smul.addr %s284, 4
        %s286 = scalar_lea.vmem %s2, %s285
        %p287 = pneg %p111
        %p288 = pneg %p108
        %p289 = scmp.lt.s32.totalorder %s24, 1
        %s290 = scalar_select %p289, %s24, 1
        %s291 = smul.addr %s290, 8
        %s292 = scalar_lea.vmem %s3, %s291
        %p293 = pneg %p137
        %p294 = pneg %p134
        %p295 = pneg %p165
        %p296 = pneg %p162
        %p297 = scmp.lt.s32.totalorder %s25, 1
        %s298 = scalar_select %p297, %s25, 1
        %p299 = scmp.lt.s32.totalorder %s24, 1
        %s300 = scalar_select %p299, %s24, 1
        %s301 = smul.addr %s298, 2
        %s302 = sadd.s32 %s300, %s301
        %s303 = smul.addr %s302, 4
        %s304 = scalar_lea.vmem %s4, %s303
        %p305 = pneg %p193
        %p306 = pneg %p190
        %s307 = sand.u32 %s180, 1
        %s308 = scalar_lea.sflag [#allocation3], %s307
        %s309 = sand.u32 %s180, 1
        %s310 = smul.addr %s309, 8
        %s311 = scalar_lea.vmem [#allocation2], %s310
        %p312 = scmp.lt.s32.totalorder %s25, 1
        %s313 = scalar_select %p312, %s25, 1
        %p314 = scmp.lt.s32.totalorder %s24, 1
        %s315 = scalar_select %p314, %s24, 1
        %s316 = smul.addr %s313, 2
        %s317 = sadd.s32 %s315, %s316
        %s318 = smul.addr %s317, 4
        %s319 = scalar_lea.vmem %s0, %s318
        %p320 = scmp.lt.s32.totalorder %s25, 1
        %s321 = scalar_select %p320, %s25, 1
        %p322 = scmp.lt.s32.totalorder %s24, 1
        %s323 = scalar_select %p322, %s24, 1
        %s324 = smul.addr %s321, 2
        %s325 = sadd.s32 %s323, %s324
        %s326 = smul.addr %s325, 4
        %s327 = scalar_lea.vmem %s1, %s326
        %p328 = scmp.lt.s32.totalorder %s25, 1
        %s329 = scalar_select %p328, %s25, 1
        %p330 = scmp.lt.s32.totalorder %s24, 1
        %s331 = scalar_select %p330, %s24, 1
        %s332 = smul.addr %s329, 2
        %s333 = sadd.s32 %s331, %s332
        %s334 = smul.addr %s333, 4
        %s335 = scalar_lea.vmem %s2, %s334
        %p336 = scmp.lt.s32.totalorder %s24, 1
        %s337 = scalar_select %p336, %s24, 1
        %s338 = smul.addr %s337, 8
        %s339 = scalar_lea.vmem %s3, %s338
        %p340 = scmp.lt.s32.totalorder %s25, 1
        %s341 = scalar_select %p340, %s25, 1
        %p342 = scmp.lt.s32.totalorder %s24, 1
        %s343 = scalar_select %p342, %s24, 1
        %s344 = smul.addr %s341, 2
        %s345 = sadd.s32 %s343, %s344
        %s346 = smul.addr %s345, 4
        %s347 = scalar_lea.vmem %s4, %s346
        %v349 = vld [vmem:[%s319] sm:$0xf]
        %v350 = vld [vmem:[%s327] sm:$0xf]
        %v351 = vld [vmem:[%s335] sm:$0xf]
        %v352 = vld [vmem:[%s339] sm:$0xff]
        %vm353 = vcmask 130048
        %v355 = vsel %vm353, %v349, 0
        %v358 = vsel %vm353, %v350, 0
        %360 = vmatprep.subr.bf16.mxu0 0
        %361 = vmatpush1.bf16.xpose.msra.mxu0 0
        %362 = vmatprep.subr.bf16.mxu0 0
        %363 = vmatpush1.bf16.xpose.msra.mxu0 0
        %364 = vmatprep.subr.bf16.mxu0 0
        %365 = vmatpush1.bf16.xpose.msra.mxu0 0
        %366 = vmatprep.subr.bf16.mxu0 0
        %367 = vmatpush1.bf16.xpose.msra.mxu0 0
        %368 = vmatprep.subr.bf16.mxu0 0
        %369 = vmatpush1.bf16.xpose.msra.mxu0 0
        %370 = vmatprep.subr.bf16.mxu0 0
        %371 = vmatpush1.bf16.xpose.msra.mxu0 0
        %372 = vmatprep.subr.bf16.mxu0 0
        %373 = vmatpush1.bf16.xpose.msra.mxu0 0
        %374 = vmatprep.subr.bf16.mxu0 0
        %375 = vmatpush1.bf16.xpose.msra.mxu0 %v358
        %376 = vmatprep.subr.bf16.mxu0 0
        %377 = vmatpush2.bf16.xpose.msra.mxu0 0
        %378 = vmatprep.subr.bf16.mxu0 0
        %379 = vmatpush2.bf16.xpose.msra.mxu0 0
        %380 = vmatprep.subr.bf16.mxu0 0
        %381 = vmatpush2.bf16.xpose.msra.mxu0 0
        %382 = vmatprep.subr.bf16.mxu0 0
        %383 = vmatpush2.bf16.xpose.msra.mxu0 0
        %384 = vmatprep.subr.bf16.mxu0 0
        %385 = vmatpush2.bf16.xpose.msra.mxu0 0
        %386 = vmatprep.subr.bf16.mxu0 0
        %387 = vmatpush2.bf16.xpose.msra.mxu0 0
        %388 = vmatprep.subr.bf16.mxu0 0
        %389 = vmatpush2.bf16.xpose.msra.mxu0 0
        %390 = vmatprep.subr.bf16.mxu0 0
        %391 = vmatpush2.bf16.xpose.msra.mxu0 0
        %392 = vmatprep.mubr.bf16.mxu0 0
        %393 = vmatmul.mubr.bf16.gmra.mxu0 %v355
        %v394 = vpop.f32.mrf.mxu0
        %v395 = vadd.f32 0.0, %v394
        %v396 = vpop.f32.mrf.mxu0
        %v397 = vpop.f32.mrf.mxu0
        %v398 = vpop.f32.mrf.mxu0
        %399 = vdwg.mxu0
        %vm400 = vcmp.gt.f32.partialorder %v352, 0.0
        %v401 = vsel %vm400, -inf, %v395
        %vm402 = vcmask 64512
        %v403 = vsel %vm402, %v401, -inf
        %404 = vmax.xlane.f32.xlu0 %v403
        %v405 = vpop.xlane.xlu0 %404
        %v406 = vsub.f32 %v401, %v405
        %v407 = vmul.f32 %v406, 1.442695
        %v408 = vpow.pop %v407
        %v409 = vsel %vm402, %v408, 0.0
        %410 = vadd.xlane.f32.xlu0 %v409
        %v411 = vpop.xlane.xlu0 %410
        %v412 = vrcp.pop %v411
        %v413 = vmul.f32 %v408, %v412
        %v414 = vpack.c.bf16 %v413, %v413
        %v416 = vsel %vm402, %v414, 0
        %vm418 = vcmask 1043456
        %v420 = vsel %vm418, %v351, 0
        %422 = vmatprep.subr.bf16.mxu0 0
        %423 = vmatpush1.bf16.msra.mxu0 0
        %424 = vmatprep.subr.bf16.mxu0 0
        %425 = vmatpush1.bf16.msra.mxu0 0
        %426 = vmatprep.subr.bf16.mxu0 0
        %427 = vmatpush1.bf16.msra.mxu0 0
        %428 = vmatprep.subr.bf16.mxu0 0
        %429 = vmatpush1.bf16.msra.mxu0 0
        %430 = vmatprep.subr.bf16.mxu0 0
        %431 = vmatpush1.bf16.msra.mxu0 0
        %432 = vmatprep.subr.bf16.mxu0 0
        %433 = vmatpush1.bf16.msra.mxu0 0
        %434 = vmatprep.subr.bf16.mxu0 0
        %435 = vmatpush1.bf16.msra.mxu0 0
        %436 = vmatprep.subr.bf16.mxu0 0
        %437 = vmatpush1.bf16.msra.mxu0 %v420
        %438 = vmatprep.subr.bf16.mxu0 0
        %439 = vmatpush2.bf16.msra.mxu0 0
        %440 = vmatprep.subr.bf16.mxu0 0
        %441 = vmatpush2.bf16.msra.mxu0 0
        %442 = vmatprep.subr.bf16.mxu0 0
        %443 = vmatpush2.bf16.msra.mxu0 0
        %444 = vmatprep.subr.bf16.mxu0 0
        %445 = vmatpush2.bf16.msra.mxu0 0
        %446 = vmatprep.subr.bf16.mxu0 0
        %447 = vmatpush2.bf16.msra.mxu0 0
        %448 = vmatprep.subr.bf16.mxu0 0
        %449 = vmatpush2.bf16.msra.mxu0 0
        %450 = vmatprep.subr.bf16.mxu0 0
        %451 = vmatpush2.bf16.msra.mxu0 0
        %452 = vmatprep.subr.bf16.mxu0 0
        %453 = vmatpush2.bf16.msra.mxu0 0
        %454 = vmatprep.mubr.bf16.mxu0 0
        %455 = vmatmul.mubr.bf16.gmra.mxu0 %v416
        %v456 = vpop.f32.mrf.mxu0
        %v457 = vadd.f32 0.0, %v456
        %v458 = vpop.f32.mrf.mxu0
        %v459 = vpop.f32.mrf.mxu0
        %v460 = vpop.f32.mrf.mxu0
        %461 = vdwg.mxu0
        %v462 = vpack.c.bf16 %v457, %v457
        %vm463 = vcmask 125952
        %464 = vst.msk [vmem:[%s347] sm:$0xf] %vm463, %v462
        %465 = vst.msk [vmem:[%s311] sm:$0xff] %vm402, %v413
        %p466 = scmp.lt.s32.totalorder %s25, 1
        %s467 = scalar_select %p466, %s25, 1
        %p468 = scmp.lt.s32.totalorder %s24, 1
        %s469 = scalar_select %p468, %s24, 1
        %s470 = smul.addr %s467, 2
        %s471 = sadd.s32 %s469, %s470
        %s472 = smul.addr %s471, 4
        %s473 = scalar_lea.vmem %s4, %s472
        %s474 = sand.u32 %s180, 1
        %s475 = scalar_lea.sflag [#allocation3], %s474
        %s476 = sand.u32 %s180, 1
        %s477 = smul.addr %s476, 8
        %s478 = scalar_lea.vmem [#allocation2], %s477
        // Predicated region
        $region37: #{_lambda_.5} parent=35 // pred_check
          %p479 = pneg %p162
        $region38: #{_lambda_.5} parent=35 // pred_check_branch
          %481 = sbr.rel (%p479) target = $region40
        $region39: #{_lambda_.5} parent=35 // pred_region
          _
        $region40: #{_lambda_.5} parent=35 // pred_fallthru
          _
        // Predicated region
        $region41: #{_lambda_.5} parent=35 // pred_check
          %p482 = pneg %p190
        $region42: #{_lambda_.5} parent=35 // pred_check_branch
          %484 = sbr.rel (%p482) target = $region44
        $region43: #{_lambda_.5} parent=35 // pred_region
          %s486 = ssub.s32 128, 128
          %487 = vsyncadd %s475, %s486
          %s488 = smul.addr %s25, 2
          %s489 = sadd.s32 %s24, %s488
          %s490 = smul.addr %s489, 128
          %s491 = scalar_lea.hbm %s5, %s490
          %s493 = sshll.u32 %s478, 4
          %s494 = int_to_ptr.vmem [resolvable:$true] %s493
          %496 = dma.vmem_to_hbm [thread:$0]  %s494, 128, %s491, %s475
        $region44: #{_lambda_.5} parent=35 // pred_fallthru
          _
      $region36: #{_lambda_.5} parent=5 // pred_fallthru
        _
      %p497 = scmp.le.s32.totalorder 2, %s15
      // Predicated region
      $region45: #{_lambda_.5} parent=5 // pred_check
        %p498 = pneg %p497
      $region46: #{_lambda_.5} parent=5 // pred_check_branch
        %500 = sbr.rel (%p498) target = $region48
      $region47: #{_lambda_.5} parent=5 // pred_region
        %s501 = ssub.s32 %s15, 2
        // Predicated region
        $region49: #{_lambda_.5} parent=47 // pred_check
          %p502 = pneg %p168
        $region50: #{_lambda_.5} parent=47 // pred_check_branch
          %504 = sbr.rel (%p502) target = $region52
        $region51: #{_lambda_.5} parent=47 // pred_region
          %p505 = scmp.lt.s32.totalorder %s27, 1
          %s506 = scalar_select %p505, %s27, 1
          %p507 = scmp.lt.s32.totalorder %s26, 1
          %s508 = scalar_select %p507, %s26, 1
          %s509 = smul.addr %s506, 2
          %s510 = sadd.s32 %s508, %s509
          %s511 = smul.addr %s510, 4
          %s512 = scalar_lea.vmem %s4, %s511
        $region52: #{_lambda_.5} parent=47 // pred_fallthru
          _
        // Predicated region
        $region53: #{_lambda_.5} parent=47 // pred_check
          %p513 = pneg %p196
        $region54: #{_lambda_.5} parent=47 // pred_check_branch
          %515 = sbr.rel (%p513) target = $region56
        $region55: #{_lambda_.5} parent=47 // pred_region
          %s516 = sand.u32 %s181, 1
          %s517 = scalar_lea.sflag [#allocation3], %s516
          %s518 = sand.u32 %s181, 1
          %s519 = smul.addr %s518, 8
          %s520 = scalar_lea.vmem [#allocation2], %s519
          %521 = dma.done %s517, 128
        $region56: #{_lambda_.5} parent=47 // pred_fallthru
          _
      $region48: #{_lambda_.5} parent=5 // pred_fallthru
        _
    $region6: #{_lambda_.5} parent=1 // loop_footer
      %s19 = sadd.s32 1, %s15
    $region7: #{_lambda_.5} parent=1 // loop_footer_branch
      %14 = sbr.rel target = $region3
    $region8: #{_lambda_.5} parent=1 // loop_exit
      _
    %522 = vsyncpa [#allocation3], 1
    %s523 = scalar_lea.sflag [#allocation3], 1
    %524 = vsyncpa %s523, 1

// kernel: _lambda_.7
$region0: #{_lambda_.7}
  #allocation0 [shape = 'u32[]', space=smem, size = 0x4, offset = 0x4, fixed_abs, tag = 'smem constant byte address 0x4 - core index']
  #allocation1 [shape = 'u32[144,128]{1,0:T(1,128)}', space=vmem, size = 0x12000, scoped, tag = 'internal scratch']
  #allocation2 [shape = 'f32[17,32]{1,0:T(8,128)}', space=vmem, size = 0x3000, scoped, tag = 'scratch operand']
  #allocation3 [shape = 'f32[17,64]{1,0:T(8,128)}', space=vmem, size = 0x3000, scoped, tag = 'scratch operand']
  %s0 = inlined_call_operand.vmem [shape: f32[2,8,32], index: 0, kind: input, shape index: {}]
  %s1 = inlined_call_operand.vmem [shape: bf16[3,32,64], index: 1, kind: input, shape index: {}]
  %s2 = inlined_call_operand.vmem [shape: f32[1,64], index: 2, kind: input, shape index: {}]
  %s3 = inlined_call_operand.vmem [shape: bf16[3,64,32], index: 3, kind: input, shape index: {}]
  %s4 = inlined_call_operand.vmem [shape: f32[1,32], index: 4, kind: input, shape index: {}]
  %s5 = inlined_call_operand.vmem [shape: f32[1,32], index: 5, kind: input, shape index: {}]
  %s6 = inlined_call_operand.vmem [shape: f32[1,32], index: 6, kind: input, shape index: {}]
  %s7 = inlined_call_operand.vmem [shape: f32[2,8,1], index: 7, kind: input, shape index: {}]
  %s8 = inlined_call_operand.hbm [shape: f32[2,8,32], index: 8, kind: output, shape index: {}]
  %s9 = sld [smem:[#allocation0]]
  $region65: #{_lambda_.7} parent=0
    _
  %s11 = ssub.s32 1, %s9
  %s12 = scalar_select 0, %s11, %s9
  $region1: #{_lambda_.7} parent=0
    #allocation4 [shape = 'u8[8192]{0}', space=vmem, size = 0x2000, scoped, tag = 'output window, operand 0']
    #allocation5 [shape = 's32[2]{0}', space=sflag, size = 0x8, scoped, tag = 'scoped memory for _lambda_.7']
    %13 = vsyncpa [#allocation5], 0
    %s14 = scalar_lea.sflag [#allocation5], 1
    %15 = vsyncpa %s14, 0
    loop: start=0, step=1, limit=4
    $region2: #{_lambda_.7} parent=1 // loop_pre_header
      _
    $region3: #{_lambda_.7} parent=1 // loop_header
      %s17 = sphi 0, %s21
      %p18 = scmp.ge.s32.totalorder %s17, 4
      %s27 = sphi 0, %s29
      %s30 = sphi 0, %s27
      %s31 = sphi 0, %s30
      %s47 = sphi 0, %s31
      %s51 = sphi 0, %s51
      %s53 = sphi 0, %s51
      %s54 = sphi 0, %s53
      %s68 = sphi 0, %s54
      %s72 = sphi 0, %s72
      %s74 = sphi 0, %s72
      %s75 = sphi 0, %s74
      %s89 = sphi 0, %s75
      %s93 = sphi 0, %s93
      %s95 = sphi 0, %s93
      %s96 = sphi 0, %s95
      %s110 = sphi 0, %s96
      %s114 = sphi 0, %s114
      %s116 = sphi 0, %s114
      %s117 = sphi 0, %s116
      %s131 = sphi 0, %s117
      %s135 = sphi 0, %s135
      %s137 = sphi 0, %s135
      %s138 = sphi 0, %s137
      %s152 = sphi 0, %s138
      %s156 = sphi 0, %s156
      %s158 = sphi 0, %s156
      %s159 = sphi 0, %s158
      %s173 = sphi 0, %s159
      %s179 = sphi 0, %s181
      %s182 = sphi 0, %s179
      %s183 = sphi 0, %s182
      %s199 = sphi 0, %s183
      %s205 = sphi 0, %s207
      %s208 = sphi 0, %s205
      %s209 = sphi 0, %s208
      %s225 = sphi 0, %s209
    $region4: #{_lambda_.7} parent=1 // loop_header_branch
      %20 = sbr.rel (%p18) target = $region8
    $region5: #{_lambda_.7} parent=1 // loop_body
      %s22 = ssub.s32 %s17, 1
      %s23 = ssub.s32 %s17, 2
      %s24 = sadd.s32 %s17, 1
      %s25 = ssub.s32 %s17, %s24
      %p26 = scmp.eq.s32.totalorder %s25, 0
      %s28 = sadd.s32 %s27, 1
      %s29 = scalar_select %p26, %s27, %s28
      %p32 = pneg %p26
      %p33 = scmp.eq.s32.totalorder %s17, 1
      %p34 = por %p32, %p33
      %p35 = scmp.ne.s32.totalorder %s27, %s30
      %p36 = scmp.eq.s32.totalorder %s17, 0
      %p37 = por %p35, %p36
      %p38 = scmp.ne.s32.totalorder %s27, %s30
      %p39 = scmp.eq.s32.totalorder %s22, 1
      %p40 = por %p38, %p39
      %p41 = scmp.ne.s32.totalorder %s30, %s31
      %p42 = scmp.eq.s32.totalorder %s22, 0
      %p43 = por %p41, %p42
      %p44 = scmp.ne.s32.totalorder %s30, %s31
      %p45 = scmp.eq.s32.totalorder %s23, 1
      %p46 = por %p44, %p45
      %p48 = scmp.ne.s32.totalorder %s31, %s47
      %p49 = scmp.eq.s32.totalorder %s23, 0
      %p50 = por %p48, %p49
      %s52 = sadd.s32 %s51, 1
      %p55 = scmp.eq.s32.totalorder %s17, 1
      %p56 = scmp.ne.s32.totalorder %s51, %s53
      %p57 = scmp.eq.s32.totalorder %s17, 0
      %p58 = por %p56, %p57
      %p59 = scmp.ne.s32.totalorder %s51, %s53
      %p60 = scmp.eq.s32.totalorder %s22, 1
      %p61 = por %p59, %p60
      %p62 = scmp.ne.s32.totalorder %s53, %s54
      %p63 = scmp.eq.s32.totalorder %s22, 0
      %p64 = por %p62, %p63
      %p65 = scmp.ne.s32.totalorder %s53, %s54
      %p66 = scmp.eq.s32.totalorder %s23, 1
      %p67 = por %p65, %p66
      %p69 = scmp.ne.s32.totalorder %s54, %s68
      %p70 = scmp.eq.s32.totalorder %s23, 0
      %p71 = por %p69, %p70
      %s73 = sadd.s32 %s72, 1
      %p76 = scmp.eq.s32.totalorder %s17, 1
      %p77 = scmp.ne.s32.totalorder %s72, %s74
      %p78 = scmp.eq.s32.totalorder %s17, 0
      %p79 = por %p77, %p78
      %p80 = scmp.ne.s32.totalorder %s72, %s74
      %p81 = scmp.eq.s32.totalorder %s22, 1
      %p82 = por %p80, %p81
      %p83 = scmp.ne.s32.totalorder %s74, %s75
      %p84 = scmp.eq.s32.totalorder %s22, 0
      %p85 = por %p83, %p84
      %p86 = scmp.ne.s32.totalorder %s74, %s75
      %p87 = scmp.eq.s32.totalorder %s23, 1
      %p88 = por %p86, %p87
      %p90 = scmp.ne.s32.totalorder %s75, %s89
      %p91 = scmp.eq.s32.totalorder %s23, 0
      %p92 = por %p90, %p91
      %s94 = sadd.s32 %s93, 1
      %p97 = scmp.eq.s32.totalorder %s17, 1
      %p98 = scmp.ne.s32.totalorder %s93, %s95
      %p99 = scmp.eq.s32.totalorder %s17, 0
      %p100 = por %p98, %p99
      %p101 = scmp.ne.s32.totalorder %s93, %s95
      %p102 = scmp.eq.s32.totalorder %s22, 1
      %p103 = por %p101, %p102
      %p104 = scmp.ne.s32.totalorder %s95, %s96
      %p105 = scmp.eq.s32.totalorder %s22, 0
      %p106 = por %p104, %p105
      %p107 = scmp.ne.s32.totalorder %s95, %s96
      %p108 = scmp.eq.s32.totalorder %s23, 1
      %p109 = por %p107, %p108
      %p111 = scmp.ne.s32.totalorder %s96, %s110
      %p112 = scmp.eq.s32.totalorder %s23, 0
      %p113 = por %p111, %p112
      %s115 = sadd.s32 %s114, 1
      %p118 = scmp.eq.s32.totalorder %s17, 1
      %p119 = scmp.ne.s32.totalorder %s114, %s116
      %p120 = scmp.eq.s32.totalorder %s17, 0
      %p121 = por %p119, %p120
      %p122 = scmp.ne.s32.totalorder %s114, %s116
      %p123 = scmp.eq.s32.totalorder %s22, 1
      %p124 = por %p122, %p123
      %p125 = scmp.ne.s32.totalorder %s116, %s117
      %p126 = scmp.eq.s32.totalorder %s22, 0
      %p127 = por %p125, %p126
      %p128 = scmp.ne.s32.totalorder %s116, %s117
      %p129 = scmp.eq.s32.totalorder %s23, 1
      %p130 = por %p128, %p129
      %p132 = scmp.ne.s32.totalorder %s117, %s131
      %p133 = scmp.eq.s32.totalorder %s23, 0
      %p134 = por %p132, %p133
      %s136 = sadd.s32 %s135, 1
      %p139 = scmp.eq.s32.totalorder %s17, 1
      %p140 = scmp.ne.s32.totalorder %s135, %s137
      %p141 = scmp.eq.s32.totalorder %s17, 0
      %p142 = por %p140, %p141
      %p143 = scmp.ne.s32.totalorder %s135, %s137
      %p144 = scmp.eq.s32.totalorder %s22, 1
      %p145 = por %p143, %p144
      %p146 = scmp.ne.s32.totalorder %s137, %s138
      %p147 = scmp.eq.s32.totalorder %s22, 0
      %p148 = por %p146, %p147
      %p149 = scmp.ne.s32.totalorder %s137, %s138
      %p150 = scmp.eq.s32.totalorder %s23, 1
      %p151 = por %p149, %p150
      %p153 = scmp.ne.s32.totalorder %s138, %s152
      %p154 = scmp.eq.s32.totalorder %s23, 0
      %p155 = por %p153, %p154
      %s157 = sadd.s32 %s156, 1
      %p160 = scmp.eq.s32.totalorder %s17, 1
      %p161 = scmp.ne.s32.totalorder %s156, %s158
      %p162 = scmp.eq.s32.totalorder %s17, 0
      %p163 = por %p161, %p162
      %p164 = scmp.ne.s32.totalorder %s156, %s158
      %p165 = scmp.eq.s32.totalorder %s22, 1
      %p166 = por %p164, %p165
      %p167 = scmp.ne.s32.totalorder %s158, %s159
      %p168 = scmp.eq.s32.totalorder %s22, 0
      %p169 = por %p167, %p168
      %p170 = scmp.ne.s32.totalorder %s158, %s159
      %p171 = scmp.eq.s32.totalorder %s23, 1
      %p172 = por %p170, %p171
      %p174 = scmp.ne.s32.totalorder %s159, %s173
      %p175 = scmp.eq.s32.totalorder %s23, 0
      %p176 = por %p174, %p175
      %s177 = ssub.s32 %s17, %s24
      %p178 = scmp.eq.s32.totalorder %s177, 0
      %s180 = sadd.s32 %s179, 1
      %s181 = scalar_select %p178, %s179, %s180
      %p184 = pneg %p178
      %p185 = scmp.eq.s32.totalorder %s17, 1
      %p186 = por %p184, %p185
      %p187 = scmp.ne.s32.totalorder %s179, %s182
      %p188 = scmp.eq.s32.totalorder %s17, 0
      %p189 = por %p187, %p188
      %p190 = scmp.ne.s32.totalorder %s179, %s182
      %p191 = scmp.eq.s32.totalorder %s22, 1
      %p192 = por %p190, %p191
      %p193 = scmp.ne.s32.totalorder %s182, %s183
      %p194 = scmp.eq.s32.totalorder %s22, 0
      %p195 = por %p193, %p194
      %p196 = scmp.ne.s32.totalorder %s182, %s183
      %p197 = scmp.eq.s32.totalorder %s23, 1
      %p198 = por %p196, %p197
      %p200 = scmp.ne.s32.totalorder %s183, %s199
      %p201 = scmp.eq.s32.totalorder %s23, 0
      %p202 = por %p200, %p201
      %s203 = ssub.s32 %s17, %s24
      %p204 = scmp.eq.s32.totalorder %s203, 0
      %s206 = sadd.s32 %s205, 1
      %s207 = scalar_select %p204, %s205, %s206
      %p210 = pneg %p204
      %p211 = scmp.eq.s32.totalorder %s17, 1
      %p212 = por %p210, %p211
      %p213 = scmp.ne.s32.totalorder %s205, %s208
      %p214 = scmp.eq.s32.totalorder %s17, 0
      %p215 = por %p213, %p214
      %p216 = scmp.ne.s32.totalorder %s205, %s208
      %p217 = scmp.eq.s32.totalorder %s22, 1
      %p218 = por %p216, %p217
      %p219 = scmp.ne.s32.totalorder %s208, %s209
      %p220 = scmp.eq.s32.totalorder %s22, 0
      %p221 = por %p219, %p220
      %p222 = scmp.ne.s32.totalorder %s208, %s209
      %p223 = scmp.eq.s32.totalorder %s23, 1
      %p224 = por %p222, %p223
      %p226 = scmp.ne.s32.totalorder %s209, %s225
      %p227 = scmp.eq.s32.totalorder %s23, 0
      %p228 = por %p226, %p227
      %p229 = scmp.le.s32.totalorder 1, %s17
      %p230 = scmp.lt.s32.totalorder %s17, 3
      %p231 = pnand %p229, %p230
      %p232 = pneg %p231
      // Predicated region
      $region9: #{_lambda_.7} parent=5 // pred_check
        _
      $region10: #{_lambda_.7} parent=5 // pred_check_branch
        %234 = sbr.rel (%p231) target = $region12
      $region11: #{_lambda_.7} parent=5 // pred_region
        %s235 = ssub.s32 %s17, 1
        // Predicated region
        $region13: #{_lambda_.7} parent=11 // pred_check
          %p236 = pneg %p64
        $region14: #{_lambda_.7} parent=11 // pred_check_branch
          %238 = sbr.rel (%p236) target = $region16
        $region15: #{_lambda_.7} parent=11 // pred_region
          _
        $region16: #{_lambda_.7} parent=11 // pred_fallthru
          _
        // Predicated region
        $region17: #{_lambda_.7} parent=11 // pred_check
          %p239 = pneg %p85
        $region18: #{_lambda_.7} parent=11 // pred_check_branch
          %241 = sbr.rel (%p239) target = $region20
        $region19: #{_lambda_.7} parent=11 // pred_region
          _
        $region20: #{_lambda_.7} parent=11 // pred_fallthru
          _
        // Predicated region
        $region21: #{_lambda_.7} parent=11 // pred_check
          %p242 = pneg %p106
        $region22: #{_lambda_.7} parent=11 // pred_check_branch
          %244 = sbr.rel (%p242) target = $region24
        $region23: #{_lambda_.7} parent=11 // pred_region
          _
        $region24: #{_lambda_.7} parent=11 // pred_fallthru
          _
        // Predicated region
        $region25: #{_lambda_.7} parent=11 // pred_check
          %p245 = pneg %p127
        $region26: #{_lambda_.7} parent=11 // pred_check_branch
          %247 = sbr.rel (%p245) target = $region28
        $region27: #{_lambda_.7} parent=11 // pred_region
          _
        $region28: #{_lambda_.7} parent=11 // pred_fallthru
          _
        // Predicated region
        $region29: #{_lambda_.7} parent=11 // pred_check
          %p248 = pneg %p148
        $region30: #{_lambda_.7} parent=11 // pred_check_branch
          %250 = sbr.rel (%p248) target = $region32
        $region31: #{_lambda_.7} parent=11 // pred_region
          _
        $region32: #{_lambda_.7} parent=11 // pred_fallthru
          _
        // Predicated region
        $region33: #{_lambda_.7} parent=11 // pred_check
          %p251 = pneg %p169
        $region34: #{_lambda_.7} parent=11 // pred_check_branch
          %253 = sbr.rel (%p251) target = $region36
        $region35: #{_lambda_.7} parent=11 // pred_region
          _
        $region36: #{_lambda_.7} parent=11 // pred_fallthru
          _
      $region12: #{_lambda_.7} parent=5 // pred_fallthru
        _
      %p254 = scmp.lt.s32.totalorder %s17, 2
      // Predicated region
      $region37: #{_lambda_.7} parent=5 // pred_check
        %p255 = pneg %p254
      $region38: #{_lambda_.7} parent=5 // pred_check_branch
        %257 = sbr.rel (%p255) target = $region40
      $region39: #{_lambda_.7} parent=5 // pred_region
        // Predicated region
        $region41: #{_lambda_.7} parent=39 // pred_check
          %p258 = pneg %p37
        $region42: #{_lambda_.7} parent=39 // pred_check_branch
          %260 = sbr.rel (%p258) target = $region44
        $region43: #{_lambda_.7} parent=39 // pred_region
          %p261 = scmp.lt.s32.totalorder %s17, 1
          %s262 = scalar_select %p261, %s17, 1
          %s263 = smul.addr %s262, 8
          %s264 = scalar_lea.vmem %s0, %s263
        $region44: #{_lambda_.7} parent=39 // pred_fallthru
          _
        // Predicated region
        $region45: #{_lambda_.7} parent=39 // pred_check
          %p265 = pneg %p189
        $region46: #{_lambda_.7} parent=39 // pred_check_branch
          %267 = sbr.rel (%p265) target = $region48
        $region47: #{_lambda_.7} parent=39 // pred_region
          %p268 = scmp.lt.s32.totalorder %s17, 1
          %s269 = scalar_select %p268, %s17, 1
          %s270 = smul.addr %s269, 8
          %s271 = scalar_lea.vmem %s7, %s270
        $region48: #{_lambda_.7} parent=39 // pred_fallthru
          _
      $region40: #{_lambda_.7} parent=5 // pred_fallthru
        _
      %p272 = scmp.le.s32.totalorder 1, %s17
      %p273 = scmp.lt.s32.totalorder %s17, 3
      %p274 = pnand %p272, %p273
      %p275 = pneg %p274
      // Predicated region
      $region49: #{_lambda_.7} parent=5 // pred_check
        _
      $region50: #{_lambda_.7} parent=5 // pred_check_branch
        %277 = sbr.rel (%p274) target = $region52
      $region51: #{_lambda_.7} parent=5 // pred_region
        %s278 = ssub.s32 %s17, 1
        %p279 = scmp.lt.s32.totalorder %s22, 1
        %s280 = scalar_select %p279, %s22, 1
        %s281 = smul.addr %s280, 8
        %s282 = scalar_lea.vmem %s0, %s281
        %p283 = pneg %p43
        %p284 = pneg %p40
        %p285 = pneg %p64
        %p286 = pneg %p61
        %p287 = pneg %p85
        %p288 = pneg %p82
        %p289 = pneg %p106
        %p290 = pneg %p103
        %p291 = pneg %p127
        %p292 = pneg %p124
        %p293 = pneg %p148
        %p294 = pneg %p145
        %p295 = pneg %p169
        %p296 = pneg %p166
        %p297 = scmp.lt.s32.totalorder %s22, 1
        %s298 = scalar_select %p297, %s22, 1
        %s299 = smul.addr %s298, 8
        %s300 = scalar_lea.vmem %s7, %s299
        %p301 = pneg %p195
        %p302 = pneg %p192
        %p303 = pneg %p221
        %p304 = pneg %p218
        %s305 = sand.u32 %s208, 1
        %s306 = scalar_lea.sflag [#allocation5], %s305
        %s307 = sand.u32 %s208, 1
        %s308 = smul.addr %s307, 8
        %s309 = scalar_lea.vmem [#allocation4], %s308
        %p310 = scmp.lt.s32.totalorder %s22, 1
        %s311 = scalar_select %p310, %s22, 1
        %s312 = smul.addr %s311, 8
        %s313 = scalar_lea.vmem %s0, %s312
        %p314 = scmp.lt.s32.totalorder %s22, 1
        %s315 = scalar_select %p314, %s22, 1
        %s316 = smul.addr %s315, 8
        %s317 = scalar_lea.vmem %s7, %s316
        %v319 = vld [vmem:[%s313] sm:$0xff]
        %vm320 = vcmask 261120
        %321 = vst.msk [vmem:[#allocation2] sm:$0xff] %vm320, 0.0
        %322 = vst.msk [vmem:[#allocation2 + $0x8] sm:$0xff] %vm320, 0.0
        %vm323 = vcmask 253952
        %324 = vst.msk [vmem:[#allocation2 + $0x10] sm:$0x1] %vm323, 0.0
        %325 = vst.msk [vmem:[#allocation2 + $0x8] sm:$0xff] %vm320, %v319
        %v326 = vld [vmem:[%s2] sm:$0x1]
        %v328 = vlaneseq
        %v329 = vshrl.u32 %v328, 7
        %v330 = vsub.s32 0, %v329
        %v331 = vrot.slane %v326, %v330
        %v333 = vadd.f32 %v331, 0.0
        %v334 = vld [vmem:[#allocation2 + $0x7] sm:$0xff]
        %v335 = vpack.c.bf16 %v334, %v334
        %v336 = vld [vmem:[%s1] sm:$0xf]
        %v337 = vld [vmem:[%s1 + $0x4] sm:$0xf]
        %v338 = vld [vmem:[%s1 + $0x8] sm:$0xf]
        %v339 = vld [vmem:[%s1 + $0xc] sm:$0xf]
        %v344 = vunpack.c.l.b16 %v336
        %v345 = vunpack.c.l.b16 %v337
        %v346 = vunpack.c.l.b16 %v338
        %v347 = vunpack.c.l.b16 %v339
        %v348 = vpack.c.b16 %v345, %v344
        %v349 = vpack.c.b16 %v347, %v346
        %v353 = vsel %vm320, %v335, 0
        %355 = vmatprep.subr.bf16.mxu0 0
        %356 = vmatpush1.bf16.msra.mxu0 0
        %357 = vmatprep.subr.bf16.mxu0 0
        %358 = vmatpush1.bf16.msra.mxu0 0
        %359 = vmatprep.subr.bf16.mxu0 0
        %360 = vmatpush1.bf16.msra.mxu0 0
        %361 = vmatprep.subr.bf16.mxu0 0
        %362 = vmatpush1.bf16.msra.mxu0 0
        %363 = vmatprep.subr.bf16.mxu0 0
        %364 = vmatpush1.bf16.msra.mxu0 0
        %365 = vmatprep.subr.bf16.mxu0 0
        %366 = vmatpush1.bf16.msra.mxu0 0
        %367 = vmatprep.subr.bf16.mxu0 0
        %368 = vmatpush1.bf16.msra.mxu0 %v349
        %369 = vmatprep.subr.bf16.mxu0 0
        %370 = vmatpush1.bf16.msra.mxu0 %v348
        %371 = vmatprep.subr.bf16.mxu0 0
        %372 = vmatpush2.bf16.msra.mxu0 0
        %373 = vmatprep.subr.bf16.mxu0 0
        %374 = vmatpush2.bf16.msra.mxu0 0
        %375 = vmatprep.subr.bf16.mxu0 0
        %376 = vmatpush2.bf16.msra.mxu0 0
        %377 = vmatprep.subr.bf16.mxu0 0
        %378 = vmatpush2.bf16.msra.mxu0 0
        %379 = vmatprep.subr.bf16.mxu0 0
        %380 = vmatpush2.bf16.msra.mxu0 0
        %381 = vmatprep.subr.bf16.mxu0 0
        %382 = vmatpush2.bf16.msra.mxu0 0
        %383 = vmatprep.subr.bf16.mxu0 0
        %384 = vmatpush2.bf16.msra.mxu0 0
        %385 = vmatprep.subr.bf16.mxu0 0
        %386 = vmatpush2.bf16.msra.mxu0 0
        %387 = vmatprep.mubr.bf16.mxu0 0
        %388 = vmatmul.mubr.bf16.gmra.mxu0 %v353
        %v389 = vpop.f32.mrf.mxu0
        %v390 = vadd.f32 0.0, %v389
        %v391 = vpop.f32.mrf.mxu0
        %v392 = vpop.f32.mrf.mxu0
        %v393 = vpop.f32.mrf.mxu0
        %394 = vdwg.mxu0
        %v395 = vadd.f32 %v333, %v390
        %v396 = vld [vmem:[#allocation2 + $0x8] sm:$0xff]
        %v397 = vpack.c.bf16 %v396, %v396
        %s398 = scalar_lea.vmem %s1, 16
        %v399 = vld [vmem:[%s398] sm:$0xf]
        %v400 = vld [vmem:[%s398 + $0x4] sm:$0xf]
        %v401 = vld [vmem:[%s398 + $0x8] sm:$0xf]
        %v402 = vld [vmem:[%s398 + $0xc] sm:$0xf]
        %v407 = vunpack.c.l.b16 %v399
        %v408 = vunpack.c.l.b16 %v400
        %v409 = vunpack.c.l.b16 %v401
        %v410 = vunpack.c.l.b16 %v402
        %v411 = vpack.c.b16 %v408, %v407
        %v412 = vpack.c.b16 %v410, %v409
        %v416 = vsel %vm320, %v397, 0
        %418 = vmatprep.subr.bf16.mxu0 0
        %419 = vmatpush1.bf16.msra.mxu0 0
        %420 = vmatprep.subr.bf16.mxu0 0
        %421 = vmatpush1.bf16.msra.mxu0 0
        %422 = vmatprep.subr.bf16.mxu0 0
        %423 = vmatpush1.bf16.msra.mxu0 0
        %424 = vmatprep.subr.bf16.mxu0 0
        %425 = vmatpush1.bf16.msra.mxu0 0
        %426 = vmatprep.subr.bf16.mxu0 0
        %427 = vmatpush1.bf16.msra.mxu0 0
        %428 = vmatprep.subr.bf16.mxu0 0
        %429 = vmatpush1.bf16.msra.mxu0 0
        %430 = vmatprep.subr.bf16.mxu0 0
        %431 = vmatpush1.bf16.msra.mxu0 %v412
        %432 = vmatprep.subr.bf16.mxu0 0
        %433 = vmatpush1.bf16.msra.mxu0 %v411
        %434 = vmatprep.subr.bf16.mxu0 0
        %435 = vmatpush2.bf16.msra.mxu0 0
        %436 = vmatprep.subr.bf16.mxu0 0
        %437 = vmatpush2.bf16.msra.mxu0 0
        %438 = vmatprep.subr.bf16.mxu0 0
        %439 = vmatpush2.bf16.msra.mxu0 0
        %440 = vmatprep.subr.bf16.mxu0 0
        %441 = vmatpush2.bf16.msra.mxu0 0
        %442 = vmatprep.subr.bf16.mxu0 0
        %443 = vmatpush2.bf16.msra.mxu0 0
        %444 = vmatprep.subr.bf16.mxu0 0
        %445 = vmatpush2.bf16.msra.mxu0 0
        %446 = vmatprep.subr.bf16.mxu0 0
        %447 = vmatpush2.bf16.msra.mxu0 0
        %448 = vmatprep.subr.bf16.mxu0 0
        %449 = vmatpush2.bf16.msra.mxu0 0
        %450 = vmatprep.mubr.bf16.mxu0 0
        %451 = vmatmul.mubr.bf16.gmra.mxu0 %v416
        %v452 = vpop.f32.mrf.mxu0
        %v453 = vadd.f32 0.0, %v452
        %v454 = vpop.f32.mrf.mxu0
        %v455 = vpop.f32.mrf.mxu0
        %v456 = vpop.f32.mrf.mxu0
        %457 = vdwg.mxu0
        %v458 = vadd.f32 %v395, %v453
        %v459 = vld [vmem:[#allocation2 + $0x9] sm:$0xff]
        %v460 = vpack.c.bf16 %v459, %v459
        %s461 = scalar_lea.vmem %s1, 32
        %v462 = vld [vmem:[%s461] sm:$0xf]
        %v463 = vld [vmem:[%s461 + $0x4] sm:$0xf]
        %v464 = vld [vmem:[%s461 + $0x8] sm:$0xf]
        %v465 = vld [vmem:[%s461 + $0xc] sm:$0xf]
        %v470 = vunpack.c.l.b16 %v462
        %v471 = vunpack.c.l.b16 %v463
        %v472 = vunpack.c.l.b16 %v464
        %v473 = vunpack.c.l.b16 %v465
        %v474 = vpack.c.b16 %v471, %v470
        %v475 = vpack.c.b16 %v473, %v472
        %v479 = vsel %vm320, %v460, 0
        %481 = vmatprep.subr.bf16.mxu0 0
        %482 = vmatpush1.bf16.msra.mxu0 0
        %483 = vmatprep.subr.bf16.mxu0 0
        %484 = vmatpush1.bf16.msra.mxu0 0
        %485 = vmatprep.subr.bf16.mxu0 0
        %486 = vmatpush1.bf16.msra.mxu0 0
        %487 = vmatprep.subr.bf16.mxu0 0
        %488 = vmatpush1.bf16.msra.mxu0 0
        %489 = vmatprep.subr.bf16.mxu0 0
        %490 = vmatpush1.bf16.msra.mxu0 0
        %491 = vmatprep.subr.bf16.mxu0 0
        %492 = vmatpush1.bf16.msra.mxu0 0
        %493 = vmatprep.subr.bf16.mxu0 0
        %494 = vmatpush1.bf16.msra.mxu0 %v475
        %495 = vmatprep.subr.bf16.mxu0 0
        %496 = vmatpush1.bf16.msra.mxu0 %v474
        %497 = vmatprep.subr.bf16.mxu0 0
        %498 = vmatpush2.bf16.msra.mxu0 0
        %499 = vmatprep.subr.bf16.mxu0 0
        %500 = vmatpush2.bf16.msra.mxu0 0
        %501 = vmatprep.subr.bf16.mxu0 0
        %502 = vmatpush2.bf16.msra.mxu0 0
        %503 = vmatprep.subr.bf16.mxu0 0
        %504 = vmatpush2.bf16.msra.mxu0 0
        %505 = vmatprep.subr.bf16.mxu0 0
        %506 = vmatpush2.bf16.msra.mxu0 0
        %507 = vmatprep.subr.bf16.mxu0 0
        %508 = vmatpush2.bf16.msra.mxu0 0
        %509 = vmatprep.subr.bf16.mxu0 0
        %510 = vmatpush2.bf16.msra.mxu0 0
        %511 = vmatprep.subr.bf16.mxu0 0
        %512 = vmatpush2.bf16.msra.mxu0 0
        %513 = vmatprep.mubr.bf16.mxu0 0
        %514 = vmatmul.mubr.bf16.gmra.mxu0 %v479
        %v515 = vpop.f32.mrf.mxu0
        %v516 = vadd.f32 0.0, %v515
        %v517 = vpop.f32.mrf.mxu0
        %v518 = vpop.f32.mrf.mxu0
        %v519 = vpop.f32.mrf.mxu0
        %520 = vdwg.mxu0
        %v521 = vadd.f32 %v458, %v516
        %v522 = vmax.f32 %v521, 0.0
        %vm523 = vcmask 523264
        %524 = vst.msk [vmem:[#allocation3] sm:$0xff] %vm523, 0.0
        %525 = vst.msk [vmem:[#allocation3 + $0x8] sm:$0xff] %vm523, 0.0
        %vm526 = vcmask 516096
        %527 = vst.msk [vmem:[#allocation3 + $0x10] sm:$0x1] %vm526, 0.0
        %528 = vst.msk [vmem:[#allocation3 + $0x8] sm:$0xff] %vm523, %v522
        %v529 = vld [vmem:[%s4] sm:$0x1]
        %v531 = vlaneseq
        %v532 = vshrl.u32 %v531, 7
        %v533 = vsub.s32 0, %v532
        %v534 = vrot.slane %v529, %v533
        %v536 = vadd.f32 %v534, 0.0
        %v537 = vld [vmem:[#allocation3 + $0x7] sm:$0xff]
        %v538 = vpack.c.bf16 %v537, %v537
        %v539 = vld [vmem:[%s3] sm:$0xf]
        %v540 = vld [vmem:[%s3 + $0x4] sm:$0xf]
        %v541 = vld [vmem:[%s3 + $0x8] sm:$0xf]
        %v542 = vld [vmem:[%s3 + $0xc] sm:$0xf]
        %v543 = vld [vmem:[%s3 + $0x10] sm:$0xf]
        %v544 = vld [vmem:[%s3 + $0x14] sm:$0xf]
        %v545 = vld [vmem:[%s3 + $0x18] sm:$0xf]
        %v546 = vld [vmem:[%s3 + $0x1c] sm:$0xf]
        %v555 = vunpack.c.l.b16 %v539
        %v556 = vunpack.c.l.b16 %v540
        %v557 = vunpack.c.l.b16 %v541
        %v558 = vunpack.c.l.b16 %v542
        %v559 = vunpack.c.l.b16 %v543
        %v560 = vunpack.c.l.b16 %v544
        %v561 = vunpack.c.l.b16 %v545
        %v562 = vunpack.c.l.b16 %v546
        %v563 = vpack.c.b16 %v556, %v555
        %v564 = vpack.c.b16 %v558, %v557
        %v565 = vpack.c.b16 %v560, %v559
        %v566 = vpack.c.b16 %v562, %v561
        %v572 = vsel %vm523, %v538, 0
        %574 = vmatprep.subr.bf16.mxu0 0
        %575 = vmatpush1.bf16.msra.mxu0 0
        %576 = vmatprep.subr.bf16.mxu0 0
        %577 = vmatpush1.bf16.msra.mxu0 0
        %578 = vmatprep.subr.bf16.mxu0 0
        %579 = vmatpush1.bf16.msra.mxu0 0
        %580 = vmatprep.subr.bf16.mxu0 0
        %581 = vmatpush1.bf16.msra.mxu0 0
        %582 = vmatprep.subr.bf16.mxu0 0
        %583 = vmatpush1.bf16.msra.mxu0 %v566
        %584 = vmatprep.subr.bf16.mxu0 0
        %585 = vmatpush1.bf16.msra.mxu0 %v565
        %586 = vmatprep.subr.bf16.mxu0 0
        %587 = vmatpush1.bf16.msra.mxu0 %v564
        %588 = vmatprep.subr.bf16.mxu0 0
        %589 = vmatpush1.bf16.msra.mxu0 %v563
        %590 = vmatprep.subr.bf16.mxu0 0
        %591 = vmatpush2.bf16.msra.mxu0 0
        %592 = vmatprep.subr.bf16.mxu0 0
        %593 = vmatpush2.bf16.msra.mxu0 0
        %594 = vmatprep.subr.bf16.mxu0 0
        %595 = vmatpush2.bf16.msra.mxu0 0
        %596 = vmatprep.subr.bf16.mxu0 0
        %597 = vmatpush2.bf16.msra.mxu0 0
        %598 = vmatprep.subr.bf16.mxu0 0
        %599 = vmatpush2.bf16.msra.mxu0 0
        %600 = vmatprep.subr.bf16.mxu0 0
        %601 = vmatpush2.bf16.msra.mxu0 0
        %602 = vmatprep.subr.bf16.mxu0 0
        %603 = vmatpush2.bf16.msra.mxu0 0
        %604 = vmatprep.subr.bf16.mxu0 0
        %605 = vmatpush2.bf16.msra.mxu0 0
        %606 = vmatprep.mubr.bf16.mxu0 0
        %607 = vmatmul.mubr.bf16.gmra.mxu0 %v572
        %v608 = vpop.f32.mrf.mxu0
        %v609 = vadd.f32 0.0, %v608
        %v610 = vpop.f32.mrf.mxu0
        %v611 = vpop.f32.mrf.mxu0
        %v612 = vpop.f32.mrf.mxu0
        %613 = vdwg.mxu0
        %v614 = vadd.f32 %v536, %v609
        %v615 = vld [vmem:[#allocation3 + $0x8] sm:$0xff]
        %v616 = vpack.c.bf16 %v615, %v615
        %s617 = scalar_lea.vmem %s3, 32
        %v618 = vld [vmem:[%s617] sm:$0xf]
        %v619 = vld [vmem:[%s617 + $0x4] sm:$0xf]
        %v620 = vld [vmem:[%s617 + $0x8] sm:$0xf]
        %v621 = vld [vmem:[%s617 + $0xc] sm:$0xf]
        %v622 = vld [vmem:[%s617 + $0x10] sm:$0xf]
        %v623 = vld [vmem:[%s617 + $0x14] sm:$0xf]
        %v624 = vld [vmem:[%s617 + $0x18] sm:$0xf]
        %v625 = vld [vmem:[%s617 + $0x1c] sm:$0xf]
        %v634 = vunpack.c.l.b16 %v618
        %v635 = vunpack.c.l.b16 %v619
        %v636 = vunpack.c.l.b16 %v620
        %v637 = vunpack.c.l.b16 %v621
        %v638 = vunpack.c.l.b16 %v622
        %v639 = vunpack.c.l.b16 %v623
        %v640 = vunpack.c.l.b16 %v624
        %v641 = vunpack.c.l.b16 %v625
        %v642 = vpack.c.b16 %v635, %v634
        %v643 = vpack.c.b16 %v637, %v636
        %v644 = vpack.c.b16 %v639, %v638
        %v645 = vpack.c.b16 %v641, %v640
        %v651 = vsel %vm523, %v616, 0
        %653 = vmatprep.subr.bf16.mxu0 0
        %654 = vmatpush1.bf16.msra.mxu0 0
        %655 = vmatprep.subr.bf16.mxu0 0
        %656 = vmatpush1.bf16.msra.mxu0 0
        %657 = vmatprep.subr.bf16.mxu0 0
        %658 = vmatpush1.bf16.msra.mxu0 0
        %659 = vmatprep.subr.bf16.mxu0 0
        %660 = vmatpush1.bf16.msra.mxu0 0
        %661 = vmatprep.subr.bf16.mxu0 0
        %662 = vmatpush1.bf16.msra.mxu0 %v645
        %663 = vmatprep.subr.bf16.mxu0 0
        %664 = vmatpush1.bf16.msra.mxu0 %v644
        %665 = vmatprep.subr.bf16.mxu0 0
        %666 = vmatpush1.bf16.msra.mxu0 %v643
        %667 = vmatprep.subr.bf16.mxu0 0
        %668 = vmatpush1.bf16.msra.mxu0 %v642
        %669 = vmatprep.subr.bf16.mxu0 0
        %670 = vmatpush2.bf16.msra.mxu0 0
        %671 = vmatprep.subr.bf16.mxu0 0
        %672 = vmatpush2.bf16.msra.mxu0 0
        %673 = vmatprep.subr.bf16.mxu0 0
        %674 = vmatpush2.bf16.msra.mxu0 0
        %675 = vmatprep.subr.bf16.mxu0 0
        %676 = vmatpush2.bf16.msra.mxu0 0
        %677 = vmatprep.subr.bf16.mxu0 0
        %678 = vmatpush2.bf16.msra.mxu0 0
        %679 = vmatprep.subr.bf16.mxu0 0
        %680 = vmatpush2.bf16.msra.mxu0 0
        %681 = vmatprep.subr.bf16.mxu0 0
        %682 = vmatpush2.bf16.msra.mxu0 0
        %683 = vmatprep.subr.bf16.mxu0 0
        %684 = vmatpush2.bf16.msra.mxu0 0
        %685 = vmatprep.mubr.bf16.mxu0 0
        %686 = vmatmul.mubr.bf16.gmra.mxu0 %v651
        %v687 = vpop.f32.mrf.mxu0
        %v688 = vadd.f32 0.0, %v687
        %v689 = vpop.f32.mrf.mxu0
        %v690 = vpop.f32.mrf.mxu0
        %v691 = vpop.f32.mrf.mxu0
        %692 = vdwg.mxu0
        %v693 = vadd.f32 %v614, %v688
        %v694 = vld [vmem:[#allocation3 + $0x9] sm:$0xff]
        %v695 = vpack.c.bf16 %v694, %v694
        %s696 = scalar_lea.vmem %s3, 64
        %v697 = vld [vmem:[%s696] sm:$0xf]
        %v698 = vld [vmem:[%s696 + $0x4] sm:$0xf]
        %v699 = vld [vmem:[%s696 + $0x8] sm:$0xf]
        %v700 = vld [vmem:[%s696 + $0xc] sm:$0xf]
        %v701 = vld [vmem:[%s696 + $0x10] sm:$0xf]
        %v702 = vld [vmem:[%s696 + $0x14] sm:$0xf]
        %v703 = vld [vmem:[%s696 + $0x18] sm:$0xf]
        %v704 = vld [vmem:[%s696 + $0x1c] sm:$0xf]
        %v713 = vunpack.c.l.b16 %v697
        %v714 = vunpack.c.l.b16 %v698
        %v715 = vunpack.c.l.b16 %v699
        %v716 = vunpack.c.l.b16 %v700
        %v717 = vunpack.c.l.b16 %v701
        %v718 = vunpack.c.l.b16 %v702
        %v719 = vunpack.c.l.b16 %v703
        %v720 = vunpack.c.l.b16 %v704
        %v721 = vpack.c.b16 %v714, %v713
        %v722 = vpack.c.b16 %v716, %v715
        %v723 = vpack.c.b16 %v718, %v717
        %v724 = vpack.c.b16 %v720, %v719
        %v730 = vsel %vm523, %v695, 0
        %732 = vmatprep.subr.bf16.mxu0 0
        %733 = vmatpush1.bf16.msra.mxu0 0
        %734 = vmatprep.subr.bf16.mxu0 0
        %735 = vmatpush1.bf16.msra.mxu0 0
        %736 = vmatprep.subr.bf16.mxu0 0
        %737 = vmatpush1.bf16.msra.mxu0 0
        %738 = vmatprep.subr.bf16.mxu0 0
        %739 = vmatpush1.bf16.msra.mxu0 0
        %740 = vmatprep.subr.bf16.mxu0 0
        %741 = vmatpush1.bf16.msra.mxu0 %v724
        %742 = vmatprep.subr.bf16.mxu0 0
        %743 = vmatpush1.bf16.msra.mxu0 %v723
        %744 = vmatprep.subr.bf16.mxu0 0
        %745 = vmatpush1.bf16.msra.mxu0 %v722
        %746 = vmatprep.subr.bf16.mxu0 0
        %747 = vmatpush1.bf16.msra.mxu0 %v721
        %748 = vmatprep.subr.bf16.mxu0 0
        %749 = vmatpush2.bf16.msra.mxu0 0
        %750 = vmatprep.subr.bf16.mxu0 0
        %751 = vmatpush2.bf16.msra.mxu0 0
        %752 = vmatprep.subr.bf16.mxu0 0
        %753 = vmatpush2.bf16.msra.mxu0 0
        %754 = vmatprep.subr.bf16.mxu0 0
        %755 = vmatpush2.bf16.msra.mxu0 0
        %756 = vmatprep.subr.bf16.mxu0 0
        %757 = vmatpush2.bf16.msra.mxu0 0
        %758 = vmatprep.subr.bf16.mxu0 0
        %759 = vmatpush2.bf16.msra.mxu0 0
        %760 = vmatprep.subr.bf16.mxu0 0
        %761 = vmatpush2.bf16.msra.mxu0 0
        %762 = vmatprep.subr.bf16.mxu0 0
        %763 = vmatpush2.bf16.msra.mxu0 0
        %764 = vmatprep.mubr.bf16.mxu0 0
        %765 = vmatmul.mubr.bf16.gmra.mxu0 %v730
        %v766 = vpop.f32.mrf.mxu0
        %v767 = vadd.f32 0.0, %v766
        %v768 = vpop.f32.mrf.mxu0
        %v769 = vpop.f32.mrf.mxu0
        %v770 = vpop.f32.mrf.mxu0
        %771 = vdwg.mxu0
        %v772 = vadd.f32 %v693, %v767
        %v773 = vadd.f32 %v772, %v319
        %v774 = vsel %vm320, %v773, 0.0
        %775 = vadd.xlane.f32.xlu0 %v774
        %v776 = vpop.xlane.xlu0 %775
        %v777 = vrcp.pop 32.0
        %v778 = vmul.f32 %v776, %v777
        %v779 = vsub.f32 %v773, %v778
        %v780 = vmul.f32 %v779, %v779
        %v781 = vsel %vm320, %v780, 0.0
        %782 = vadd.xlane.f32.xlu0 %v781
        %v783 = vpop.xlane.xlu0 %782
        %v784 = vmul.f32 %v783, %v777
        %v785 = vadd.f32 %v784, 1e-05
        %v786 = vrsqrt.pop %v785
        %v787 = vmul.f32 %v779, %v786
        %v788 = vld [vmem:[%s5] sm:$0x1]
        %v790 = vlaneseq
        %v791 = vshrl.u32 %v790, 7
        %v792 = vsub.s32 0, %v791
        %v793 = vrot.slane %v788, %v792
        %v795 = vmul.f32 %v787, %v793
        %v796 = vld [vmem:[%s6] sm:$0x1]
        %v798 = vlaneseq
        %v799 = vshrl.u32 %v798, 7
        %v800 = vsub.s32 0, %v799
        %v801 = vrot.slane %v796, %v800
        %v803 = vadd.f32 %v795, %v801
        %v804 = vld [vmem:[%s317] sm:$0xff]
        %vm805 = vcmp.gt.f32.partialorder %v804, 0.0
        %v806 = vsel %vm805, 1, 0
        %807 = vset.pattern.permute.xlu0 0
        %808 = vperm.xlu0 %807, %v806
        %v809 = vpop.permute.xlu0 %808
        %vm810 = vcmp.eq.s32.totalorder %v809, 1
        %v811 = vsel %vm810, 0.0, %v803
        %812 = vst.msk [vmem:[%s309] sm:$0xff] %vm320, %v811
        %s813 = sand.u32 %s208, 1
        %s814 = scalar_lea.sflag [#allocation5], %s813
        %s815 = sand.u32 %s208, 1
        %s816 = smul.addr %s815, 8
        %s817 = scalar_lea.vmem [#allocation4], %s816
        // Predicated region
        $region53: #{_lambda_.7} parent=51 // pred_check
          %p818 = pneg %p218
        $region54: #{_lambda_.7} parent=51 // pred_check_branch
          %820 = sbr.rel (%p818) target = $region56
        $region55: #{_lambda_.7} parent=51 // pred_region
          %s822 = ssub.s32 128, 128
          %823 = vsyncadd %s814, %s822
          %s824 = smul.addr %s22, 128
          %s825 = scalar_lea.hbm %s8, %s824
          %s827 = sshll.u32 %s817, 4
          %s828 = int_to_ptr.vmem [resolvable:$true] %s827
          %830 = dma.vmem_to_hbm [thread:$0]  %s828, 128, %s825, %s814
        $region56: #{_lambda_.7} parent=51 // pred_fallthru
          _
      $region52: #{_lambda_.7} parent=5 // pred_fallthru
        _
      %p831 = scmp.le.s32.totalorder 2, %s17
      // Predicated region
      $region57: #{_lambda_.7} parent=5 // pred_check
        %p832 = pneg %p831
      $region58: #{_lambda_.7} parent=5 // pred_check_branch
        %834 = sbr.rel (%p832) target = $region60
      $region59: #{_lambda_.7} parent=5 // pred_region
        %s835 = ssub.s32 %s17, 2
        // Predicated region
        $region61: #{_lambda_.7} parent=59 // pred_check
          %p836 = pneg %p224
        $region62: #{_lambda_.7} parent=59 // pred_check_branch
          %838 = sbr.rel (%p836) target = $region64
        $region63: #{_lambda_.7} parent=59 // pred_region
          %s839 = sand.u32 %s209, 1
          %s840 = scalar_lea.sflag [#allocation5], %s839
          %s841 = sand.u32 %s209, 1
          %s842 = smul.addr %s841, 8
          %s843 = scalar_lea.vmem [#allocation4], %s842
          %844 = dma.done %s840, 128
        $region64: #{_lambda_.7} parent=59 // pred_fallthru
          _
      $region60: #{_lambda_.7} parent=5 // pred_fallthru
        _
    $region6: #{_lambda_.7} parent=1 // loop_footer
      %s21 = sadd.s32 1, %s17
    $region7: #{_lambda_.7} parent=1 // loop_footer_branch
      %16 = sbr.rel target = $region3
    $region8: #{_lambda_.7} parent=1 // loop_exit
      _
    %845 = vsyncpa [#allocation5], 1
    %s846 = scalar_lea.sflag [#allocation5], 1
    %847 = vsyncpa %s846, 1

</llo_original>
